<compile_context>
chip_gen: v7x
topology: tpu7x:2x2x1
jax: 0.10.0
libtpu: 0.0.40
codegen_flags: <defaults>
</compile_context>

<pallas_src>
import functools

import jax
import jax.numpy as jnp
from jax.experimental import pallas as pl
from jax.experimental.pallas import tpu as pltpu


def _elu(x):
    # ELU(alpha=1): x if x > 0 else exp(x) - 1  (clamp exp arg: both where-branches run)
    return jnp.where(x > 0, x, jnp.exp(jnp.minimum(x, 0.0)) - 1.0)


def _resnet_block_kernel(x_ref, w1_ref, g1_ref, b1_ref, w2_ref, g2_ref, b2_ref,
                         mgc_ref, fg_ref, eunf_ref, o_ref,
                         xpad_ref, h1pad_ref):
    # x_ref    : (1, H, W*Cin)        f32   merged-lane input tile for this sample
    # w1_ref   : (3, W*Cin,  W*Cout)  bf16  banded conv1 weights (one band per dy)
    # w2_ref   : (3, W*Cout, W*Cout)  bf16  banded conv2 weights
    # g*/b*_ref: (1, Cout)            f32   GroupNorm affine params
    # mgc_ref  : (G, Cout)            f32   group -> channel one-hot (broadcast back)
    # fg_ref   : (W*Cout, G)          f32   merged-lane -> group fold (MXU reduction)
    # eunf_ref : (Cout, W*Cout)       f32   channel -> merged-lane unfold (tile across W)
    # o_ref    : (1, H, W*Cout)       f32   merged-lane output tile
    # xpad_ref : (H+2, W*Cin)         bf16  row-padded staging of the input
    # h1pad_ref: (H+2, W*Cout)        bf16  row-padded staging of conv1 activation
    H = o_ref.shape[1]
    WCo = o_ref.shape[2]
    WCi = x_ref.shape[2]
    Cout = g1_ref.shape[1]
    W = WCo // Cout
    G = mgc_ref.shape[0]
    Cg = Cout // G
    eps = 1e-5
    n_per_group = float(H * W * Cg)
    ones_h = jnp.ones((1, H), jnp.float32)

    def banded_conv(pad_ref, w_ref):
        # 'same' 3x3 conv on merged rows: three (H, W*C) x (W*C, W*Cout) bf16 matmuls
        # (dy = 0,1,2), f32 accumulation. dx taps + W-boundary zeroing live in the weights.
        acc = jnp.dot(pad_ref[0:H, :], w_ref[0], preferred_element_type=jnp.float32)
        acc += jnp.dot(pad_ref[1:H + 1, :], w_ref[1], preferred_element_type=jnp.float32)
        acc += jnp.dot(pad_ref[2:H + 2, :], w_ref[2], preferred_element_type=jnp.float32)
        return acc  # (H, W*Cout) f32

    def group_norm(acc, g_ref, b_ref):
        # acc: (H, W*Cout) f32, merged-lane. Reductions on the MXU (large slack there),
        # normalization folded into one lane-dense scale/shift pass.
        cs1 = jnp.dot(ones_h, acc, preferred_element_type=jnp.float32)            # (1, W*Cout)
        cs2 = jnp.dot(ones_h, acc * acc, preferred_element_type=jnp.float32)      # (1, W*Cout)
        gs1 = jnp.dot(cs1, fg_ref[...], preferred_element_type=jnp.float32)       # (1, G)
        gs2 = jnp.dot(cs2, fg_ref[...], preferred_element_type=jnp.float32)       # (1, G)
        mean_g = gs1 / n_per_group
        var_g = jnp.maximum(gs2 / n_per_group - mean_g * mean_g, 0.0)             # clamp >= 0
        inv_g = jax.lax.rsqrt(var_g + eps)
        mean_c = jnp.dot(mean_g, mgc_ref[...], preferred_element_type=jnp.float32)  # (1, Cout)
        inv_c = jnp.dot(inv_g, mgc_ref[...], preferred_element_type=jnp.float32)    # (1, Cout)
        scale_c = inv_c * g_ref[...]                                               # (1, Cout)
        shift_c = b_ref[...] - mean_c * scale_c                                    # (1, Cout)
        scale_m = jnp.dot(scale_c, eunf_ref[...], preferred_element_type=jnp.float32)  # (1, W*Cout)
        shift_m = jnp.dot(shift_c, eunf_ref[...], preferred_element_type=jnp.float32)  # (1, W*Cout)
        return acc * scale_m + shift_m                                             # lane-dense

    # ---- conv1: stage bf16 rows (single cast), zero the 2 halo rows, 3 banded matmuls ----
    zrow1 = jnp.zeros((1, WCi), xpad_ref.dtype)
    xpad_ref[0:1, :] = zrow1
    xpad_ref[H + 1:H + 2, :] = zrow1
    xpad_ref[1:H + 1, :] = x_ref[0].astype(xpad_ref.dtype)
    acc1 = banded_conv(xpad_ref, w1_ref)                        # (H, W*Cout) f32

    # ---- GroupNorm1 + ELU (f32); h1 is the residual and stays f32 ----
    h1 = _elu(group_norm(acc1, g1_ref, b1_ref))

    # ---- conv2: stage bf16 h1 rows, zero halo rows, 3 banded matmuls ----
    zrow2 = jnp.zeros((1, WCo), h1pad_ref.dtype)
    h1pad_ref[0:1, :] = zrow2
    h1pad_ref[H + 1:H + 2, :] = zrow2
    h1pad_ref[1:H + 1, :] = h1.astype(h1pad_ref.dtype)
    acc2 = banded_conv(h1pad_ref, w2_ref)                       # (H, W*Cout) f32

    # ---- GroupNorm2, residual add (f32), final ELU, lane-dense store ----
    out = _elu(group_norm(acc2, g2_ref, b2_ref) + h1)
    o_ref[...] = out.reshape(1, H, WCo).astype(o_ref.dtype)


def _band_weights(w_oihw, W):
    """(Cout, Cin, 3, 3) conv weights -> (3, W*Cin, W*Cout) banded matrices.

    B[dy, xi*Cin + ci, xo*Cout + co] = w[co, ci, dy, xi - xo + 1] when |xi - xo| <= 1,
    else 0 — i.e. the dx taps plus the 'same' W-boundary zero padding folded into the
    right-hand matmul operand (merged-row conv formulation).
    """
    Cout, Cin = w_oihw.shape[0], w_oihw.shape[1]
    w_t = jnp.transpose(w_oihw, (2, 3, 1, 0)).astype(jnp.float32)     # (dy, dx, ci, co)
    xi = jnp.arange(W)[:, None]
    xo = jnp.arange(W)[None, :]
    d = xi - xo + 1                                                    # (W, W)
    mask = (d >= 0) & (d <= 2)
    dcl = jnp.clip(d, 0, 2)
    band = w_t[:, dcl]                                                 # (3, W, W, Cin, Cout)
    band = band * mask[None, :, :, None, None].astype(jnp.float32)
    band = jnp.transpose(band, (0, 1, 3, 2, 4))                        # (3, W, Cin, W, Cout)
    return band.reshape(3, W * Cin, W * Cout)


def _vmem_limit_bytes():
    # ~80% of physical per-core VMEM (v5e/v6e: 128 MiB -> 100 MiB cap; v7x: 64 MiB -> ~51 MiB),
    # falling back to the previously validated 64 MiB if the query is unavailable.
    try:
        cap = int(pltpu.get_tpu_info().vmem_capacity_bytes)
        return min(int(cap * 0.8), 100 * 1024 * 1024)
    except Exception:
        return 64 * 1024 * 1024


@functools.partial(jax.jit, static_argnames=("num_groups",))
def resnet_block(x_nchw, params, *, num_groups=8):
    """Pallas ResNetBlock forward. x_nchw: (B, Cin, H, W) float32 -> (B, Cout, H, W)."""
    B, Cin, H, W = x_nchw.shape
    Cout = params["w1"].shape[0]
    # pytorch-3dunet rule: if out_channels < num_groups -> num_groups = 1
    G = num_groups if Cout >= num_groups else 1
    assert Cout % G == 0
    Cg = Cout // G

    # --- glue: merged-lane layout (free reshapes) + banded bf16 weights + fold matrices ---
    x_m = jnp.transpose(x_nchw, (0, 2, 3, 1)).reshape(B, H, W * Cin).astype(jnp.float32)
    w1b = _band_weights(params["w1"], W).astype(jnp.bfloat16)          # (3, W*Cin,  W*Cout)
    w2b = _band_weights(params["w2"], W).astype(jnp.bfloat16)          # (3, W*Cout, W*Cout)
    g1 = params["g1"].reshape(1, Cout).astype(jnp.float32)
    b1 = params["b1"].reshape(1, Cout).astype(jnp.float32)
    g2 = params["g2"].reshape(1, Cout).astype(jnp.float32)
    b2 = params["b2"].reshape(1, Cout).astype(jnp.float32)
    mgc = (jnp.arange(G)[:, None] == (jnp.arange(Cout)[None, :] // Cg)).astype(jnp.float32)  # (G, Cout)
    ch_of_lane = jnp.tile(jnp.arange(Cout), W)                                                # (W*Cout,)
    fg = ((ch_of_lane[:, None] // Cg) == jnp.arange(G)[None, :]).astype(jnp.float32)          # (W*Cout, G)
    eunf = jnp.tile(jnp.eye(Cout, dtype=jnp.float32), (1, W))                                 # (Cout, W*Cout)

    out_m = pl.pallas_call(
        _resnet_block_kernel,
        out_shape=jax.ShapeDtypeStruct((B, H, W * Cout), jnp.float32),
        grid_spec=pltpu.PrefetchScalarGridSpec(
            num_scalar_prefetch=0,
            grid=(B,),
            in_specs=[
                pl.BlockSpec((1, H, W * Cin), lambda b: (b, 0, 0)),
                pl.BlockSpec((3, W * Cin, W * Cout), lambda b: (0, 0, 0)),
                pl.BlockSpec((1, Cout), lambda b: (0, 0)),
                pl.BlockSpec((1, Cout), lambda b: (0, 0)),
                pl.BlockSpec((3, W * Cout, W * Cout), lambda b: (0, 0, 0)),
                pl.BlockSpec((1, Cout), lambda b: (0, 0)),
                pl.BlockSpec((1, Cout), lambda b: (0, 0)),
                pl.BlockSpec((G, Cout), lambda b: (0, 0)),
                pl.BlockSpec((W * Cout, G), lambda b: (0, 0)),
                pl.BlockSpec((Cout, W * Cout), lambda b: (0, 0)),
            ],
            out_specs=pl.BlockSpec((1, H, W * Cout), lambda b: (b, 0, 0)),
            scratch_shapes=[
                pltpu.VMEM((H + 2, W * Cin), jnp.bfloat16),    # row-padded input staging
                pltpu.VMEM((H + 2, W * Cout), jnp.bfloat16),   # row-padded conv1-act staging
            ],
        ),
        compiler_params=pltpu.CompilerParams(
            dimension_semantics=("parallel",),
            vmem_limit_bytes=_vmem_limit_bytes(),
        ),
    )(x_m, w1b, g1, b1, w2b, g2, b2, mgc, fg, eunf)

    out_nhwc = out_m.reshape(B, H, W, Cout)
    return jnp.transpose(out_nhwc, (0, 3, 1, 2))


def reference_resnet_block(x, params, num_groups=8, conv_dtype=jnp.float32):
    """Pure-JAX reference matching the PyTorch module (order='cge').

    conv_dtype=bfloat16 mirrors the kernel's bf16 MXU operands (f32 accumulation);
    conv_dtype=float32 is the exact spec.
    """
    Cout = params["w1"].shape[0]
    G = num_groups if Cout >= num_groups else 1

    def conv(x, w):  # NCHW, OIHW, no bias, 'same' padding
        return jax.lax.conv_general_dilated(
            x.astype(conv_dtype), w.astype(conv_dtype), (1, 1), "SAME",
            dimension_numbers=("NCHW", "OIHW", "NCHW"),
            preferred_element_type=jnp.float32)

    def gn(x, gamma, beta, eps=1e-5):
        N, C, H, W = x.shape
        xg = x.reshape(N, G, -1)
        m = xg.mean(-1, keepdims=True)
        v = xg.var(-1, keepdims=True)
        xg = (xg - m) * jax.lax.rsqrt(v + eps)
        x = xg.reshape(N, C, H, W)
        return x * gamma.reshape(1, C, 1, 1) + beta.reshape(1, C, 1, 1)

    h1 = jax.nn.elu(gn(conv(x, params["w1"]), params["g1"], params["b1"]))   # conv1: c-g-e
    h2 = gn(conv(h1, params["w2"]), params["g2"], params["b2"])              # conv2: c-g
    return jax.nn.elu(h2 + h1)                                               # residual + ELU


if __name__ == "__main__":
    B, Cin, Cout, H, W, G = 2, 4, 16, 16, 16, 8
    key = jax.random.PRNGKey(0)
    kx, k1, k2, k3, k4, k5, k6 = jax.random.split(key, 7)

    # Deterministic synthetic parameters (shapes follow the module's __init__;
    # conv layers have no bias because 'g' is in the order string).
    params = {
        "w1": 0.1 * jax.random.normal(k1, (Cout, Cin, 3, 3), jnp.float32),
        "g1": 1.0 + 0.1 * jax.random.normal(k2, (Cout,), jnp.float32),
        "b1": 0.1 * jax.random.normal(k3, (Cout,), jnp.float32),
        "w2": 0.1 * jax.random.normal(k4, (Cout, Cout, 3, 3), jnp.float32),
        "g2": 1.0 + 0.1 * jax.random.normal(k5, (Cout,), jnp.float32),
        "b2": 0.1 * jax.random.normal(k6, (Cout,), jnp.float32),
    }
    x = jax.random.normal(kx, (B, Cin, H, W), jnp.float32)

    out = resnet_block(x, params, num_groups=G)
    out = jax.block_until_ready(out)
    assert out.shape == (B, Cout, H, W)

    # Tight check vs. a reference whose conv operands are bf16-rounded like the kernel's
    # MXU operands (f32 accumulation everywhere else).
    ref_bf16 = reference_resnet_block(x, params, num_groups=G, conv_dtype=jnp.bfloat16)
    assert jnp.allclose(out, ref_bf16, rtol=3e-3, atol=3e-3), \
        float(jnp.max(jnp.abs(out - ref_bf16)))

    # Sanity check vs. the exact f32 reference (difference reflects only bf16 operand
    # rounding in the two convolutions).
    ref_f32 = reference_resnet_block(x, params, num_groups=G, conv_dtype=jnp.float32)
    assert jnp.allclose(out, ref_f32, rtol=1e-1, atol=1e-1), \
        float(jnp.max(jnp.abs(out - ref_f32)))

    print("KERNEL_OK")
</pallas_src>

<mosaic_0001>
module attributes {stable_mosaic.version = 11 : i64} {
  func.func @_resnet_block_kernel(%arg0: i32, %arg1: memref<1x16x64xf32, #tpu.memory_space<vmem>>, %arg2: memref<3x64x256xbf16, #tpu.memory_space<vmem>>, %arg3: memref<1x16xf32, #tpu.memory_space<vmem>>, %arg4: memref<1x16xf32, #tpu.memory_space<vmem>>, %arg5: memref<3x256x256xbf16, #tpu.memory_space<vmem>>, %arg6: memref<1x16xf32, #tpu.memory_space<vmem>>, %arg7: memref<1x16xf32, #tpu.memory_space<vmem>>, %arg8: memref<8x16xf32, #tpu.memory_space<vmem>>, %arg9: memref<256x8xf32, #tpu.memory_space<vmem>>, %arg10: memref<16x256xf32, #tpu.memory_space<vmem>>, %arg11: memref<1x16x256xf32, #tpu.memory_space<vmem>>, %arg12: memref<18x64xbf16, #tpu.memory_space<vmem>>, %arg13: memref<18x256xbf16, #tpu.memory_space<vmem>>) attributes {dimension_semantics = [#tpu.dimension_semantics<parallel>], iteration_bounds = array<i64: 2>, scalar_prefetch = 0 : i64, scratch_operands = 2 : i64, tpu.core_type = #tpu.core_type<tc>, window_params = [{transform_indices = @transform_0, window_bounds = array<i64: 1, 16, 64>}, {pipeline_mode = #tpu.pipeline_mode<synchronous>, transform_indices = @transform_1, window_bounds = array<i64: 3, 64, 256>}, {pipeline_mode = #tpu.pipeline_mode<synchronous>, transform_indices = @transform_2, window_bounds = array<i64: 1, 16>}, {pipeline_mode = #tpu.pipeline_mode<synchronous>, transform_indices = @transform_3, window_bounds = array<i64: 1, 16>}, {pipeline_mode = #tpu.pipeline_mode<synchronous>, transform_indices = @transform_4, window_bounds = array<i64: 3, 256, 256>}, {pipeline_mode = #tpu.pipeline_mode<synchronous>, transform_indices = @transform_5, window_bounds = array<i64: 1, 16>}, {pipeline_mode = #tpu.pipeline_mode<synchronous>, transform_indices = @transform_6, window_bounds = array<i64: 1, 16>}, {pipeline_mode = #tpu.pipeline_mode<synchronous>, transform_indices = @transform_7, window_bounds = array<i64: 8, 16>}, {pipeline_mode = #tpu.pipeline_mode<synchronous>, transform_indices = @transform_8, window_bounds = array<i64: 256, 8>}, {pipeline_mode = #tpu.pipeline_mode<synchronous>, transform_indices = @transform_9, window_bounds = array<i64: 16, 256>}, {transform_indices = @transform_10, window_bounds = array<i64: 1, 16, 256>}]} {
    %cst = arith.constant 1.000000e+00 : f32
    %0 = vector.broadcast %cst : f32 to vector<1x16xf32>
    %cst_0 = arith.constant 0.000000e+00 : bf16
    %1 = vector.broadcast %cst_0 : bf16 to vector<1x64xbf16>
    %c0 = arith.constant 0 : index
    %c0_1 = arith.constant 0 : index
    %2 = vector.load %arg12[%c0, %c0_1] : memref<18x64xbf16, #tpu.memory_space<vmem>>, vector<1x64xbf16>
    tpu.vector_store %arg12[%c0, %c0_1], %1 {strides = array<i32>} : memref<18x64xbf16, #tpu.memory_space<vmem>>, vector<1x64xbf16>,
    %c17 = arith.constant 17 : index
    %c0_2 = arith.constant 0 : index
    %3 = vector.load %arg12[%c17, %c0_2] : memref<18x64xbf16, #tpu.memory_space<vmem>>, vector<1x64xbf16>
    tpu.vector_store %arg12[%c17, %c0_2], %1 {strides = array<i32>} : memref<18x64xbf16, #tpu.memory_space<vmem>>, vector<1x64xbf16>,
    %c0_3 = arith.constant 0 : index
    %c0_4 = arith.constant 0 : index
    %c0_5 = arith.constant 0 : index
    %4 = vector.load %arg1[%c0_3, %c0_4, %c0_5] : memref<1x16x64xf32, #tpu.memory_space<vmem>>, vector<1x16x64xf32>
    %5 = vector.shape_cast %4 : vector<1x16x64xf32> to vector<16x64xf32>
    %6 = arith.truncf %5 : vector<16x64xf32> to vector<16x64xbf16>
    %c1 = arith.constant 1 : index
    %c0_6 = arith.constant 0 : index
    %7 = vector.load %arg12[%c1, %c0_6] : memref<18x64xbf16, #tpu.memory_space<vmem>>, vector<16x64xbf16>
    tpu.vector_store %arg12[%c1, %c0_6], %6 {strides = array<i32>} : memref<18x64xbf16, #tpu.memory_space<vmem>>, vector<16x64xbf16>,
    %c0_7 = arith.constant 0 : index
    %c0_8 = arith.constant 0 : index
    %8 = vector.load %arg12[%c0_7, %c0_8] : memref<18x64xbf16, #tpu.memory_space<vmem>>, vector<16x64xbf16>
    %c0_9 = arith.constant 0 : index
    %c0_10 = arith.constant 0 : index
    %c0_11 = arith.constant 0 : index
    %9 = vector.load %arg2[%c0_9, %c0_10, %c0_11] : memref<3x64x256xbf16, #tpu.memory_space<vmem>>, vector<1x64x256xbf16>
    %10 = vector.shape_cast %9 : vector<1x64x256xbf16> to vector<64x256xbf16>
    %cst_12 = arith.constant dense<0.000000e+00> : vector<16x256xf32>
    %11 = tpu.matmul %8, %10, %cst_12 {dimension_numbers = #tpu.dot_dimension_numbers<[1], [0], [0], [1], [0, 0, 1, 1], [], []>} : vector<16x64xbf16>, vector<64x256xbf16>, vector<16x256xf32> -> vector<16x256xf32>
    %c1_13 = arith.constant 1 : index
    %c0_14 = arith.constant 0 : index
    %12 = vector.load %arg12[%c1_13, %c0_14] : memref<18x64xbf16, #tpu.memory_space<vmem>>, vector<16x64xbf16>
    %c1_15 = arith.constant 1 : index
    %c0_16 = arith.constant 0 : index
    %c0_17 = arith.constant 0 : index
    %13 = vector.load %arg2[%c1_15, %c0_16, %c0_17] : memref<3x64x256xbf16, #tpu.memory_space<vmem>>, vector<1x64x256xbf16>
    %14 = vector.shape_cast %13 : vector<1x64x256xbf16> to vector<64x256xbf16>
    %cst_18 = arith.constant dense<0.000000e+00> : vector<16x256xf32>
    %15 = tpu.matmul %12, %14, %cst_18 {dimension_numbers = #tpu.dot_dimension_numbers<[1], [0], [0], [1], [0, 0, 1, 1], [], []>} : vector<16x64xbf16>, vector<64x256xbf16>, vector<16x256xf32> -> vector<16x256xf32>
    %16 = arith.addf %11, %15 : vector<16x256xf32>
    %c2 = arith.constant 2 : index
    %c0_19 = arith.constant 0 : index
    %17 = vector.load %arg12[%c2, %c0_19] : memref<18x64xbf16, #tpu.memory_space<vmem>>, vector<16x64xbf16>
    %c2_20 = arith.constant 2 : index
    %c0_21 = arith.constant 0 : index
    %c0_22 = arith.constant 0 : index
    %18 = vector.load %arg2[%c2_20, %c0_21, %c0_22] : memref<3x64x256xbf16, #tpu.memory_space<vmem>>, vector<1x64x256xbf16>
    %19 = vector.shape_cast %18 : vector<1x64x256xbf16> to vector<64x256xbf16>
    %cst_23 = arith.constant dense<0.000000e+00> : vector<16x256xf32>
    %20 = tpu.matmul %17, %19, %cst_23 {dimension_numbers = #tpu.dot_dimension_numbers<[1], [0], [0], [1], [0, 0, 1, 1], [], []>} : vector<16x64xbf16>, vector<64x256xbf16>, vector<16x256xf32> -> vector<16x256xf32>
    %21 = arith.addf %16, %20 : vector<16x256xf32>
    %cst_24 = arith.constant dense<0.000000e+00> : vector<1x256xf32>
    %22 = tpu.matmul %0, %21, %cst_24 {dimension_numbers = #tpu.dot_dimension_numbers<[1], [0], [0], [1], [0, 0, 1, 1], [], []>} : vector<1x16xf32>, vector<16x256xf32>, vector<1x256xf32> -> vector<1x256xf32>
    %23 = arith.mulf %21, %21 : vector<16x256xf32>
    %cst_25 = arith.constant dense<0.000000e+00> : vector<1x256xf32>
    %24 = tpu.matmul %0, %23, %cst_25 {dimension_numbers = #tpu.dot_dimension_numbers<[1], [0], [0], [1], [0, 0, 1, 1], [], []>} : vector<1x16xf32>, vector<16x256xf32>, vector<1x256xf32> -> vector<1x256xf32>
    %c0_26 = arith.constant 0 : index
    %c0_27 = arith.constant 0 : index
    %25 = vector.load %arg9[%c0_26, %c0_27] : memref<256x8xf32, #tpu.memory_space<vmem>>, vector<256x8xf32>
    %cst_28 = arith.constant dense<0.000000e+00> : vector<1x8xf32>
    %26 = tpu.matmul %22, %25, %cst_28 {dimension_numbers = #tpu.dot_dimension_numbers<[1], [0], [0], [1], [0, 0, 1, 1], [], []>} : vector<1x256xf32>, vector<256x8xf32>, vector<1x8xf32> -> vector<1x8xf32>
    %c0_29 = arith.constant 0 : index
    %c0_30 = arith.constant 0 : index
    %27 = vector.load %arg9[%c0_29, %c0_30] : memref<256x8xf32, #tpu.memory_space<vmem>>, vector<256x8xf32>
    %cst_31 = arith.constant dense<0.000000e+00> : vector<1x8xf32>
    %28 = tpu.matmul %24, %27, %cst_31 {dimension_numbers = #tpu.dot_dimension_numbers<[1], [0], [0], [1], [0, 0, 1, 1], [], []>} : vector<1x256xf32>, vector<256x8xf32>, vector<1x8xf32> -> vector<1x8xf32>
    %cst_32 = arith.constant 5.120000e+02 : f32
    %29 = vector.broadcast %cst_32 : f32 to vector<1x8xf32>
    %30 = arith.divf %26, %29 : vector<1x8xf32>
    %cst_33 = arith.constant 5.120000e+02 : f32
    %31 = vector.broadcast %cst_33 : f32 to vector<1x8xf32>
    %32 = arith.divf %28, %31 : vector<1x8xf32>
    %33 = arith.mulf %30, %30 : vector<1x8xf32>
    %34 = arith.subf %32, %33 : vector<1x8xf32>
    %cst_34 = arith.constant 0.000000e+00 : f32
    %35 = vector.broadcast %cst_34 : f32 to vector<1x8xf32>
    %36 = arith.maximumf %34, %35 : vector<1x8xf32>
    %cst_35 = arith.constant 9.99999974E-6 : f32
    %37 = vector.broadcast %cst_35 : f32 to vector<1x8xf32>
    %38 = arith.addf %36, %37 : vector<1x8xf32>
    %39 = math.rsqrt %38 : vector<1x8xf32>
    %c0_36 = arith.constant 0 : index
    %c0_37 = arith.constant 0 : index
    %40 = vector.load %arg8[%c0_36, %c0_37] : memref<8x16xf32, #tpu.memory_space<vmem>>, vector<8x16xf32>
    %cst_38 = arith.constant dense<0.000000e+00> : vector<1x16xf32>
    %41 = tpu.matmul %30, %40, %cst_38 {dimension_numbers = #tpu.dot_dimension_numbers<[1], [0], [0], [1], [0, 0, 1, 1], [], []>} : vector<1x8xf32>, vector<8x16xf32>, vector<1x16xf32> -> vector<1x16xf32>
    %c0_39 = arith.constant 0 : index
    %c0_40 = arith.constant 0 : index
    %42 = vector.load %arg8[%c0_39, %c0_40] : memref<8x16xf32, #tpu.memory_space<vmem>>, vector<8x16xf32>
    %cst_41 = arith.constant dense<0.000000e+00> : vector<1x16xf32>
    %43 = tpu.matmul %39, %42, %cst_41 {dimension_numbers = #tpu.dot_dimension_numbers<[1], [0], [0], [1], [0, 0, 1, 1], [], []>} : vector<1x8xf32>, vector<8x16xf32>, vector<1x16xf32> -> vector<1x16xf32>
    %c0_42 = arith.constant 0 : index
    %c0_43 = arith.constant 0 : index
    %44 = vector.load %arg3[%c0_42, %c0_43] : memref<1x16xf32, #tpu.memory_space<vmem>>, vector<1x16xf32>
    %45 = arith.mulf %43, %44 : vector<1x16xf32>
    %c0_44 = arith.constant 0 : index
    %c0_45 = arith.constant 0 : index
    %46 = vector.load %arg4[%c0_44, %c0_45] : memref<1x16xf32, #tpu.memory_space<vmem>>, vector<1x16xf32>
    %47 = arith.mulf %41, %45 : vector<1x16xf32>
    %48 = arith.subf %46, %47 : vector<1x16xf32>
    %c0_46 = arith.constant 0 : index
    %c0_47 = arith.constant 0 : index
    %49 = vector.load %arg10[%c0_46, %c0_47] : memref<16x256xf32, #tpu.memory_space<vmem>>, vector<16x256xf32>
    %cst_48 = arith.constant dense<0.000000e+00> : vector<1x256xf32>
    %50 = tpu.matmul %45, %49, %cst_48 {dimension_numbers = #tpu.dot_dimension_numbers<[1], [0], [0], [1], [0, 0, 1, 1], [], []>} : vector<1x16xf32>, vector<16x256xf32>, vector<1x256xf32> -> vector<1x256xf32>
    %c0_49 = arith.constant 0 : index
    %c0_50 = arith.constant 0 : index
    %51 = vector.load %arg10[%c0_49, %c0_50] : memref<16x256xf32, #tpu.memory_space<vmem>>, vector<16x256xf32>
    %cst_51 = arith.constant dense<0.000000e+00> : vector<1x256xf32>
    %52 = tpu.matmul %48, %51, %cst_51 {dimension_numbers = #tpu.dot_dimension_numbers<[1], [0], [0], [1], [0, 0, 1, 1], [], []>} : vector<1x16xf32>, vector<16x256xf32>, vector<1x256xf32> -> vector<1x256xf32>
    %53 = vector.broadcast %50 : vector<1x256xf32> to vector<16x256xf32>
    %54 = arith.mulf %21, %53 : vector<16x256xf32>
    %55 = vector.broadcast %52 : vector<1x256xf32> to vector<16x256xf32>
    %56 = arith.addf %54, %55 : vector<16x256xf32>
    %cst_52 = arith.constant 0.000000e+00 : f32
    %57 = vector.broadcast %cst_52 : f32 to vector<16x256xf32>
    %58 = arith.cmpf ogt, %56, %57 : vector<16x256xf32>
    %cst_53 = arith.constant 0.000000e+00 : f32
    %59 = vector.broadcast %cst_53 : f32 to vector<16x256xf32>
    %60 = arith.minimumf %56, %59 : vector<16x256xf32>
    %61 = math.exp %60 : vector<16x256xf32>
    %cst_54 = arith.constant 1.000000e+00 : f32
    %62 = vector.broadcast %cst_54 : f32 to vector<16x256xf32>
    %63 = arith.subf %61, %62 : vector<16x256xf32>
    %64 = arith.select %58, %56, %63 : vector<16x256xi1>, vector<16x256xf32>
    %cst_55 = arith.constant 0.000000e+00 : bf16
    %65 = vector.broadcast %cst_55 : bf16 to vector<1x256xbf16>
    %c0_56 = arith.constant 0 : index
    %c0_57 = arith.constant 0 : index
    %66 = vector.load %arg13[%c0_56, %c0_57] : memref<18x256xbf16, #tpu.memory_space<vmem>>, vector<1x256xbf16>
    tpu.vector_store %arg13[%c0_56, %c0_57], %65 {strides = array<i32>} : memref<18x256xbf16, #tpu.memory_space<vmem>>, vector<1x256xbf16>,
    %c17_58 = arith.constant 17 : index
    %c0_59 = arith.constant 0 : index
    %67 = vector.load %arg13[%c17_58, %c0_59] : memref<18x256xbf16, #tpu.memory_space<vmem>>, vector<1x256xbf16>
    tpu.vector_store %arg13[%c17_58, %c0_59], %65 {strides = array<i32>} : memref<18x256xbf16, #tpu.memory_space<vmem>>, vector<1x256xbf16>,
    %68 = arith.truncf %64 : vector<16x256xf32> to vector<16x256xbf16>
    %c1_60 = arith.constant 1 : index
    %c0_61 = arith.constant 0 : index
    %69 = vector.load %arg13[%c1_60, %c0_61] : memref<18x256xbf16, #tpu.memory_space<vmem>>, vector<16x256xbf16>
    tpu.vector_store %arg13[%c1_60, %c0_61], %68 {strides = array<i32>} : memref<18x256xbf16, #tpu.memory_space<vmem>>, vector<16x256xbf16>,
    %c0_62 = arith.constant 0 : index
    %c0_63 = arith.constant 0 : index
    %70 = vector.load %arg13[%c0_62, %c0_63] : memref<18x256xbf16, #tpu.memory_space<vmem>>, vector<16x256xbf16>
    %c0_64 = arith.constant 0 : index
    %c0_65 = arith.constant 0 : index
    %c0_66 = arith.constant 0 : index
    %71 = vector.load %arg5[%c0_64, %c0_65, %c0_66] : memref<3x256x256xbf16, #tpu.memory_space<vmem>>, vector<1x256x256xbf16>
    %72 = vector.shape_cast %71 : vector<1x256x256xbf16> to vector<256x256xbf16>
    %cst_67 = arith.constant dense<0.000000e+00> : vector<16x256xf32>
    %73 = tpu.matmul %70, %72, %cst_67 {dimension_numbers = #tpu.dot_dimension_numbers<[1], [0], [0], [1], [0, 0, 1, 1], [], []>} : vector<16x256xbf16>, vector<256x256xbf16>, vector<16x256xf32> -> vector<16x256xf32>
    %c1_68 = arith.constant 1 : index
    %c0_69 = arith.constant 0 : index
    %74 = vector.load %arg13[%c1_68, %c0_69] : memref<18x256xbf16, #tpu.memory_space<vmem>>, vector<16x256xbf16>
    %c1_70 = arith.constant 1 : index
    %c0_71 = arith.constant 0 : index
    %c0_72 = arith.constant 0 : index
    %75 = vector.load %arg5[%c1_70, %c0_71, %c0_72] : memref<3x256x256xbf16, #tpu.memory_space<vmem>>, vector<1x256x256xbf16>
    %76 = vector.shape_cast %75 : vector<1x256x256xbf16> to vector<256x256xbf16>
    %cst_73 = arith.constant dense<0.000000e+00> : vector<16x256xf32>
    %77 = tpu.matmul %74, %76, %cst_73 {dimension_numbers = #tpu.dot_dimension_numbers<[1], [0], [0], [1], [0, 0, 1, 1], [], []>} : vector<16x256xbf16>, vector<256x256xbf16>, vector<16x256xf32> -> vector<16x256xf32>
    %78 = arith.addf %73, %77 : vector<16x256xf32>
    %c2_74 = arith.constant 2 : index
    %c0_75 = arith.constant 0 : index
    %79 = vector.load %arg13[%c2_74, %c0_75] : memref<18x256xbf16, #tpu.memory_space<vmem>>, vector<16x256xbf16>
    %c2_76 = arith.constant 2 : index
    %c0_77 = arith.constant 0 : index
    %c0_78 = arith.constant 0 : index
    %80 = vector.load %arg5[%c2_76, %c0_77, %c0_78] : memref<3x256x256xbf16, #tpu.memory_space<vmem>>, vector<1x256x256xbf16>
    %81 = vector.shape_cast %80 : vector<1x256x256xbf16> to vector<256x256xbf16>
    %cst_79 = arith.constant dense<0.000000e+00> : vector<16x256xf32>
    %82 = tpu.matmul %79, %81, %cst_79 {dimension_numbers = #tpu.dot_dimension_numbers<[1], [0], [0], [1], [0, 0, 1, 1], [], []>} : vector<16x256xbf16>, vector<256x256xbf16>, vector<16x256xf32> -> vector<16x256xf32>
    %83 = arith.addf %78, %82 : vector<16x256xf32>
    %cst_80 = arith.constant dense<0.000000e+00> : vector<1x256xf32>
    %84 = tpu.matmul %0, %83, %cst_80 {dimension_numbers = #tpu.dot_dimension_numbers<[1], [0], [0], [1], [0, 0, 1, 1], [], []>} : vector<1x16xf32>, vector<16x256xf32>, vector<1x256xf32> -> vector<1x256xf32>
    %85 = arith.mulf %83, %83 : vector<16x256xf32>
    %cst_81 = arith.constant dense<0.000000e+00> : vector<1x256xf32>
    %86 = tpu.matmul %0, %85, %cst_81 {dimension_numbers = #tpu.dot_dimension_numbers<[1], [0], [0], [1], [0, 0, 1, 1], [], []>} : vector<1x16xf32>, vector<16x256xf32>, vector<1x256xf32> -> vector<1x256xf32>
    %c0_82 = arith.constant 0 : index
    %c0_83 = arith.constant 0 : index
    %87 = vector.load %arg9[%c0_82, %c0_83] : memref<256x8xf32, #tpu.memory_space<vmem>>, vector<256x8xf32>
    %cst_84 = arith.constant dense<0.000000e+00> : vector<1x8xf32>
    %88 = tpu.matmul %84, %87, %cst_84 {dimension_numbers = #tpu.dot_dimension_numbers<[1], [0], [0], [1], [0, 0, 1, 1], [], []>} : vector<1x256xf32>, vector<256x8xf32>, vector<1x8xf32> -> vector<1x8xf32>
    %c0_85 = arith.constant 0 : index
    %c0_86 = arith.constant 0 : index
    %89 = vector.load %arg9[%c0_85, %c0_86] : memref<256x8xf32, #tpu.memory_space<vmem>>, vector<256x8xf32>
    %cst_87 = arith.constant dense<0.000000e+00> : vector<1x8xf32>
    %90 = tpu.matmul %86, %89, %cst_87 {dimension_numbers = #tpu.dot_dimension_numbers<[1], [0], [0], [1], [0, 0, 1, 1], [], []>} : vector<1x256xf32>, vector<256x8xf32>, vector<1x8xf32> -> vector<1x8xf32>
    %cst_88 = arith.constant 5.120000e+02 : f32
    %91 = vector.broadcast %cst_88 : f32 to vector<1x8xf32>
    %92 = arith.divf %88, %91 : vector<1x8xf32>
    %cst_89 = arith.constant 5.120000e+02 : f32
    %93 = vector.broadcast %cst_89 : f32 to vector<1x8xf32>
    %94 = arith.divf %90, %93 : vector<1x8xf32>
    %95 = arith.mulf %92, %92 : vector<1x8xf32>
    %96 = arith.subf %94, %95 : vector<1x8xf32>
    %cst_90 = arith.constant 0.000000e+00 : f32
    %97 = vector.broadcast %cst_90 : f32 to vector<1x8xf32>
    %98 = arith.maximumf %96, %97 : vector<1x8xf32>
    %cst_91 = arith.constant 9.99999974E-6 : f32
    %99 = vector.broadcast %cst_91 : f32 to vector<1x8xf32>
    %100 = arith.addf %98, %99 : vector<1x8xf32>
    %101 = math.rsqrt %100 : vector<1x8xf32>
    %c0_92 = arith.constant 0 : index
    %c0_93 = arith.constant 0 : index
    %102 = vector.load %arg8[%c0_92, %c0_93] : memref<8x16xf32, #tpu.memory_space<vmem>>, vector<8x16xf32>
    %cst_94 = arith.constant dense<0.000000e+00> : vector<1x16xf32>
    %103 = tpu.matmul %92, %102, %cst_94 {dimension_numbers = #tpu.dot_dimension_numbers<[1], [0], [0], [1], [0, 0, 1, 1], [], []>} : vector<1x8xf32>, vector<8x16xf32>, vector<1x16xf32> -> vector<1x16xf32>
    %c0_95 = arith.constant 0 : index
    %c0_96 = arith.constant 0 : index
    %104 = vector.load %arg8[%c0_95, %c0_96] : memref<8x16xf32, #tpu.memory_space<vmem>>, vector<8x16xf32>
    %cst_97 = arith.constant dense<0.000000e+00> : vector<1x16xf32>
    %105 = tpu.matmul %101, %104, %cst_97 {dimension_numbers = #tpu.dot_dimension_numbers<[1], [0], [0], [1], [0, 0, 1, 1], [], []>} : vector<1x8xf32>, vector<8x16xf32>, vector<1x16xf32> -> vector<1x16xf32>
    %c0_98 = arith.constant 0 : index
    %c0_99 = arith.constant 0 : index
    %106 = vector.load %arg6[%c0_98, %c0_99] : memref<1x16xf32, #tpu.memory_space<vmem>>, vector<1x16xf32>
    %107 = arith.mulf %105, %106 : vector<1x16xf32>
    %c0_100 = arith.constant 0 : index
    %c0_101 = arith.constant 0 : index
    %108 = vector.load %arg7[%c0_100, %c0_101] : memref<1x16xf32, #tpu.memory_space<vmem>>, vector<1x16xf32>
    %109 = arith.mulf %103, %107 : vector<1x16xf32>
    %110 = arith.subf %108, %109 : vector<1x16xf32>
    %c0_102 = arith.constant 0 : index
    %c0_103 = arith.constant 0 : index
    %111 = vector.load %arg10[%c0_102, %c0_103] : memref<16x256xf32, #tpu.memory_space<vmem>>, vector<16x256xf32>
    %cst_104 = arith.constant dense<0.000000e+00> : vector<1x256xf32>
    %112 = tpu.matmul %107, %111, %cst_104 {dimension_numbers = #tpu.dot_dimension_numbers<[1], [0], [0], [1], [0, 0, 1, 1], [], []>} : vector<1x16xf32>, vector<16x256xf32>, vector<1x256xf32> -> vector<1x256xf32>
    %c0_105 = arith.constant 0 : index
    %c0_106 = arith.constant 0 : index
    %113 = vector.load %arg10[%c0_105, %c0_106] : memref<16x256xf32, #tpu.memory_space<vmem>>, vector<16x256xf32>
    %cst_107 = arith.constant dense<0.000000e+00> : vector<1x256xf32>
    %114 = tpu.matmul %110, %113, %cst_107 {dimension_numbers = #tpu.dot_dimension_numbers<[1], [0], [0], [1], [0, 0, 1, 1], [], []>} : vector<1x16xf32>, vector<16x256xf32>, vector<1x256xf32> -> vector<1x256xf32>
    %115 = vector.broadcast %112 : vector<1x256xf32> to vector<16x256xf32>
    %116 = arith.mulf %83, %115 : vector<16x256xf32>
    %117 = vector.broadcast %114 : vector<1x256xf32> to vector<16x256xf32>
    %118 = arith.addf %116, %117 : vector<16x256xf32>
    %119 = arith.addf %118, %64 : vector<16x256xf32>
    %cst_108 = arith.constant 0.000000e+00 : f32
    %120 = vector.broadcast %cst_108 : f32 to vector<16x256xf32>
    %121 = arith.cmpf ogt, %119, %120 : vector<16x256xf32>
    %cst_109 = arith.constant 0.000000e+00 : f32
    %122 = vector.broadcast %cst_109 : f32 to vector<16x256xf32>
    %123 = arith.minimumf %119, %122 : vector<16x256xf32>
    %124 = math.exp %123 : vector<16x256xf32>
    %cst_110 = arith.constant 1.000000e+00 : f32
    %125 = vector.broadcast %cst_110 : f32 to vector<16x256xf32>
    %126 = arith.subf %124, %125 : vector<16x256xf32>
    %127 = arith.select %121, %119, %126 : vector<16x256xi1>, vector<16x256xf32>
    %128 = vector.shape_cast %127 : vector<16x256xf32> to vector<1x16x256xf32>
    %c0_111 = arith.constant 0 : index
    %c0_112 = arith.constant 0 : index
    %c0_113 = arith.constant 0 : index
    %129 = vector.load %arg11[%c0_111, %c0_112, %c0_113] : memref<1x16x256xf32, #tpu.memory_space<vmem>>, vector<1x16x256xf32>
    tpu.vector_store %arg11[%c0_111, %c0_112, %c0_113], %128 {strides = array<i32>} : memref<1x16x256xf32, #tpu.memory_space<vmem>>, vector<1x16x256xf32>,
    return
  }
  func.func @transform_0(%arg0: i32) -> (i32, i32, i32) {
    %c0_i32 = arith.constant 0 : i32
    %c0_i32_0 = arith.constant 0 : i32
    %c0_i32_1 = arith.constant 0 : i32
    return %arg0, %c0_i32, %c0_i32_0 : i32, i32, i32
  }
  func.func @transform_1(%arg0: i32) -> (i32, i32, i32) {
    %c0_i32 = arith.constant 0 : i32
    %c0_i32_0 = arith.constant 0 : i32
    %c0_i32_1 = arith.constant 0 : i32
    %c0_i32_2 = arith.constant 0 : i32
    return %c0_i32, %c0_i32_0, %c0_i32_1 : i32, i32, i32
  }
  func.func @transform_2(%arg0: i32) -> (i32, i32) {
    %c0_i32 = arith.constant 0 : i32
    %c0_i32_0 = arith.constant 0 : i32
    %c0_i32_1 = arith.constant 0 : i32
    return %c0_i32, %c0_i32_0 : i32, i32
  }
  func.func @transform_3(%arg0: i32) -> (i32, i32) {
    %c0_i32 = arith.constant 0 : i32
    %c0_i32_0 = arith.constant 0 : i32
    %c0_i32_1 = arith.constant 0 : i32
    return %c0_i32, %c0_i32_0 : i32, i32
  }
  func.func @transform_4(%arg0: i32) -> (i32, i32, i32) {
    %c0_i32 = arith.constant 0 : i32
    %c0_i32_0 = arith.constant 0 : i32
    %c0_i32_1 = arith.constant 0 : i32
    %c0_i32_2 = arith.constant 0 : i32
    return %c0_i32, %c0_i32_0, %c0_i32_1 : i32, i32, i32
  }
  func.func @transform_5(%arg0: i32) -> (i32, i32) {
    %c0_i32 = arith.constant 0 : i32
    %c0_i32_0 = arith.constant 0 : i32
    %c0_i32_1 = arith.constant 0 : i32
    return %c0_i32, %c0_i32_0 : i32, i32
  }
  func.func @transform_6(%arg0: i32) -> (i32, i32) {
    %c0_i32 = arith.constant 0 : i32
    %c0_i32_0 = arith.constant 0 : i32
    %c0_i32_1 = arith.constant 0 : i32
    return %c0_i32, %c0_i32_0 : i32, i32
  }
  func.func @transform_7(%arg0: i32) -> (i32, i32) {
    %c0_i32 = arith.constant 0 : i32
    %c0_i32_0 = arith.constant 0 : i32
    %c0_i32_1 = arith.constant 0 : i32
    return %c0_i32, %c0_i32_0 : i32, i32
  }
  func.func @transform_8(%arg0: i32) -> (i32, i32) {
    %c0_i32 = arith.constant 0 : i32
    %c0_i32_0 = arith.constant 0 : i32
    %c0_i32_1 = arith.constant 0 : i32
    return %c0_i32, %c0_i32_0 : i32, i32
  }
  func.func @transform_9(%arg0: i32) -> (i32, i32) {
    %c0_i32 = arith.constant 0 : i32
    %c0_i32_0 = arith.constant 0 : i32
    %c0_i32_1 = arith.constant 0 : i32
    return %c0_i32, %c0_i32_0 : i32, i32
  }
  func.func @transform_10(%arg0: i32) -> (i32, i32, i32) {
    %c0_i32 = arith.constant 0 : i32
    %c0_i32_0 = arith.constant 0 : i32
    %c0_i32_1 = arith.constant 0 : i32
    return %arg0, %c0_i32, %c0_i32_0 : i32, i32, i32
  }
}

</mosaic_0001>

<llo_original>
// kernel: tile.19
$region0: #{tile.19}
  %s0 = inlined_call_operand.vmem [shape: f32[16,16,16], index: 0, kind: input, shape index: {}]
  %s1 = inlined_call_operand.hbm [shape: f32[16,256], index: 1, kind: output, shape index: {}]
  $region1: #{tile.19} parent=0
    #allocation0 [shape = 'u8[16384]{0}', space=vmem, size = 0x4000, scoped, tag = 'operand span for operand 1']
    #allocation1 [shape = 's32[1]{0}', space=sflag, size = 0x4, scoped, tag = 'scoped memory for tile.19']
    %2 = vsyncpa [#allocation1], 0
    %v3 = vld [vmem:[%s0] ss:$8 sm:$0xf]
    %v4 = vld [vmem:[%s0] ss:$8 sm:$0xf0]
    %vm5 = vcmask 1047556
    %v6 = vsel %vm5, %v4, %v3
    %vm7 = vcmask 130048
    %8 = vst.msk [vmem:[#allocation0] ss:$8 sm:$0x3] %vm7, %v6
    %s9 = scalar_lea.vmem [#allocation0], 4294967281
    %10 = vst.msk [vmem:[%s9] ss:$8 sm:$0xc] %vm7, %v6
    %s11 = scalar_lea.vmem [#allocation0], 4294967266
    %12 = vst.msk [vmem:[%s11] ss:$8 sm:$0x30] %vm7, %v6
    %s13 = scalar_lea.vmem [#allocation0], 4294967251
    %14 = vst.msk [vmem:[%s13] ss:$8 sm:$0xc0] %vm7, %v6
    %s15 = scalar_lea.vmem %s0, 64
    %v16 = vld [vmem:[%s15] ss:$8 sm:$0xf]
    %s17 = scalar_lea.vmem %s0, 64
    %v18 = vld [vmem:[%s17] ss:$8 sm:$0xf0]
    %vm19 = vcmask 1047556
    %v20 = vsel %vm19, %v18, %v16
    %vm21 = vcmask 130048
    %s22 = scalar_lea.vmem [#allocation0], 4
    %23 = vst.msk [vmem:[%s22] ss:$8 sm:$0x3] %vm21, %v20
    %s24 = scalar_lea.vmem [#allocation0], 4294967285
    %25 = vst.msk [vmem:[%s24] ss:$8 sm:$0xc] %vm21, %v20
    %s26 = scalar_lea.vmem [#allocation0], 4294967270
    %27 = vst.msk [vmem:[%s26] ss:$8 sm:$0x30] %vm21, %v20
    %s28 = scalar_lea.vmem [#allocation0], 4294967255
    %29 = vst.msk [vmem:[%s28] ss:$8 sm:$0xc0] %vm21, %v20
    %s30 = scalar_lea.vmem %s0, 128
    %v31 = vld [vmem:[%s30] ss:$8 sm:$0xf]
    %s32 = scalar_lea.vmem %s0, 128
    %v33 = vld [vmem:[%s32] ss:$8 sm:$0xf0]
    %vm34 = vcmask 1047556
    %v35 = vsel %vm34, %v33, %v31
    %vm36 = vcmask 130048
    %s37 = scalar_lea.vmem [#allocation0], 16
    %38 = vst.msk [vmem:[%s37] ss:$8 sm:$0x3] %vm36, %v35
    %s39 = scalar_lea.vmem [#allocation0], 1
    %40 = vst.msk [vmem:[%s39] ss:$8 sm:$0xc] %vm36, %v35
    %s41 = scalar_lea.vmem [#allocation0], 4294967282
    %42 = vst.msk [vmem:[%s41] ss:$8 sm:$0x30] %vm36, %v35
    %s43 = scalar_lea.vmem [#allocation0], 4294967267
    %44 = vst.msk [vmem:[%s43] ss:$8 sm:$0xc0] %vm36, %v35
    %s45 = scalar_lea.vmem %s0, 192
    %v46 = vld [vmem:[%s45] ss:$8 sm:$0xf]
    %s47 = scalar_lea.vmem %s0, 192
    %v48 = vld [vmem:[%s47] ss:$8 sm:$0xf0]
    %vm49 = vcmask 1047556
    %v50 = vsel %vm49, %v48, %v46
    %vm51 = vcmask 130048
    %s52 = scalar_lea.vmem [#allocation0], 20
    %53 = vst.msk [vmem:[%s52] ss:$8 sm:$0x3] %vm51, %v50
    %s54 = scalar_lea.vmem [#allocation0], 5
    %55 = vst.msk [vmem:[%s54] ss:$8 sm:$0xc] %vm51, %v50
    %s56 = scalar_lea.vmem [#allocation0], 4294967286
    %57 = vst.msk [vmem:[%s56] ss:$8 sm:$0x30] %vm51, %v50
    %s58 = scalar_lea.vmem [#allocation0], 4294967271
    %59 = vst.msk [vmem:[%s58] ss:$8 sm:$0xc0] %vm51, %v50
    %s60 = scalar_lea.vmem %s0, 7
    %s61 = smov 3
    %v62 = vld [vmem:[%s60] ss:$16 sm:%s61]
    %s63 = scalar_lea.vmem %s0, 7
    %s64 = smov 12
    %v65 = vld [vmem:[%s63] ss:$16 sm:%s64]
    %vm66 = vcmask 1043458
    %v67 = vsel %vm66, %v65, %v62
    %s68 = scalar_lea.vmem %s0, 7
    %s69 = smov 48
    %v70 = vld [vmem:[%s68] ss:$16 sm:%s69]
    %vm71 = vcmask 1045508
    %v72 = vsel %vm71, %v70, %v67
    %s73 = scalar_lea.vmem %s0, 7
    %s74 = smov 192
    %v75 = vld [vmem:[%s73] ss:$16 sm:%s74]
    %vm76 = vcmask 1047558
    %v77 = vsel %vm76, %v75, %v72
    %78 = vrot.lane.b32.xlu0 %v77, 112
    %v79 = vpop.permute.xlu0 %78
    %vm80 = vcmask 1048448
    %81 = vst.msk [vmem:[#allocation0] sm:$0xff] %vm80, %v79
    %s82 = scalar_lea.vmem %s0, 15
    %s83 = smov 3
    %v84 = vld [vmem:[%s82] ss:$16 sm:%s83]
    %s85 = scalar_lea.vmem %s0, 15
    %s86 = smov 12
    %v87 = vld [vmem:[%s85] ss:$16 sm:%s86]
    %vm88 = vcmask 1043458
    %v89 = vsel %vm88, %v87, %v84
    %s90 = scalar_lea.vmem %s0, 15
    %s91 = smov 48
    %v92 = vld [vmem:[%s90] ss:$16 sm:%s91]
    %vm93 = vcmask 1045508
    %v94 = vsel %vm93, %v92, %v89
    %s95 = scalar_lea.vmem %s0, 15
    %s96 = smov 192
    %v97 = vld [vmem:[%s95] ss:$16 sm:%s96]
    %vm98 = vcmask 1047558
    %v99 = vsel %vm98, %v97, %v94
    %100 = vrot.lane.b32.xlu0 %v99, 112
    %v101 = vpop.permute.xlu0 %100
    %vm102 = vcmask 1048448
    %s103 = scalar_lea.vmem [#allocation0], 8
    %104 = vst.msk [vmem:[%s103] sm:$0xff] %vm102, %v101
    %s105 = scalar_lea.vmem %s0, 135
    %s106 = smov 3
    %v107 = vld [vmem:[%s105] ss:$16 sm:%s106]
    %s108 = scalar_lea.vmem %s0, 135
    %s109 = smov 12
    %v110 = vld [vmem:[%s108] ss:$16 sm:%s109]
    %vm111 = vcmask 1043458
    %v112 = vsel %vm111, %v110, %v107
    %s113 = scalar_lea.vmem %s0, 135
    %s114 = smov 48
    %v115 = vld [vmem:[%s113] ss:$16 sm:%s114]
    %vm116 = vcmask 1045508
    %v117 = vsel %vm116, %v115, %v112
    %s118 = scalar_lea.vmem %s0, 135
    %s119 = smov 192
    %v120 = vld [vmem:[%s118] ss:$16 sm:%s119]
    %vm121 = vcmask 1047558
    %v122 = vsel %vm121, %v120, %v117
    %123 = vrot.lane.b32.xlu0 %v122, 112
    %v124 = vpop.permute.xlu0 %123
    %vm125 = vcmask 1048448
    %s126 = scalar_lea.vmem [#allocation0], 16
    %127 = vst.msk [vmem:[%s126] sm:$0xff] %vm125, %v124
    %s128 = scalar_lea.vmem %s0, 143
    %s129 = smov 3
    %v130 = vld [vmem:[%s128] ss:$16 sm:%s129]
    %s131 = scalar_lea.vmem %s0, 143
    %s132 = smov 12
    %v133 = vld [vmem:[%s131] ss:$16 sm:%s132]
    %vm134 = vcmask 1043458
    %v135 = vsel %vm134, %v133, %v130
    %s136 = scalar_lea.vmem %s0, 143
    %s137 = smov 48
    %v138 = vld [vmem:[%s136] ss:$16 sm:%s137]
    %vm139 = vcmask 1045508
    %v140 = vsel %vm139, %v138, %v135
    %s141 = scalar_lea.vmem %s0, 143
    %s142 = smov 192
    %v143 = vld [vmem:[%s141] ss:$16 sm:%s142]
    %vm144 = vcmask 1047558
    %v145 = vsel %vm144, %v143, %v140
    %146 = vrot.lane.b32.xlu0 %v145, 112
    %v147 = vpop.permute.xlu0 %146
    %vm148 = vcmask 1048448
    %s149 = scalar_lea.vmem [#allocation0], 24
    %150 = vst.msk [vmem:[%s149] sm:$0xff] %vm148, %v147
    %s151 = scalar_lea.vmem %s0, 6
    %s152 = smov 3
    %v153 = vld [vmem:[%s151] ss:$16 sm:%s152]
    %s154 = scalar_lea.vmem %s0, 6
    %s155 = smov 12
    %v156 = vld [vmem:[%s154] ss:$16 sm:%s155]
    %vm157 = vcmask 1043458
    %v158 = vsel %vm157, %v156, %v153
    %s159 = scalar_lea.vmem %s0, 6
    %s160 = smov 48
    %v161 = vld [vmem:[%s159] ss:$16 sm:%s160]
    %vm162 = vcmask 1045508
    %v163 = vsel %vm162, %v161, %v158
    %s164 = scalar_lea.vmem %s0, 6
    %s165 = smov 192
    %v166 = vld [vmem:[%s164] ss:$16 sm:%s165]
    %vm167 = vcmask 1047558
    %v168 = vsel %vm167, %v166, %v163
    %169 = vrot.lane.b32.xlu0 %v168, 96
    %v170 = vpop.permute.xlu0 %169
    %vm171 = vcmask 917248
    %172 = vst.msk [vmem:[#allocation0] sm:$0xff] %vm171, %v170
    %s173 = scalar_lea.vmem %s0, 14
    %s174 = smov 3
    %v175 = vld [vmem:[%s173] ss:$16 sm:%s174]
    %s176 = scalar_lea.vmem %s0, 14
    %s177 = smov 12
    %v178 = vld [vmem:[%s176] ss:$16 sm:%s177]
    %vm179 = vcmask 1043458
    %v180 = vsel %vm179, %v178, %v175
    %s181 = scalar_lea.vmem %s0, 14
    %s182 = smov 48
    %v183 = vld [vmem:[%s181] ss:$16 sm:%s182]
    %vm184 = vcmask 1045508
    %v185 = vsel %vm184, %v183, %v180
    %s186 = scalar_lea.vmem %s0, 14
    %s187 = smov 192
    %v188 = vld [vmem:[%s186] ss:$16 sm:%s187]
    %vm189 = vcmask 1047558
    %v190 = vsel %vm189, %v188, %v185
    %191 = vrot.lane.b32.xlu0 %v190, 96
    %v192 = vpop.permute.xlu0 %191
    %vm193 = vcmask 917248
    %s194 = scalar_lea.vmem [#allocation0], 8
    %195 = vst.msk [vmem:[%s194] sm:$0xff] %vm193, %v192
    %s196 = scalar_lea.vmem %s0, 134
    %s197 = smov 3
    %v198 = vld [vmem:[%s196] ss:$16 sm:%s197]
    %s199 = scalar_lea.vmem %s0, 134
    %s200 = smov 12
    %v201 = vld [vmem:[%s199] ss:$16 sm:%s200]
    %vm202 = vcmask 1043458
    %v203 = vsel %vm202, %v201, %v198
    %s204 = scalar_lea.vmem %s0, 134
    %s205 = smov 48
    %v206 = vld [vmem:[%s204] ss:$16 sm:%s205]
    %vm207 = vcmask 1045508
    %v208 = vsel %vm207, %v206, %v203
    %s209 = scalar_lea.vmem %s0, 134
    %s210 = smov 192
    %v211 = vld [vmem:[%s209] ss:$16 sm:%s210]
    %vm212 = vcmask 1047558
    %v213 = vsel %vm212, %v211, %v208
    %214 = vrot.lane.b32.xlu0 %v213, 96
    %v215 = vpop.permute.xlu0 %214
    %vm216 = vcmask 917248
    %s217 = scalar_lea.vmem [#allocation0], 16
    %218 = vst.msk [vmem:[%s217] sm:$0xff] %vm216, %v215
    %s219 = scalar_lea.vmem %s0, 142
    %s220 = smov 3
    %v221 = vld [vmem:[%s219] ss:$16 sm:%s220]
    %s222 = scalar_lea.vmem %s0, 142
    %s223 = smov 12
    %v224 = vld [vmem:[%s222] ss:$16 sm:%s223]
    %vm225 = vcmask 1043458
    %v226 = vsel %vm225, %v224, %v221
    %s227 = scalar_lea.vmem %s0, 142
    %s228 = smov 48
    %v229 = vld [vmem:[%s227] ss:$16 sm:%s228]
    %vm230 = vcmask 1045508
    %v231 = vsel %vm230, %v229, %v226
    %s232 = scalar_lea.vmem %s0, 142
    %s233 = smov 192
    %v234 = vld [vmem:[%s232] ss:$16 sm:%s233]
    %vm235 = vcmask 1047558
    %v236 = vsel %vm235, %v234, %v231
    %237 = vrot.lane.b32.xlu0 %v236, 96
    %v238 = vpop.permute.xlu0 %237
    %vm239 = vcmask 917248
    %s240 = scalar_lea.vmem [#allocation0], 24
    %241 = vst.msk [vmem:[%s240] sm:$0xff] %vm239, %v238
    %s242 = scalar_lea.vmem %s0, 5
    %s243 = smov 3
    %v244 = vld [vmem:[%s242] ss:$16 sm:%s243]
    %s245 = scalar_lea.vmem %s0, 5
    %s246 = smov 12
    %v247 = vld [vmem:[%s245] ss:$16 sm:%s246]
    %vm248 = vcmask 1043458
    %v249 = vsel %vm248, %v247, %v244
    %s250 = scalar_lea.vmem %s0, 5
    %s251 = smov 48
    %v252 = vld [vmem:[%s250] ss:$16 sm:%s251]
    %vm253 = vcmask 1045508
    %v254 = vsel %vm253, %v252, %v249
    %s255 = scalar_lea.vmem %s0, 5
    %s256 = smov 192
    %v257 = vld [vmem:[%s255] ss:$16 sm:%s256]
    %vm258 = vcmask 1047558
    %v259 = vsel %vm258, %v257, %v254
    %260 = vrot.lane.b32.xlu0 %v259, 80
    %v261 = vpop.permute.xlu0 %260
    %vm262 = vcmask 786048
    %263 = vst.msk [vmem:[#allocation0] sm:$0xff] %vm262, %v261
    %s264 = scalar_lea.vmem %s0, 13
    %s265 = smov 3
    %v266 = vld [vmem:[%s264] ss:$16 sm:%s265]
    %s267 = scalar_lea.vmem %s0, 13
    %s268 = smov 12
    %v269 = vld [vmem:[%s267] ss:$16 sm:%s268]
    %vm270 = vcmask 1043458
    %v271 = vsel %vm270, %v269, %v266
    %s272 = scalar_lea.vmem %s0, 13
    %s273 = smov 48
    %v274 = vld [vmem:[%s272] ss:$16 sm:%s273]
    %vm275 = vcmask 1045508
    %v276 = vsel %vm275, %v274, %v271
    %s277 = scalar_lea.vmem %s0, 13
    %s278 = smov 192
    %v279 = vld [vmem:[%s277] ss:$16 sm:%s278]
    %vm280 = vcmask 1047558
    %v281 = vsel %vm280, %v279, %v276
    %282 = vrot.lane.b32.xlu0 %v281, 80
    %v283 = vpop.permute.xlu0 %282
    %vm284 = vcmask 786048
    %s285 = scalar_lea.vmem [#allocation0], 8
    %286 = vst.msk [vmem:[%s285] sm:$0xff] %vm284, %v283
    %s287 = scalar_lea.vmem %s0, 133
    %s288 = smov 3
    %v289 = vld [vmem:[%s287] ss:$16 sm:%s288]
    %s290 = scalar_lea.vmem %s0, 133
    %s291 = smov 12
    %v292 = vld [vmem:[%s290] ss:$16 sm:%s291]
    %vm293 = vcmask 1043458
    %v294 = vsel %vm293, %v292, %v289
    %s295 = scalar_lea.vmem %s0, 133
    %s296 = smov 48
    %v297 = vld [vmem:[%s295] ss:$16 sm:%s296]
    %vm298 = vcmask 1045508
    %v299 = vsel %vm298, %v297, %v294
    %s300 = scalar_lea.vmem %s0, 133
    %s301 = smov 192
    %v302 = vld [vmem:[%s300] ss:$16 sm:%s301]
    %vm303 = vcmask 1047558
    %v304 = vsel %vm303, %v302, %v299
    %305 = vrot.lane.b32.xlu0 %v304, 80
    %v306 = vpop.permute.xlu0 %305
    %vm307 = vcmask 786048
    %s308 = scalar_lea.vmem [#allocation0], 16
    %309 = vst.msk [vmem:[%s308] sm:$0xff] %vm307, %v306
    %s310 = scalar_lea.vmem %s0, 141
    %s311 = smov 3
    %v312 = vld [vmem:[%s310] ss:$16 sm:%s311]
    %s313 = scalar_lea.vmem %s0, 141
    %s314 = smov 12
    %v315 = vld [vmem:[%s313] ss:$16 sm:%s314]
    %vm316 = vcmask 1043458
    %v317 = vsel %vm316, %v315, %v312
    %s318 = scalar_lea.vmem %s0, 141
    %s319 = smov 48
    %v320 = vld [vmem:[%s318] ss:$16 sm:%s319]
    %vm321 = vcmask 1045508
    %v322 = vsel %vm321, %v320, %v317
    %s323 = scalar_lea.vmem %s0, 141
    %s324 = smov 192
    %v325 = vld [vmem:[%s323] ss:$16 sm:%s324]
    %vm326 = vcmask 1047558
    %v327 = vsel %vm326, %v325, %v322
    %328 = vrot.lane.b32.xlu0 %v327, 80
    %v329 = vpop.permute.xlu0 %328
    %vm330 = vcmask 786048
    %s331 = scalar_lea.vmem [#allocation0], 24
    %332 = vst.msk [vmem:[%s331] sm:$0xff] %vm330, %v329
    %s333 = scalar_lea.vmem %s0, 4
    %s334 = smov 3
    %v335 = vld [vmem:[%s333] ss:$16 sm:%s334]
    %s336 = scalar_lea.vmem %s0, 4
    %s337 = smov 12
    %v338 = vld [vmem:[%s336] ss:$16 sm:%s337]
    %vm339 = vcmask 1043458
    %v340 = vsel %vm339, %v338, %v335
    %s341 = scalar_lea.vmem %s0, 4
    %s342 = smov 48
    %v343 = vld [vmem:[%s341] ss:$16 sm:%s342]
    %vm344 = vcmask 1045508
    %v345 = vsel %vm344, %v343, %v340
    %s346 = scalar_lea.vmem %s0, 4
    %s347 = smov 192
    %v348 = vld [vmem:[%s346] ss:$16 sm:%s347]
    %vm349 = vcmask 1047558
    %v350 = vsel %vm349, %v348, %v345
    %351 = vrot.lane.b32.xlu0 %v350, 64
    %v352 = vpop.permute.xlu0 %351
    %vm353 = vcmask 654848
    %354 = vst.msk [vmem:[#allocation0] sm:$0xff] %vm353, %v352
    %s355 = scalar_lea.vmem %s0, 12
    %s356 = smov 3
    %v357 = vld [vmem:[%s355] ss:$16 sm:%s356]
    %s358 = scalar_lea.vmem %s0, 12
    %s359 = smov 12
    %v360 = vld [vmem:[%s358] ss:$16 sm:%s359]
    %vm361 = vcmask 1043458
    %v362 = vsel %vm361, %v360, %v357
    %s363 = scalar_lea.vmem %s0, 12
    %s364 = smov 48
    %v365 = vld [vmem:[%s363] ss:$16 sm:%s364]
    %vm366 = vcmask 1045508
    %v367 = vsel %vm366, %v365, %v362
    %s368 = scalar_lea.vmem %s0, 12
    %s369 = smov 192
    %v370 = vld [vmem:[%s368] ss:$16 sm:%s369]
    %vm371 = vcmask 1047558
    %v372 = vsel %vm371, %v370, %v367
    %373 = vrot.lane.b32.xlu0 %v372, 64
    %v374 = vpop.permute.xlu0 %373
    %vm375 = vcmask 654848
    %s376 = scalar_lea.vmem [#allocation0], 8
    %377 = vst.msk [vmem:[%s376] sm:$0xff] %vm375, %v374
    %s378 = scalar_lea.vmem %s0, 132
    %s379 = smov 3
    %v380 = vld [vmem:[%s378] ss:$16 sm:%s379]
    %s381 = scalar_lea.vmem %s0, 132
    %s382 = smov 12
    %v383 = vld [vmem:[%s381] ss:$16 sm:%s382]
    %vm384 = vcmask 1043458
    %v385 = vsel %vm384, %v383, %v380
    %s386 = scalar_lea.vmem %s0, 132
    %s387 = smov 48
    %v388 = vld [vmem:[%s386] ss:$16 sm:%s387]
    %vm389 = vcmask 1045508
    %v390 = vsel %vm389, %v388, %v385
    %s391 = scalar_lea.vmem %s0, 132
    %s392 = smov 192
    %v393 = vld [vmem:[%s391] ss:$16 sm:%s392]
    %vm394 = vcmask 1047558
    %v395 = vsel %vm394, %v393, %v390
    %396 = vrot.lane.b32.xlu0 %v395, 64
    %v397 = vpop.permute.xlu0 %396
    %vm398 = vcmask 654848
    %s399 = scalar_lea.vmem [#allocation0], 16
    %400 = vst.msk [vmem:[%s399] sm:$0xff] %vm398, %v397
    %s401 = scalar_lea.vmem %s0, 140
    %s402 = smov 3
    %v403 = vld [vmem:[%s401] ss:$16 sm:%s402]
    %s404 = scalar_lea.vmem %s0, 140
    %s405 = smov 12
    %v406 = vld [vmem:[%s404] ss:$16 sm:%s405]
    %vm407 = vcmask 1043458
    %v408 = vsel %vm407, %v406, %v403
    %s409 = scalar_lea.vmem %s0, 140
    %s410 = smov 48
    %v411 = vld [vmem:[%s409] ss:$16 sm:%s410]
    %vm412 = vcmask 1045508
    %v413 = vsel %vm412, %v411, %v408
    %s414 = scalar_lea.vmem %s0, 140
    %s415 = smov 192
    %v416 = vld [vmem:[%s414] ss:$16 sm:%s415]
    %vm417 = vcmask 1047558
    %v418 = vsel %vm417, %v416, %v413
    %419 = vrot.lane.b32.xlu0 %v418, 64
    %v420 = vpop.permute.xlu0 %419
    %vm421 = vcmask 654848
    %s422 = scalar_lea.vmem [#allocation0], 24
    %423 = vst.msk [vmem:[%s422] sm:$0xff] %vm421, %v420
    %s424 = scalar_lea.vmem %s0, 3
    %s425 = smov 3
    %v426 = vld [vmem:[%s424] ss:$16 sm:%s425]
    %s427 = scalar_lea.vmem %s0, 3
    %s428 = smov 12
    %v429 = vld [vmem:[%s427] ss:$16 sm:%s428]
    %vm430 = vcmask 1043458
    %v431 = vsel %vm430, %v429, %v426
    %s432 = scalar_lea.vmem %s0, 3
    %s433 = smov 48
    %v434 = vld [vmem:[%s432] ss:$16 sm:%s433]
    %vm435 = vcmask 1045508
    %v436 = vsel %vm435, %v434, %v431
    %s437 = scalar_lea.vmem %s0, 3
    %s438 = smov 192
    %v439 = vld [vmem:[%s437] ss:$16 sm:%s438]
    %vm440 = vcmask 1047558
    %v441 = vsel %vm440, %v439, %v436
    %442 = vrot.lane.b32.xlu0 %v441, 48
    %v443 = vpop.permute.xlu0 %442
    %vm444 = vcmask 523648
    %445 = vst.msk [vmem:[#allocation0] sm:$0xff] %vm444, %v443
    %s446 = scalar_lea.vmem %s0, 11
    %s447 = smov 3
    %v448 = vld [vmem:[%s446] ss:$16 sm:%s447]
    %s449 = scalar_lea.vmem %s0, 11
    %s450 = smov 12
    %v451 = vld [vmem:[%s449] ss:$16 sm:%s450]
    %vm452 = vcmask 1043458
    %v453 = vsel %vm452, %v451, %v448
    %s454 = scalar_lea.vmem %s0, 11
    %s455 = smov 48
    %v456 = vld [vmem:[%s454] ss:$16 sm:%s455]
    %vm457 = vcmask 1045508
    %v458 = vsel %vm457, %v456, %v453
    %s459 = scalar_lea.vmem %s0, 11
    %s460 = smov 192
    %v461 = vld [vmem:[%s459] ss:$16 sm:%s460]
    %vm462 = vcmask 1047558
    %v463 = vsel %vm462, %v461, %v458
    %464 = vrot.lane.b32.xlu0 %v463, 48
    %v465 = vpop.permute.xlu0 %464
    %vm466 = vcmask 523648
    %s467 = scalar_lea.vmem [#allocation0], 8
    %468 = vst.msk [vmem:[%s467] sm:$0xff] %vm466, %v465
    %s469 = scalar_lea.vmem %s0, 131
    %s470 = smov 3
    %v471 = vld [vmem:[%s469] ss:$16 sm:%s470]
    %s472 = scalar_lea.vmem %s0, 131
    %s473 = smov 12
    %v474 = vld [vmem:[%s472] ss:$16 sm:%s473]
    %vm475 = vcmask 1043458
    %v476 = vsel %vm475, %v474, %v471
    %s477 = scalar_lea.vmem %s0, 131
    %s478 = smov 48
    %v479 = vld [vmem:[%s477] ss:$16 sm:%s478]
    %vm480 = vcmask 1045508
    %v481 = vsel %vm480, %v479, %v476
    %s482 = scalar_lea.vmem %s0, 131
    %s483 = smov 192
    %v484 = vld [vmem:[%s482] ss:$16 sm:%s483]
    %vm485 = vcmask 1047558
    %v486 = vsel %vm485, %v484, %v481
    %487 = vrot.lane.b32.xlu0 %v486, 48
    %v488 = vpop.permute.xlu0 %487
    %vm489 = vcmask 523648
    %s490 = scalar_lea.vmem [#allocation0], 16
    %491 = vst.msk [vmem:[%s490] sm:$0xff] %vm489, %v488
    %s492 = scalar_lea.vmem %s0, 139
    %s493 = smov 3
    %v494 = vld [vmem:[%s492] ss:$16 sm:%s493]
    %s495 = scalar_lea.vmem %s0, 139
    %s496 = smov 12
    %v497 = vld [vmem:[%s495] ss:$16 sm:%s496]
    %vm498 = vcmask 1043458
    %v499 = vsel %vm498, %v497, %v494
    %s500 = scalar_lea.vmem %s0, 139
    %s501 = smov 48
    %v502 = vld [vmem:[%s500] ss:$16 sm:%s501]
    %vm503 = vcmask 1045508
    %v504 = vsel %vm503, %v502, %v499
    %s505 = scalar_lea.vmem %s0, 139
    %s506 = smov 192
    %v507 = vld [vmem:[%s505] ss:$16 sm:%s506]
    %vm508 = vcmask 1047558
    %v509 = vsel %vm508, %v507, %v504
    %510 = vrot.lane.b32.xlu0 %v509, 48
    %v511 = vpop.permute.xlu0 %510
    %vm512 = vcmask 523648
    %s513 = scalar_lea.vmem [#allocation0], 24
    %514 = vst.msk [vmem:[%s513] sm:$0xff] %vm512, %v511
    %s515 = scalar_lea.vmem %s0, 2
    %s516 = smov 3
    %v517 = vld [vmem:[%s515] ss:$16 sm:%s516]
    %s518 = scalar_lea.vmem %s0, 2
    %s519 = smov 12
    %v520 = vld [vmem:[%s518] ss:$16 sm:%s519]
    %vm521 = vcmask 1043458
    %v522 = vsel %vm521, %v520, %v517
    %s523 = scalar_lea.vmem %s0, 2
    %s524 = smov 48
    %v525 = vld [vmem:[%s523] ss:$16 sm:%s524]
    %vm526 = vcmask 1045508
    %v527 = vsel %vm526, %v525, %v522
    %s528 = scalar_lea.vmem %s0, 2
    %s529 = smov 192
    %v530 = vld [vmem:[%s528] ss:$16 sm:%s529]
    %vm531 = vcmask 1047558
    %v532 = vsel %vm531, %v530, %v527
    %533 = vrot.lane.b32.xlu0 %v532, 32
    %v534 = vpop.permute.xlu0 %533
    %vm535 = vcmask 392448
    %536 = vst.msk [vmem:[#allocation0] sm:$0xff] %vm535, %v534
    %s537 = scalar_lea.vmem %s0, 10
    %s538 = smov 3
    %v539 = vld [vmem:[%s537] ss:$16 sm:%s538]
    %s540 = scalar_lea.vmem %s0, 10
    %s541 = smov 12
    %v542 = vld [vmem:[%s540] ss:$16 sm:%s541]
    %vm543 = vcmask 1043458
    %v544 = vsel %vm543, %v542, %v539
    %s545 = scalar_lea.vmem %s0, 10
    %s546 = smov 48
    %v547 = vld [vmem:[%s545] ss:$16 sm:%s546]
    %vm548 = vcmask 1045508
    %v549 = vsel %vm548, %v547, %v544
    %s550 = scalar_lea.vmem %s0, 10
    %s551 = smov 192
    %v552 = vld [vmem:[%s550] ss:$16 sm:%s551]
    %vm553 = vcmask 1047558
    %v554 = vsel %vm553, %v552, %v549
    %555 = vrot.lane.b32.xlu0 %v554, 32
    %v556 = vpop.permute.xlu0 %555
    %vm557 = vcmask 392448
    %s558 = scalar_lea.vmem [#allocation0], 8
    %559 = vst.msk [vmem:[%s558] sm:$0xff] %vm557, %v556
    %s560 = scalar_lea.vmem %s0, 130
    %s561 = smov 3
    %v562 = vld [vmem:[%s560] ss:$16 sm:%s561]
    %s563 = scalar_lea.vmem %s0, 130
    %s564 = smov 12
    %v565 = vld [vmem:[%s563] ss:$16 sm:%s564]
    %vm566 = vcmask 1043458
    %v567 = vsel %vm566, %v565, %v562
    %s568 = scalar_lea.vmem %s0, 130
    %s569 = smov 48
    %v570 = vld [vmem:[%s568] ss:$16 sm:%s569]
    %vm571 = vcmask 1045508
    %v572 = vsel %vm571, %v570, %v567
    %s573 = scalar_lea.vmem %s0, 130
    %s574 = smov 192
    %v575 = vld [vmem:[%s573] ss:$16 sm:%s574]
    %vm576 = vcmask 1047558
    %v577 = vsel %vm576, %v575, %v572
    %578 = vrot.lane.b32.xlu0 %v577, 32
    %v579 = vpop.permute.xlu0 %578
    %vm580 = vcmask 392448
    %s581 = scalar_lea.vmem [#allocation0], 16
    %582 = vst.msk [vmem:[%s581] sm:$0xff] %vm580, %v579
    %s583 = scalar_lea.vmem %s0, 138
    %s584 = smov 3
    %v585 = vld [vmem:[%s583] ss:$16 sm:%s584]
    %s586 = scalar_lea.vmem %s0, 138
    %s587 = smov 12
    %v588 = vld [vmem:[%s586] ss:$16 sm:%s587]
    %vm589 = vcmask 1043458
    %v590 = vsel %vm589, %v588, %v585
    %s591 = scalar_lea.vmem %s0, 138
    %s592 = smov 48
    %v593 = vld [vmem:[%s591] ss:$16 sm:%s592]
    %vm594 = vcmask 1045508
    %v595 = vsel %vm594, %v593, %v590
    %s596 = scalar_lea.vmem %s0, 138
    %s597 = smov 192
    %v598 = vld [vmem:[%s596] ss:$16 sm:%s597]
    %vm599 = vcmask 1047558
    %v600 = vsel %vm599, %v598, %v595
    %601 = vrot.lane.b32.xlu0 %v600, 32
    %v602 = vpop.permute.xlu0 %601
    %vm603 = vcmask 392448
    %s604 = scalar_lea.vmem [#allocation0], 24
    %605 = vst.msk [vmem:[%s604] sm:$0xff] %vm603, %v602
    %s606 = scalar_lea.vmem %s0, 1
    %s607 = smov 3
    %v608 = vld [vmem:[%s606] ss:$16 sm:%s607]
    %s609 = scalar_lea.vmem %s0, 1
    %s610 = smov 12
    %v611 = vld [vmem:[%s609] ss:$16 sm:%s610]
    %vm612 = vcmask 1043458
    %v613 = vsel %vm612, %v611, %v608
    %s614 = scalar_lea.vmem %s0, 1
    %s615 = smov 48
    %v616 = vld [vmem:[%s614] ss:$16 sm:%s615]
    %vm617 = vcmask 1045508
    %v618 = vsel %vm617, %v616, %v613
    %s619 = scalar_lea.vmem %s0, 1
    %s620 = smov 192
    %v621 = vld [vmem:[%s619] ss:$16 sm:%s620]
    %vm622 = vcmask 1047558
    %v623 = vsel %vm622, %v621, %v618
    %624 = vrot.lane.b32.xlu0 %v623, 16
    %v625 = vpop.permute.xlu0 %624
    %vm626 = vcmask 261248
    %627 = vst.msk [vmem:[#allocation0] sm:$0xff] %vm626, %v625
    %s628 = scalar_lea.vmem %s0, 9
    %s629 = smov 3
    %v630 = vld [vmem:[%s628] ss:$16 sm:%s629]
    %s631 = scalar_lea.vmem %s0, 9
    %s632 = smov 12
    %v633 = vld [vmem:[%s631] ss:$16 sm:%s632]
    %vm634 = vcmask 1043458
    %v635 = vsel %vm634, %v633, %v630
    %s636 = scalar_lea.vmem %s0, 9
    %s637 = smov 48
    %v638 = vld [vmem:[%s636] ss:$16 sm:%s637]
    %vm639 = vcmask 1045508
    %v640 = vsel %vm639, %v638, %v635
    %s641 = scalar_lea.vmem %s0, 9
    %s642 = smov 192
    %v643 = vld [vmem:[%s641] ss:$16 sm:%s642]
    %vm644 = vcmask 1047558
    %v645 = vsel %vm644, %v643, %v640
    %646 = vrot.lane.b32.xlu0 %v645, 16
    %v647 = vpop.permute.xlu0 %646
    %vm648 = vcmask 261248
    %s649 = scalar_lea.vmem [#allocation0], 8
    %650 = vst.msk [vmem:[%s649] sm:$0xff] %vm648, %v647
    %s651 = scalar_lea.vmem %s0, 129
    %s652 = smov 3
    %v653 = vld [vmem:[%s651] ss:$16 sm:%s652]
    %s654 = scalar_lea.vmem %s0, 129
    %s655 = smov 12
    %v656 = vld [vmem:[%s654] ss:$16 sm:%s655]
    %vm657 = vcmask 1043458
    %v658 = vsel %vm657, %v656, %v653
    %s659 = scalar_lea.vmem %s0, 129
    %s660 = smov 48
    %v661 = vld [vmem:[%s659] ss:$16 sm:%s660]
    %vm662 = vcmask 1045508
    %v663 = vsel %vm662, %v661, %v658
    %s664 = scalar_lea.vmem %s0, 129
    %s665 = smov 192
    %v666 = vld [vmem:[%s664] ss:$16 sm:%s665]
    %vm667 = vcmask 1047558
    %v668 = vsel %vm667, %v666, %v663
    %669 = vrot.lane.b32.xlu0 %v668, 16
    %v670 = vpop.permute.xlu0 %669
    %vm671 = vcmask 261248
    %s672 = scalar_lea.vmem [#allocation0], 16
    %673 = vst.msk [vmem:[%s672] sm:$0xff] %vm671, %v670
    %s674 = scalar_lea.vmem %s0, 137
    %s675 = smov 3
    %v676 = vld [vmem:[%s674] ss:$16 sm:%s675]
    %s677 = scalar_lea.vmem %s0, 137
    %s678 = smov 12
    %v679 = vld [vmem:[%s677] ss:$16 sm:%s678]
    %vm680 = vcmask 1043458
    %v681 = vsel %vm680, %v679, %v676
    %s682 = scalar_lea.vmem %s0, 137
    %s683 = smov 48
    %v684 = vld [vmem:[%s682] ss:$16 sm:%s683]
    %vm685 = vcmask 1045508
    %v686 = vsel %vm685, %v684, %v681
    %s687 = scalar_lea.vmem %s0, 137
    %s688 = smov 192
    %v689 = vld [vmem:[%s687] ss:$16 sm:%s688]
    %vm690 = vcmask 1047558
    %v691 = vsel %vm690, %v689, %v686
    %692 = vrot.lane.b32.xlu0 %v691, 16
    %v693 = vpop.permute.xlu0 %692
    %vm694 = vcmask 261248
    %s695 = scalar_lea.vmem [#allocation0], 24
    %696 = vst.msk [vmem:[%s695] sm:$0xff] %vm694, %v693
    %s698 = ssub.s32 512, 512
    %699 = vsyncadd [#allocation1], %s698
    %s701 = sshll.u32 [#allocation0], 4
    %s702 = int_to_ptr.vmem [resolvable:$true] %s701
    %704 = dma.vmem_to_hbm [thread:$0]  %s702, 512, %s1, [#allocation1]
    %705 = dma.done [#allocation1], 512
    %706 = vsyncpa [#allocation1], 1

// kernel: resnet_block.1
$region0: #{resnet_block.1}
  #allocation0 [shape = 'u32[]', space=smem, size = 0x4, offset = 0x4, fixed_abs, tag = 'smem constant byte address 0x4 - core index']
  #allocation1 [shape = 'u32[144,128]{1,0:T(1,128)}', space=vmem, size = 0x12000, scoped, tag = 'internal scratch']
  #allocation2 [shape = 'bf16[18,64]{1,0:T(8,128)(2,1)}', space=vmem, size = 0x1800, scoped, tag = 'scratch operand']
  #allocation3 [shape = 'bf16[18,256]{1,0:T(8,128)(2,1)}', space=vmem, size = 0x3000, scoped, tag = 'scratch operand']
  %s0 = inlined_call_operand.hbm [shape: f32[2,16,64], index: 0, kind: input, shape index: {}]
  %s1 = inlined_call_operand.hbm [shape: bf16[3,64,256], index: 1, kind: input, shape index: {}]
  %s2 = inlined_call_operand.hbm [shape: f32[1,16], index: 2, kind: input, shape index: {}]
  %s3 = inlined_call_operand.hbm [shape: f32[1,16], index: 3, kind: input, shape index: {}]
  %s4 = inlined_call_operand.hbm [shape: bf16[3,256,256], index: 4, kind: input, shape index: {}]
  %s5 = inlined_call_operand.hbm [shape: f32[1,16], index: 5, kind: input, shape index: {}]
  %s6 = inlined_call_operand.hbm [shape: f32[1,16], index: 6, kind: input, shape index: {}]
  %s7 = inlined_call_operand.hbm [shape: f32[8,16], index: 7, kind: input, shape index: {}]
  %s8 = inlined_call_operand.hbm [shape: f32[256,8], index: 8, kind: input, shape index: {}]
  %s9 = inlined_call_operand.hbm [shape: f32[16,256], index: 9, kind: input, shape index: {}]
  %s10 = inlined_call_operand.hbm [shape: f32[2,16,256], index: 10, kind: output, shape index: {}]
  %s11 = sld [smem:[#allocation0]]
  $region113: #{resnet_block.1} parent=0
    _
  %s13 = ssub.s32 1, %s11
  %s14 = scalar_select 0, %s13, %s11
  $region1: #{resnet_block.1} parent=0
    #allocation4 [shape = 'u8[16384]{0}', space=vmem, size = 0x4000, scoped, tag = 'input window, operand 0']
    #allocation5 [shape = 's32[2]{0}', space=sflag, size = 0x8, scoped, tag = 'scoped memory for resnet_block.1']
    #allocation6 [shape = 's32[2]{0}', space=sflag, size = 0x8, scoped, tag = 'scoped memory for resnet_block.1']
    #allocation7 [shape = 'u8[98304]{0}', space=vmem, size = 0x18000, scoped, tag = 'input window, operand 1, single buffered']
    #allocation8 [shape = 's32[1]{0}', space=sflag, size = 0x4, scoped, tag = 'scoped memory for resnet_block.1']
    #allocation9 [shape = 'u8[512]{0}', space=vmem, size = 0x400, scoped, tag = 'input window, operand 2, single buffered']
    #allocation10 [shape = 'u8[512]{0}', space=vmem, size = 0x400, scoped, tag = 'input window, operand 3, single buffered']
    #allocation11 [shape = 's32[1]{0}', space=sflag, size = 0x4, scoped, tag = 'scoped memory for resnet_block.1']
    #allocation12 [shape = 'u8[393216]{0}', space=vmem, size = 0x60000, scoped, tag = 'input window, operand 4, single buffered']
    #allocation13 [shape = 'u8[512]{0}', space=vmem, size = 0x400, scoped, tag = 'input window, operand 5, single buffered']
    #allocation14 [shape = 's32[1]{0}', space=sflag, size = 0x4, scoped, tag = 'scoped memory for resnet_block.1']
    #allocation15 [shape = 'u8[512]{0}', space=vmem, size = 0x400, scoped, tag = 'input window, operand 6, single buffered']
    #allocation16 [shape = 'u8[4096]{0}', space=vmem, size = 0x1000, scoped, tag = 'input window, operand 7, single buffered']
    #allocation17 [shape = 's32[1]{0}', space=sflag, size = 0x4, scoped, tag = 'scoped memory for resnet_block.1']
    #allocation18 [shape = 'u8[131072]{0}', space=vmem, size = 0x20000, scoped, tag = 'input window, operand 8, single buffered']
    #allocation19 [shape = 'u8[16384]{0}', space=vmem, size = 0x4000, scoped, tag = 'input window, operand 9, single buffered']
    #allocation20 [shape = 's32[1]{0}', space=sflag, size = 0x4, scoped, tag = 'scoped memory for resnet_block.1']
    #allocation21 [shape = 'u8[32768]{0}', space=vmem, size = 0x8000, scoped, tag = 'output window, operand 0']
    %15 = vsyncpa [#allocation5], 0
    %s16 = scalar_lea.sflag [#allocation5], 1
    %17 = vsyncpa %s16, 0
    %18 = vsyncpa [#allocation8], 0
    %19 = vsyncpa [#allocation11], 0
    %20 = vsyncpa [#allocation14], 0
    %21 = vsyncpa [#allocation17], 0
    %22 = vsyncpa [#allocation20], 0
    %23 = vsyncpa [#allocation6], 0
    %s24 = scalar_lea.sflag [#allocation6], 1
    %25 = vsyncpa %s24, 0
    loop: start=0, step=1, limit=4
    $region2: #{resnet_block.1} parent=1 // loop_pre_header
      _
    $region3: #{resnet_block.1} parent=1 // loop_header
      %s27 = sphi 0, %s31
      %p28 = scmp.ge.s32.totalorder %s27, 4
      %s37 = sphi 0, %s39
      %s40 = sphi 0, %s37
      %s41 = sphi 0, %s40
      %s57 = sphi 0, %s41
      %s61 = sphi 0, %s61
      %s63 = sphi 0, %s61
      %s64 = sphi 0, %s63
      %s78 = sphi 0, %s64
      %s82 = sphi 0, %s82
      %s84 = sphi 0, %s82
      %s85 = sphi 0, %s84
      %s99 = sphi 0, %s85
      %s103 = sphi 0, %s103
      %s105 = sphi 0, %s103
      %s106 = sphi 0, %s105
      %s120 = sphi 0, %s106
      %s124 = sphi 0, %s124
      %s126 = sphi 0, %s124
      %s127 = sphi 0, %s126
      %s141 = sphi 0, %s127
      %s145 = sphi 0, %s145
      %s147 = sphi 0, %s145
      %s148 = sphi 0, %s147
      %s162 = sphi 0, %s148
      %s166 = sphi 0, %s166
      %s168 = sphi 0, %s166
      %s169 = sphi 0, %s168
      %s183 = sphi 0, %s169
      %s187 = sphi 0, %s187
      %s189 = sphi 0, %s187
      %s190 = sphi 0, %s189
      %s204 = sphi 0, %s190
      %s208 = sphi 0, %s208
      %s210 = sphi 0, %s208
      %s211 = sphi 0, %s210
      %s225 = sphi 0, %s211
      %s229 = sphi 0, %s229
      %s231 = sphi 0, %s229
      %s232 = sphi 0, %s231
      %s246 = sphi 0, %s232
      %s252 = sphi 0, %s254
      %s255 = sphi 0, %s252
      %s256 = sphi 0, %s255
      %s272 = sphi 0, %s256
    $region4: #{resnet_block.1} parent=1 // loop_header_branch
      %30 = sbr.rel (%p28) target = $region8
    $region5: #{resnet_block.1} parent=1 // loop_body
      %s32 = ssub.s32 %s27, 1
      %s33 = ssub.s32 %s27, 2
      %s34 = sadd.s32 %s27, 1
      %s35 = ssub.s32 %s27, %s34
      %p36 = scmp.eq.s32.totalorder %s35, 0
      %s38 = sadd.s32 %s37, 1
      %s39 = scalar_select %p36, %s37, %s38
      %p42 = pneg %p36
      %p43 = scmp.eq.s32.totalorder %s27, 1
      %p44 = por %p42, %p43
      %p45 = scmp.ne.s32.totalorder %s37, %s40
      %p46 = scmp.eq.s32.totalorder %s27, 0
      %p47 = por %p45, %p46
      %p48 = scmp.ne.s32.totalorder %s37, %s40
      %p49 = scmp.eq.s32.totalorder %s32, 1
      %p50 = por %p48, %p49
      %p51 = scmp.ne.s32.totalorder %s40, %s41
      %p52 = scmp.eq.s32.totalorder %s32, 0
      %p53 = por %p51, %p52
      %p54 = scmp.ne.s32.totalorder %s40, %s41
      %p55 = scmp.eq.s32.totalorder %s33, 1
      %p56 = por %p54, %p55
      %p58 = scmp.ne.s32.totalorder %s41, %s57
      %p59 = scmp.eq.s32.totalorder %s33, 0
      %p60 = por %p58, %p59
      %s62 = sadd.s32 %s61, 1
      %p65 = scmp.eq.s32.totalorder %s27, 1
      %p66 = scmp.ne.s32.totalorder %s61, %s63
      %p67 = scmp.eq.s32.totalorder %s27, 0
      %p68 = por %p66, %p67
      %p69 = scmp.ne.s32.totalorder %s61, %s63
      %p70 = scmp.eq.s32.totalorder %s32, 1
      %p71 = por %p69, %p70
      %p72 = scmp.ne.s32.totalorder %s63, %s64
      %p73 = scmp.eq.s32.totalorder %s32, 0
      %p74 = por %p72, %p73
      %p75 = scmp.ne.s32.totalorder %s63, %s64
      %p76 = scmp.eq.s32.totalorder %s33, 1
      %p77 = por %p75, %p76
      %p79 = scmp.ne.s32.totalorder %s64, %s78
      %p80 = scmp.eq.s32.totalorder %s33, 0
      %p81 = por %p79, %p80
      %s83 = sadd.s32 %s82, 1
      %p86 = scmp.eq.s32.totalorder %s27, 1
      %p87 = scmp.ne.s32.totalorder %s82, %s84
      %p88 = scmp.eq.s32.totalorder %s27, 0
      %p89 = por %p87, %p88
      %p90 = scmp.ne.s32.totalorder %s82, %s84
      %p91 = scmp.eq.s32.totalorder %s32, 1
      %p92 = por %p90, %p91
      %p93 = scmp.ne.s32.totalorder %s84, %s85
      %p94 = scmp.eq.s32.totalorder %s32, 0
      %p95 = por %p93, %p94
      %p96 = scmp.ne.s32.totalorder %s84, %s85
      %p97 = scmp.eq.s32.totalorder %s33, 1
      %p98 = por %p96, %p97
      %p100 = scmp.ne.s32.totalorder %s85, %s99
      %p101 = scmp.eq.s32.totalorder %s33, 0
      %p102 = por %p100, %p101
      %s104 = sadd.s32 %s103, 1
      %p107 = scmp.eq.s32.totalorder %s27, 1
      %p108 = scmp.ne.s32.totalorder %s103, %s105
      %p109 = scmp.eq.s32.totalorder %s27, 0
      %p110 = por %p108, %p109
      %p111 = scmp.ne.s32.totalorder %s103, %s105
      %p112 = scmp.eq.s32.totalorder %s32, 1
      %p113 = por %p111, %p112
      %p114 = scmp.ne.s32.totalorder %s105, %s106
      %p115 = scmp.eq.s32.totalorder %s32, 0
      %p116 = por %p114, %p115
      %p117 = scmp.ne.s32.totalorder %s105, %s106
      %p118 = scmp.eq.s32.totalorder %s33, 1
      %p119 = por %p117, %p118
      %p121 = scmp.ne.s32.totalorder %s106, %s120
      %p122 = scmp.eq.s32.totalorder %s33, 0
      %p123 = por %p121, %p122
      %s125 = sadd.s32 %s124, 1
      %p128 = scmp.eq.s32.totalorder %s27, 1
      %p129 = scmp.ne.s32.totalorder %s124, %s126
      %p130 = scmp.eq.s32.totalorder %s27, 0
      %p131 = por %p129, %p130
      %p132 = scmp.ne.s32.totalorder %s124, %s126
      %p133 = scmp.eq.s32.totalorder %s32, 1
      %p134 = por %p132, %p133
      %p135 = scmp.ne.s32.totalorder %s126, %s127
      %p136 = scmp.eq.s32.totalorder %s32, 0
      %p137 = por %p135, %p136
      %p138 = scmp.ne.s32.totalorder %s126, %s127
      %p139 = scmp.eq.s32.totalorder %s33, 1
      %p140 = por %p138, %p139
      %p142 = scmp.ne.s32.totalorder %s127, %s141
      %p143 = scmp.eq.s32.totalorder %s33, 0
      %p144 = por %p142, %p143
      %s146 = sadd.s32 %s145, 1
      %p149 = scmp.eq.s32.totalorder %s27, 1
      %p150 = scmp.ne.s32.totalorder %s145, %s147
      %p151 = scmp.eq.s32.totalorder %s27, 0
      %p152 = por %p150, %p151
      %p153 = scmp.ne.s32.totalorder %s145, %s147
      %p154 = scmp.eq.s32.totalorder %s32, 1
      %p155 = por %p153, %p154
      %p156 = scmp.ne.s32.totalorder %s147, %s148
      %p157 = scmp.eq.s32.totalorder %s32, 0
      %p158 = por %p156, %p157
      %p159 = scmp.ne.s32.totalorder %s147, %s148
      %p160 = scmp.eq.s32.totalorder %s33, 1
      %p161 = por %p159, %p160
      %p163 = scmp.ne.s32.totalorder %s148, %s162
      %p164 = scmp.eq.s32.totalorder %s33, 0
      %p165 = por %p163, %p164
      %s167 = sadd.s32 %s166, 1
      %p170 = scmp.eq.s32.totalorder %s27, 1
      %p171 = scmp.ne.s32.totalorder %s166, %s168
      %p172 = scmp.eq.s32.totalorder %s27, 0
      %p173 = por %p171, %p172
      %p174 = scmp.ne.s32.totalorder %s166, %s168
      %p175 = scmp.eq.s32.totalorder %s32, 1
      %p176 = por %p174, %p175
      %p177 = scmp.ne.s32.totalorder %s168, %s169
      %p178 = scmp.eq.s32.totalorder %s32, 0
      %p179 = por %p177, %p178
      %p180 = scmp.ne.s32.totalorder %s168, %s169
      %p181 = scmp.eq.s32.totalorder %s33, 1
      %p182 = por %p180, %p181
      %p184 = scmp.ne.s32.totalorder %s169, %s183
      %p185 = scmp.eq.s32.totalorder %s33, 0
      %p186 = por %p184, %p185
      %s188 = sadd.s32 %s187, 1
      %p191 = scmp.eq.s32.totalorder %s27, 1
      %p192 = scmp.ne.s32.totalorder %s187, %s189
      %p193 = scmp.eq.s32.totalorder %s27, 0
      %p194 = por %p192, %p193
      %p195 = scmp.ne.s32.totalorder %s187, %s189
      %p196 = scmp.eq.s32.totalorder %s32, 1
      %p197 = por %p195, %p196
      %p198 = scmp.ne.s32.totalorder %s189, %s190
      %p199 = scmp.eq.s32.totalorder %s32, 0
      %p200 = por %p198, %p199
      %p201 = scmp.ne.s32.totalorder %s189, %s190
      %p202 = scmp.eq.s32.totalorder %s33, 1
      %p203 = por %p201, %p202
      %p205 = scmp.ne.s32.totalorder %s190, %s204
      %p206 = scmp.eq.s32.totalorder %s33, 0
      %p207 = por %p205, %p206
      %s209 = sadd.s32 %s208, 1
      %p212 = scmp.eq.s32.totalorder %s27, 1
      %p213 = scmp.ne.s32.totalorder %s208, %s210
      %p214 = scmp.eq.s32.totalorder %s27, 0
      %p215 = por %p213, %p214
      %p216 = scmp.ne.s32.totalorder %s208, %s210
      %p217 = scmp.eq.s32.totalorder %s32, 1
      %p218 = por %p216, %p217
      %p219 = scmp.ne.s32.totalorder %s210, %s211
      %p220 = scmp.eq.s32.totalorder %s32, 0
      %p221 = por %p219, %p220
      %p222 = scmp.ne.s32.totalorder %s210, %s211
      %p223 = scmp.eq.s32.totalorder %s33, 1
      %p224 = por %p222, %p223
      %p226 = scmp.ne.s32.totalorder %s211, %s225
      %p227 = scmp.eq.s32.totalorder %s33, 0
      %p228 = por %p226, %p227
      %s230 = sadd.s32 %s229, 1
      %p233 = scmp.eq.s32.totalorder %s27, 1
      %p234 = scmp.ne.s32.totalorder %s229, %s231
      %p235 = scmp.eq.s32.totalorder %s27, 0
      %p236 = por %p234, %p235
      %p237 = scmp.ne.s32.totalorder %s229, %s231
      %p238 = scmp.eq.s32.totalorder %s32, 1
      %p239 = por %p237, %p238
      %p240 = scmp.ne.s32.totalorder %s231, %s232
      %p241 = scmp.eq.s32.totalorder %s32, 0
      %p242 = por %p240, %p241
      %p243 = scmp.ne.s32.totalorder %s231, %s232
      %p244 = scmp.eq.s32.totalorder %s33, 1
      %p245 = por %p243, %p244
      %p247 = scmp.ne.s32.totalorder %s232, %s246
      %p248 = scmp.eq.s32.totalorder %s33, 0
      %p249 = por %p247, %p248
      %s250 = ssub.s32 %s27, %s34
      %p251 = scmp.eq.s32.totalorder %s250, 0
      %s253 = sadd.s32 %s252, 1
      %s254 = scalar_select %p251, %s252, %s253
      %p257 = pneg %p251
      %p258 = scmp.eq.s32.totalorder %s27, 1
      %p259 = por %p257, %p258
      %p260 = scmp.ne.s32.totalorder %s252, %s255
      %p261 = scmp.eq.s32.totalorder %s27, 0
      %p262 = por %p260, %p261
      %p263 = scmp.ne.s32.totalorder %s252, %s255
      %p264 = scmp.eq.s32.totalorder %s32, 1
      %p265 = por %p263, %p264
      %p266 = scmp.ne.s32.totalorder %s255, %s256
      %p267 = scmp.eq.s32.totalorder %s32, 0
      %p268 = por %p266, %p267
      %p269 = scmp.ne.s32.totalorder %s255, %s256
      %p270 = scmp.eq.s32.totalorder %s33, 1
      %p271 = por %p269, %p270
      %p273 = scmp.ne.s32.totalorder %s256, %s272
      %p274 = scmp.eq.s32.totalorder %s33, 0
      %p275 = por %p273, %p274
      %p276 = scmp.le.s32.totalorder 1, %s27
      %p277 = scmp.lt.s32.totalorder %s27, 3
      %p278 = pnand %p276, %p277
      %p279 = pneg %p278
      // Predicated region
      $region9: #{resnet_block.1} parent=5 // pred_check
        _
      $region10: #{resnet_block.1} parent=5 // pred_check_branch
        %281 = sbr.rel (%p278) target = $region12
      $region11: #{resnet_block.1} parent=5 // pred_region
        %s282 = ssub.s32 %s27, 1
        // Predicated region
        $region13: #{resnet_block.1} parent=11 // pred_check
          %p283 = pneg %p74
        $region14: #{resnet_block.1} parent=11 // pred_check_branch
          %285 = sbr.rel (%p283) target = $region16
        $region15: #{resnet_block.1} parent=11 // pred_region
          %s287 = ssub.s32 3072, 3072
          %288 = vsyncadd [#allocation8], %s287
          %s289 = sshll.u32 [#allocation7], 4
          %s290 = int_to_ptr.vmem [resolvable:$true] %s289
          %295 = dma.hbm_to_vmem [thread:$0]  %s1, 3072, %s290, [#allocation8], 128, 128, 8
        $region16: #{resnet_block.1} parent=11 // pred_fallthru
          _
        // Predicated region
        $region17: #{resnet_block.1} parent=11 // pred_check
          %p296 = pneg %p95
        $region18: #{resnet_block.1} parent=11 // pred_check_branch
          %298 = sbr.rel (%p296) target = $region20
        $region19: #{resnet_block.1} parent=11 // pred_region
          %s300 = ssub.s32 16, 16
          %301 = vsyncadd [#allocation8], %s300
          %s303 = sshll.u32 [#allocation9], 4
          %s304 = int_to_ptr.vmem [resolvable:$true] %s303
          %306 = dma.hbm_to_vmem [thread:$0]  %s2, 16, %s304, [#allocation8]
        $region20: #{resnet_block.1} parent=11 // pred_fallthru
          _
        // Predicated region
        $region21: #{resnet_block.1} parent=11 // pred_check
          %p307 = pneg %p116
        $region22: #{resnet_block.1} parent=11 // pred_check_branch
          %309 = sbr.rel (%p307) target = $region24
        $region23: #{resnet_block.1} parent=11 // pred_region
          %s311 = ssub.s32 16, 16
          %312 = vsyncadd [#allocation11], %s311
          %s314 = sshll.u32 [#allocation10], 4
          %s315 = int_to_ptr.vmem [resolvable:$true] %s314
          %317 = dma.hbm_to_vmem [thread:$0]  %s3, 16, %s315, [#allocation11]
        $region24: #{resnet_block.1} parent=11 // pred_fallthru
          _
        // Predicated region
        $region25: #{resnet_block.1} parent=11 // pred_check
          %p318 = pneg %p137
        $region26: #{resnet_block.1} parent=11 // pred_check_branch
          %320 = sbr.rel (%p318) target = $region28
        $region27: #{resnet_block.1} parent=11 // pred_region
          %s322 = ssub.s32 12288, 12288
          %323 = vsyncadd [#allocation11], %s322
          %s324 = sshll.u32 [#allocation12], 4
          %s325 = int_to_ptr.vmem [resolvable:$true] %s324
          %330 = dma.hbm_to_vmem [thread:$0]  %s4, 12288, %s325, [#allocation11], 128, 128, 8
        $region28: #{resnet_block.1} parent=11 // pred_fallthru
          _
        // Predicated region
        $region29: #{resnet_block.1} parent=11 // pred_check
          %p331 = pneg %p158
        $region30: #{resnet_block.1} parent=11 // pred_check_branch
          %333 = sbr.rel (%p331) target = $region32
        $region31: #{resnet_block.1} parent=11 // pred_region
          %s335 = ssub.s32 16, 16
          %336 = vsyncadd [#allocation14], %s335
          %s338 = sshll.u32 [#allocation13], 4
          %s339 = int_to_ptr.vmem [resolvable:$true] %s338
          %341 = dma.hbm_to_vmem [thread:$0]  %s5, 16, %s339, [#allocation14]
        $region32: #{resnet_block.1} parent=11 // pred_fallthru
          _
        // Predicated region
        $region33: #{resnet_block.1} parent=11 // pred_check
          %p342 = pneg %p179
        $region34: #{resnet_block.1} parent=11 // pred_check_branch
          %344 = sbr.rel (%p342) target = $region36
        $region35: #{resnet_block.1} parent=11 // pred_region
          %s346 = ssub.s32 16, 16
          %347 = vsyncadd [#allocation14], %s346
          %s349 = sshll.u32 [#allocation15], 4
          %s350 = int_to_ptr.vmem [resolvable:$true] %s349
          %352 = dma.hbm_to_vmem [thread:$0]  %s6, 16, %s350, [#allocation14]
        $region36: #{resnet_block.1} parent=11 // pred_fallthru
          _
        // Predicated region
        $region37: #{resnet_block.1} parent=11 // pred_check
          %p353 = pneg %p200
        $region38: #{resnet_block.1} parent=11 // pred_check_branch
          %355 = sbr.rel (%p353) target = $region40
        $region39: #{resnet_block.1} parent=11 // pred_region
          %s357 = ssub.s32 128, 128
          %358 = vsyncadd [#allocation17], %s357
          %s360 = sshll.u32 [#allocation16], 4
          %s361 = int_to_ptr.vmem [resolvable:$true] %s360
          %363 = dma.hbm_to_vmem [thread:$0]  %s7, 128, %s361, [#allocation17]
        $region40: #{resnet_block.1} parent=11 // pred_fallthru
          _
        // Predicated region
        $region41: #{resnet_block.1} parent=11 // pred_check
          %p364 = pneg %p221
        $region42: #{resnet_block.1} parent=11 // pred_check_branch
          %366 = sbr.rel (%p364) target = $region44
        $region43: #{resnet_block.1} parent=11 // pred_region
          %s368 = ssub.s32 4096, 4096
          %369 = vsyncadd [#allocation17], %s368
          %s370 = sshll.u32 [#allocation18], 4
          %s371 = int_to_ptr.vmem [resolvable:$true] %s370
          %376 = dma.hbm_to_vmem [thread:$0]  %s8, 4096, %s371, [#allocation17], 128, 128, 8
        $region44: #{resnet_block.1} parent=11 // pred_fallthru
          _
        // Predicated region
        $region45: #{resnet_block.1} parent=11 // pred_check
          %p377 = pneg %p242
        $region46: #{resnet_block.1} parent=11 // pred_check_branch
          %379 = sbr.rel (%p377) target = $region48
        $region47: #{resnet_block.1} parent=11 // pred_region
          %s381 = ssub.s32 512, 512
          %382 = vsyncadd [#allocation20], %s381
          %s383 = sshll.u32 [#allocation19], 4
          %s384 = int_to_ptr.vmem [resolvable:$true] %s383
          %389 = dma.hbm_to_vmem [thread:$0]  %s9, 512, %s384, [#allocation20], 256, 256, 16
        $region48: #{resnet_block.1} parent=11 // pred_fallthru
          _
      $region12: #{resnet_block.1} parent=5 // pred_fallthru
        _
      %p390 = scmp.lt.s32.totalorder %s27, 2
      // Predicated region
      $region49: #{resnet_block.1} parent=5 // pred_check
        %p391 = pneg %p390
      $region50: #{resnet_block.1} parent=5 // pred_check_branch
        %393 = sbr.rel (%p391) target = $region52
      $region51: #{resnet_block.1} parent=5 // pred_region
        // Predicated region
        $region53: #{resnet_block.1} parent=51 // pred_check
          %p394 = pneg %p47
        $region54: #{resnet_block.1} parent=51 // pred_check_branch
          %396 = sbr.rel (%p394) target = $region56
        $region55: #{resnet_block.1} parent=51 // pred_region
          %s397 = sand.u32 %s37, 1
          %s398 = scalar_lea.sflag [#allocation5], %s397
          %s399 = sand.u32 %s37, 1
          %s400 = smul.addr %s399, 16
          %s401 = scalar_lea.vmem [#allocation4], %s400
          %s403 = ssub.s32 256, 256
          %404 = vsyncadd %s398, %s403
          %s405 = smul.addr %s27, 2
          %s406 = smul.addr %s405, 128
          %s407 = scalar_lea.hbm %s0, %s406
          %s408 = sshll.u32 %s401, 4
          %s409 = int_to_ptr.vmem [resolvable:$true] %s408
          %414 = dma.hbm_to_vmem [thread:$0]  %s407, 256, %s409, %s398, 128, 128, 8
        $region56: #{resnet_block.1} parent=51 // pred_fallthru
          _
      $region52: #{resnet_block.1} parent=5 // pred_fallthru
        _
      %p415 = scmp.le.s32.totalorder 1, %s27
      %p416 = scmp.lt.s32.totalorder %s27, 3
      %p417 = pnand %p415, %p416
      %p418 = pneg %p417
      // Predicated region
      $region57: #{resnet_block.1} parent=5 // pred_check
        _
      $region58: #{resnet_block.1} parent=5 // pred_check_branch
        %420 = sbr.rel (%p417) target = $region60
      $region59: #{resnet_block.1} parent=5 // pred_region
        %s421 = ssub.s32 %s27, 1
        %s422 = sand.u32 %s40, 1
        %s423 = scalar_lea.sflag [#allocation5], %s422
        %s424 = sand.u32 %s40, 1
        %s425 = smul.addr %s424, 16
        %s426 = scalar_lea.vmem [#allocation4], %s425
        // Predicated region
        $region61: #{resnet_block.1} parent=59 // pred_check
          %p427 = pneg %p53
        $region62: #{resnet_block.1} parent=59 // pred_check_branch
          %429 = sbr.rel (%p427) target = $region64
        $region63: #{resnet_block.1} parent=59 // pred_region
          %430 = dma.done %s423, 256
        $region64: #{resnet_block.1} parent=59 // pred_fallthru
          _
        // Predicated region
        $region65: #{resnet_block.1} parent=59 // pred_check
          %p431 = pneg %p74
        $region66: #{resnet_block.1} parent=59 // pred_check_branch
          %433 = sbr.rel (%p431) target = $region68
        $region67: #{resnet_block.1} parent=59 // pred_region
          %434 = dma.done [#allocation8], 3072
        $region68: #{resnet_block.1} parent=59 // pred_fallthru
          _
        // Predicated region
        $region69: #{resnet_block.1} parent=59 // pred_check
          %p435 = pneg %p95
        $region70: #{resnet_block.1} parent=59 // pred_check_branch
          %437 = sbr.rel (%p435) target = $region72
        $region71: #{resnet_block.1} parent=59 // pred_region
          %438 = dma.done [#allocation8], 16
        $region72: #{resnet_block.1} parent=59 // pred_fallthru
          _
        // Predicated region
        $region73: #{resnet_block.1} parent=59 // pred_check
          %p439 = pneg %p116
        $region74: #{resnet_block.1} parent=59 // pred_check_branch
          %441 = sbr.rel (%p439) target = $region76
        $region75: #{resnet_block.1} parent=59 // pred_region
          %442 = dma.done [#allocation11], 16
        $region76: #{resnet_block.1} parent=59 // pred_fallthru
          _
        // Predicated region
        $region77: #{resnet_block.1} parent=59 // pred_check
          %p443 = pneg %p137
        $region78: #{resnet_block.1} parent=59 // pred_check_branch
          %445 = sbr.rel (%p443) target = $region80
        $region79: #{resnet_block.1} parent=59 // pred_region
          %446 = dma.done [#allocation11], 12288
        $region80: #{resnet_block.1} parent=59 // pred_fallthru
          _
        // Predicated region
        $region81: #{resnet_block.1} parent=59 // pred_check
          %p447 = pneg %p158
        $region82: #{resnet_block.1} parent=59 // pred_check_branch
          %449 = sbr.rel (%p447) target = $region84
        $region83: #{resnet_block.1} parent=59 // pred_region
          %450 = dma.done [#allocation14], 16
        $region84: #{resnet_block.1} parent=59 // pred_fallthru
          _
        // Predicated region
        $region85: #{resnet_block.1} parent=59 // pred_check
          %p451 = pneg %p179
        $region86: #{resnet_block.1} parent=59 // pred_check_branch
          %453 = sbr.rel (%p451) target = $region88
        $region87: #{resnet_block.1} parent=59 // pred_region
          %454 = dma.done [#allocation14], 16
        $region88: #{resnet_block.1} parent=59 // pred_fallthru
          _
        // Predicated region
        $region89: #{resnet_block.1} parent=59 // pred_check
          %p455 = pneg %p200
        $region90: #{resnet_block.1} parent=59 // pred_check_branch
          %457 = sbr.rel (%p455) target = $region92
        $region91: #{resnet_block.1} parent=59 // pred_region
          %458 = dma.done [#allocation17], 128
        $region92: #{resnet_block.1} parent=59 // pred_fallthru
          _
        // Predicated region
        $region93: #{resnet_block.1} parent=59 // pred_check
          %p459 = pneg %p221
        $region94: #{resnet_block.1} parent=59 // pred_check_branch
          %461 = sbr.rel (%p459) target = $region96
        $region95: #{resnet_block.1} parent=59 // pred_region
          %462 = dma.done [#allocation17], 4096
        $region96: #{resnet_block.1} parent=59 // pred_fallthru
          _
        // Predicated region
        $region97: #{resnet_block.1} parent=59 // pred_check
          %p463 = pneg %p242
        $region98: #{resnet_block.1} parent=59 // pred_check_branch
          %465 = sbr.rel (%p463) target = $region100
        $region99: #{resnet_block.1} parent=59 // pred_region
          %466 = dma.done [#allocation20], 512
        $region100: #{resnet_block.1} parent=59 // pred_fallthru
          _
        %s467 = sand.u32 %s40, 1
        %s468 = scalar_lea.sflag [#allocation5], %s467
        %s469 = sand.u32 %s40, 1
        %s470 = smul.addr %s469, 16
        %s471 = scalar_lea.vmem [#allocation4], %s470
        %p472 = pneg %p53
        %p473 = pneg %p50
        %p474 = pneg %p74
        %p475 = pneg %p71
        %p476 = pneg %p95
        %p477 = pneg %p92
        %p478 = pneg %p116
        %p479 = pneg %p113
        %p480 = pneg %p137
        %p481 = pneg %p134
        %p482 = pneg %p158
        %p483 = pneg %p155
        %p484 = pneg %p179
        %p485 = pneg %p176
        %p486 = pneg %p200
        %p487 = pneg %p197
        %p488 = pneg %p221
        %p489 = pneg %p218
        %p490 = pneg %p242
        %p491 = pneg %p239
        %p492 = pneg %p268
        %p493 = pneg %p265
        %s494 = sand.u32 %s255, 1
        %s495 = scalar_lea.sflag [#allocation6], %s494
        %s496 = sand.u32 %s255, 1
        %s497 = smul.addr %s496, 32
        %s498 = scalar_lea.vmem [#allocation21], %s497
        %vm500 = vcmask 516096
        %vm501 = vsmask.f32 256
        %vm502 = vmand %vm500, %vm501
        %v503 = vld [vmem:[#allocation2] sm:$0x1]
        %v504 = vsel %vm502, 0, %v503
        %505 = vst [vmem:[#allocation2] sm:$0x1] %v504
        %vm506 = vsmask.f32 7938
        %vm507 = vmand %vm500, %vm506
        %v508 = vld [vmem:[#allocation2 + $0x8] sm:$0x1]
        %v509 = vsel %vm507, 0, %v508
        %510 = vst [vmem:[#allocation2 + $0x8] sm:$0x1] %v509
        %v511 = vld [vmem:[%s426] sm:$0xff]
        %v512 = vld [vmem:[%s426 + $0x8] sm:$0xff]
        %v513 = vpack.c.bf16 %v512, %v511
        %v515 = vunpack.c.l.b16 %v513
        %v516 = vunpack.c.h.b16 %v513
        %v517 = vpack.c.b16 %v515, %v515
        %v518 = vpack.c.b16 %v516, %v516
        %vm519 = vsmask.f32 4368
        %vm520 = vmor %vm501, %vm519
        %v522 = vshrl.u32 %v517, 16
        %v524 = vrot.slane %v522, 7
        %v525 = vshll.u32 %v517, 16
        %v527 = vor.u32 %v524, %v525
        %v528 = vrot.slane %v524, 4
        %v530 = vshrl.u32 %v518, 16
        %v532 = vrot.slane %v530, 7
        %v533 = vshll.u32 %v518, 16
        %v535 = vor.u32 %v532, %v533
        %v536 = vsel %vm520, %v528, %v535
        %v537 = vrot.slane %v532, 4
        %vm541 = vcmask 519168
        %vm542 = vmand %vm541, %vm506
        %v543 = vld [vmem:[#allocation2] sm:$0xf]
        %v544 = vsel %vm542, %v527, %v543
        %545 = vst [vmem:[#allocation2] sm:$0xf] %v544
        %vm546 = vcmask 519168
        %547 = vst.msk [vmem:[#allocation2 + $0x4] sm:$0xf] %vm546, %v536
        %v548 = vld [vmem:[#allocation2 + $0x8] sm:$0x1]
        %v549 = vsel %vm502, %v537, %v548
        %550 = vst [vmem:[#allocation2 + $0x8] sm:$0x1] %v549
        %v551 = vld [vmem:[#allocation2] sm:$0xf]
        %v552 = vld [vmem:[#allocation2 + $0x4] sm:$0xf]
        %v553 = vld [vmem:[#allocation7] sm:$0xff]
        %v554 = vld [vmem:[#allocation7 + $0x8] sm:$0xff]
        %v555 = vld [vmem:[#allocation7 + $0x10] sm:$0xff]
        %v556 = vld [vmem:[#allocation7 + $0x18] sm:$0xff]
        %v557 = vld [vmem:[#allocation7 + $0x20] sm:$0xff]
        %v558 = vld [vmem:[#allocation7 + $0x28] sm:$0xff]
        %v559 = vld [vmem:[#allocation7 + $0x30] sm:$0xff]
        %v560 = vld [vmem:[#allocation7 + $0x38] sm:$0xff]
        %v561 = vld [vmem:[#allocation2 + $0x8] sm:$0x1]
        %s562 = scalar_lea.vmem [#allocation7], 64
        %v563 = vld [vmem:[%s562] sm:$0xff]
        %v564 = vld [vmem:[%s562 + $0x8] sm:$0xff]
        %v565 = vld [vmem:[%s562 + $0x10] sm:$0xff]
        %v566 = vld [vmem:[%s562 + $0x18] sm:$0xff]
        %v567 = vld [vmem:[%s562 + $0x20] sm:$0xff]
        %v568 = vld [vmem:[%s562 + $0x28] sm:$0xff]
        %v569 = vld [vmem:[%s562 + $0x30] sm:$0xff]
        %v570 = vld [vmem:[%s562 + $0x38] sm:$0xff]
        %v574 = vunpack.c.l.b16 %v551
        %v575 = vunpack.c.l.b16 %v552
        %v576 = vunpack.c.l.b16 %v561
        %v577 = vpack.c.b16 %v575, %v574
        %v578 = vpack.c.b16 %v576, %v576
        %vm579 = vsmask.f32 7424
        %v581 = vshrl.u32 %v577, 16
        %v583 = vshll.u32 %v577, 16
        %v585 = vrot.slane %v583, 1
        %v586 = vor.u32 %v581, %v585
        %v588 = vshll.u32 %v578, 16
        %v590 = vrot.slane %v588, 1
        %v591 = vsel %vm579, %v586, %v590
        %v600 = vunpack.c.l.b16 %v563
        %v601 = vunpack.c.h.b16 %v563
        %v602 = vunpack.c.l.b16 %v564
        %v603 = vunpack.c.h.b16 %v564
        %v604 = vunpack.c.l.b16 %v565
        %v605 = vunpack.c.h.b16 %v565
        %v606 = vunpack.c.l.b16 %v566
        %v607 = vunpack.c.h.b16 %v566
        %v608 = vunpack.c.l.b16 %v567
        %v609 = vunpack.c.h.b16 %v567
        %v610 = vunpack.c.l.b16 %v568
        %v611 = vunpack.c.h.b16 %v568
        %v612 = vunpack.c.l.b16 %v569
        %v613 = vunpack.c.h.b16 %v569
        %v614 = vunpack.c.l.b16 %v570
        %v615 = vunpack.c.h.b16 %v570
        %v616 = vpack.c.b16 %v602, %v600
        %v617 = vpack.c.b16 %v603, %v601
        %v618 = vpack.c.b16 %v606, %v604
        %v619 = vpack.c.b16 %v607, %v605
        %v620 = vpack.c.b16 %v610, %v608
        %v621 = vpack.c.b16 %v611, %v609
        %v622 = vpack.c.b16 %v614, %v612
        %v623 = vpack.c.b16 %v615, %v613
        %vm632 = vcmask 523264
        %v634 = vsel %vm632, %v591, 0
        %636 = vmatprep.subr.bf16.mxu0 %v617
        %637 = vmatpush1.bf16.msra.mxu0 %v616
        %638 = vmatprep.subr.bf16.mxu0 %v619
        %639 = vmatpush1.bf16.msra.mxu0 %v618
        %640 = vmatprep.subr.bf16.mxu0 %v621
        %641 = vmatpush1.bf16.msra.mxu0 %v620
        %642 = vmatprep.subr.bf16.mxu0 %v623
        %643 = vmatpush1.bf16.msra.mxu0 %v622
        %644 = vmatprep.subr.bf16.mxu0 0
        %645 = vmatpush1.bf16.msra.mxu0 0
        %646 = vmatprep.subr.bf16.mxu0 0
        %647 = vmatpush1.bf16.msra.mxu0 0
        %648 = vmatprep.subr.bf16.mxu0 0
        %649 = vmatpush1.bf16.msra.mxu0 0
        %650 = vmatprep.subr.bf16.mxu0 0
        %651 = vmatpush1.bf16.msra.mxu0 0
        %652 = vmatprep.subr.bf16.mxu0 0
        %653 = vmatpush1.bf16.msra.mxu0 0
        %654 = vmatprep.subr.bf16.mxu0 0
        %655 = vmatpush1.bf16.msra.mxu0 0
        %656 = vmatprep.subr.bf16.mxu0 0
        %657 = vmatpush1.bf16.msra.mxu0 0
        %658 = vmatprep.subr.bf16.mxu0 0
        %659 = vmatpush1.bf16.msra.mxu0 0
        %660 = vmatprep.subr.bf16.mxu0 0
        %661 = vmatpush1.bf16.msra.mxu0 0
        %662 = vmatprep.subr.bf16.mxu0 0
        %663 = vmatpush1.bf16.msra.mxu0 0
        %664 = vmatprep.subr.bf16.mxu0 0
        %665 = vmatpush1.bf16.msra.mxu0 0
        %666 = vmatprep.subr.bf16.mxu0 0
        %667 = vmatpush1.bf16.msra.mxu0 0
        %668 = vmatprep.mubr.bf16.mxu0 0
        %669 = vmatmul.mubr.bf16.gmra.mrb[0].mxu0 %v634
        %v670 = vpop.f32.mrb[0].mxu0
        %v671 = vadd.f32 0.0, %v670
        %v672 = vpop.f32.mrb[0].mxu0
        %v673 = vadd.f32 0.0, %v672
        %v674 = vpop.f32.mrb[0].mxu0
        %v675 = vadd.f32 0.0, %v674
        %v676 = vpop.f32.mrb[0].mxu0
        %v677 = vadd.f32 0.0, %v676
        %678 = vdwg.mxu0
        %v687 = vunpack.c.l.b16 %v553
        %v688 = vunpack.c.h.b16 %v553
        %v689 = vunpack.c.l.b16 %v554
        %v690 = vunpack.c.h.b16 %v554
        %v691 = vunpack.c.l.b16 %v555
        %v692 = vunpack.c.h.b16 %v555
        %v693 = vunpack.c.l.b16 %v556
        %v694 = vunpack.c.h.b16 %v556
        %v695 = vunpack.c.l.b16 %v557
        %v696 = vunpack.c.h.b16 %v557
        %v697 = vunpack.c.l.b16 %v558
        %v698 = vunpack.c.h.b16 %v558
        %v699 = vunpack.c.l.b16 %v559
        %v700 = vunpack.c.h.b16 %v559
        %v701 = vunpack.c.l.b16 %v560
        %v702 = vunpack.c.h.b16 %v560
        %v703 = vpack.c.b16 %v689, %v687
        %v704 = vpack.c.b16 %v690, %v688
        %v705 = vpack.c.b16 %v693, %v691
        %v706 = vpack.c.b16 %v694, %v692
        %v707 = vpack.c.b16 %v697, %v695
        %v708 = vpack.c.b16 %v698, %v696
        %v709 = vpack.c.b16 %v701, %v699
        %v710 = vpack.c.b16 %v702, %v700
        %v719 = vsel %vm632, %v577, 0
        %721 = vmatprep.subr.bf16.mxu0 %v704
        %722 = vmatpush1.bf16.msra.mxu0 %v703
        %723 = vmatprep.subr.bf16.mxu0 %v706
        %724 = vmatpush1.bf16.msra.mxu0 %v705
        %725 = vmatprep.subr.bf16.mxu0 %v708
        %726 = vmatpush1.bf16.msra.mxu0 %v707
        %727 = vmatprep.subr.bf16.mxu0 %v710
        %728 = vmatpush1.bf16.msra.mxu0 %v709
        %729 = vmatprep.subr.bf16.mxu0 0
        %730 = vmatpush1.bf16.msra.mxu0 0
        %731 = vmatprep.subr.bf16.mxu0 0
        %732 = vmatpush1.bf16.msra.mxu0 0
        %733 = vmatprep.subr.bf16.mxu0 0
        %734 = vmatpush1.bf16.msra.mxu0 0
        %735 = vmatprep.subr.bf16.mxu0 0
        %736 = vmatpush1.bf16.msra.mxu0 0
        %737 = vmatprep.subr.bf16.mxu0 0
        %738 = vmatpush1.bf16.msra.mxu0 0
        %739 = vmatprep.subr.bf16.mxu0 0
        %740 = vmatpush1.bf16.msra.mxu0 0
        %741 = vmatprep.subr.bf16.mxu0 0
        %742 = vmatpush1.bf16.msra.mxu0 0
        %743 = vmatprep.subr.bf16.mxu0 0
        %744 = vmatpush1.bf16.msra.mxu0 0
        %745 = vmatprep.subr.bf16.mxu0 0
        %746 = vmatpush1.bf16.msra.mxu0 0
        %747 = vmatprep.subr.bf16.mxu0 0
        %748 = vmatpush1.bf16.msra.mxu0 0
        %749 = vmatprep.subr.bf16.mxu0 0
        %750 = vmatpush1.bf16.msra.mxu0 0
        %751 = vmatprep.subr.bf16.mxu0 0
        %752 = vmatpush1.bf16.msra.mxu0 0
        %753 = vmatprep.mubr.bf16.mxu0 0
        %754 = vmatmul.mubr.bf16.gmra.mrb[0].mxu0 %v719
        %v755 = vpop.f32.mrb[0].mxu0
        %v756 = vadd.f32 %v671, %v755
        %v757 = vpop.f32.mrb[0].mxu0
        %v758 = vadd.f32 %v673, %v757
        %v759 = vpop.f32.mrb[0].mxu0
        %v760 = vadd.f32 %v675, %v759
        %v761 = vpop.f32.mrb[0].mxu0
        %v762 = vadd.f32 %v677, %v761
        %763 = vdwg.mxu0
        %v764 = vld [vmem:[#allocation2] sm:$0xe]
        %s765 = scalar_lea.vmem [#allocation7], 128
        %v766 = vld [vmem:[%s765] sm:$0xff]
        %v767 = vld [vmem:[%s765 + $0x8] sm:$0xff]
        %v768 = vld [vmem:[%s765 + $0x10] sm:$0xff]
        %v769 = vld [vmem:[%s765 + $0x18] sm:$0xff]
        %v770 = vld [vmem:[%s765 + $0x20] sm:$0xff]
        %v771 = vld [vmem:[%s765 + $0x28] sm:$0xff]
        %v772 = vld [vmem:[%s765 + $0x30] sm:$0xff]
        %v773 = vld [vmem:[%s765 + $0x38] sm:$0xff]
        %v775 = vunpack.c.l.b16 %v764
        %v776 = vpack.c.b16 %v575, %v775
        %vm777 = vcmask 1046528
        %v778 = vrot.slane %v776, 1
        %v779 = vrot.slane %v578, 1
        %v780 = vsel %vm777, %v778, %v779
        %v789 = vunpack.c.l.b16 %v766
        %v790 = vunpack.c.h.b16 %v766
        %v791 = vunpack.c.l.b16 %v767
        %v792 = vunpack.c.h.b16 %v767
        %v793 = vunpack.c.l.b16 %v768
        %v794 = vunpack.c.h.b16 %v768
        %v795 = vunpack.c.l.b16 %v769
        %v796 = vunpack.c.h.b16 %v769
        %v797 = vunpack.c.l.b16 %v770
        %v798 = vunpack.c.h.b16 %v770
        %v799 = vunpack.c.l.b16 %v771
        %v800 = vunpack.c.h.b16 %v771
        %v801 = vunpack.c.l.b16 %v772
        %v802 = vunpack.c.h.b16 %v772
        %v803 = vunpack.c.l.b16 %v773
        %v804 = vunpack.c.h.b16 %v773
        %v805 = vpack.c.b16 %v791, %v789
        %v806 = vpack.c.b16 %v792, %v790
        %v807 = vpack.c.b16 %v795, %v793
        %v808 = vpack.c.b16 %v796, %v794
        %v809 = vpack.c.b16 %v799, %v797
        %v810 = vpack.c.b16 %v800, %v798
        %v811 = vpack.c.b16 %v803, %v801
        %v812 = vpack.c.b16 %v804, %v802
        %v822 = vsel %vm632, %v780, 0
        %824 = vmatprep.subr.bf16.mxu0 %v806
        %825 = vmatpush1.bf16.msra.mxu0 %v805
        %826 = vmatprep.subr.bf16.mxu0 %v808
        %827 = vmatpush1.bf16.msra.mxu0 %v807
        %828 = vmatprep.subr.bf16.mxu0 %v810
        %829 = vmatpush1.bf16.msra.mxu0 %v809
        %830 = vmatprep.subr.bf16.mxu0 %v812
        %831 = vmatpush1.bf16.msra.mxu0 %v811
        %832 = vmatprep.subr.bf16.mxu0 0
        %833 = vmatpush1.bf16.msra.mxu0 0
        %834 = vmatprep.subr.bf16.mxu0 0
        %835 = vmatpush1.bf16.msra.mxu0 0
        %836 = vmatprep.subr.bf16.mxu0 0
        %837 = vmatpush1.bf16.msra.mxu0 0
        %838 = vmatprep.subr.bf16.mxu0 0
        %839 = vmatpush1.bf16.msra.mxu0 0
        %840 = vmatprep.subr.bf16.mxu0 0
        %841 = vmatpush1.bf16.msra.mxu0 0
        %842 = vmatprep.subr.bf16.mxu0 0
        %843 = vmatpush1.bf16.msra.mxu0 0
        %844 = vmatprep.subr.bf16.mxu0 0
        %845 = vmatpush1.bf16.msra.mxu0 0
        %846 = vmatprep.subr.bf16.mxu0 0
        %847 = vmatpush1.bf16.msra.mxu0 0
        %848 = vmatprep.subr.bf16.mxu0 0
        %849 = vmatpush1.bf16.msra.mxu0 0
        %850 = vmatprep.subr.bf16.mxu0 0
        %851 = vmatpush1.bf16.msra.mxu0 0
        %852 = vmatprep.subr.bf16.mxu0 0
        %853 = vmatpush1.bf16.msra.mxu0 0
        %854 = vmatprep.subr.bf16.mxu0 0
        %855 = vmatpush1.bf16.msra.mxu0 0
        %856 = vmatprep.mubr.bf16.mxu0 0
        %857 = vmatmul.mubr.bf16.gmra.mrb[0].mxu0 %v822
        %v858 = vpop.f32.mrb[0].mxu0
        %v859 = vadd.f32 0.0, %v858
        %v860 = vpop.f32.mrb[0].mxu0
        %v861 = vadd.f32 0.0, %v860
        %v862 = vpop.f32.mrb[0].mxu0
        %v863 = vadd.f32 0.0, %v862
        %v864 = vpop.f32.mrb[0].mxu0
        %v865 = vadd.f32 0.0, %v864
        %866 = vdwg.mxu0
        %v867 = vadd.f32 %v756, %v859
        %v868 = vadd.f32 %v758, %v861
        %v869 = vadd.f32 %v760, %v863
        %v870 = vadd.f32 %v762, %v865
        %vm871 = vcmask 130048
        %v873 = vsel %vm871, 1.0, 0
        %875 = vmatprep.subr.mxu0 %v868
        %876 = vmatpush1.msra.mxu0 %v867
        %877 = vmatprep.subr.mxu0 %v870
        %878 = vmatpush1.msra.mxu0 %v869
        %879 = vmatprep.subr.mxu0 0.0
        %880 = vmatpush1.msra.mxu0 0.0
        %881 = vmatprep.subr.mxu0 0.0
        %882 = vmatpush1.msra.mxu0 0.0
        %883 = vmatprep.subr.mxu0 0.0
        %884 = vmatpush1.msra.mxu0 0.0
        %885 = vmatprep.subr.mxu0 0.0
        %886 = vmatpush1.msra.mxu0 0.0
        %887 = vmatprep.subr.mxu0 0.0
        %888 = vmatpush1.msra.mxu0 0.0
        %889 = vmatprep.subr.mxu0 0.0
        %890 = vmatpush1.msra.mxu0 0.0
        %891 = vmatprep.subr.mxu0 0.0
        %892 = vmatpush1.msra.mxu0 0.0
        %893 = vmatprep.subr.mxu0 0.0
        %894 = vmatpush1.msra.mxu0 0.0
        %895 = vmatprep.subr.mxu0 0.0
        %896 = vmatpush1.msra.mxu0 0.0
        %897 = vmatprep.subr.mxu0 0.0
        %898 = vmatpush1.msra.mxu0 0.0
        %899 = vmatprep.subr.mxu0 0.0
        %900 = vmatpush1.msra.mxu0 0.0
        %901 = vmatprep.subr.mxu0 0.0
        %902 = vmatpush1.msra.mxu0 0.0
        %903 = vmatprep.subr.mxu0 0.0
        %904 = vmatpush1.msra.mxu0 0.0
        %905 = vmatprep.subr.mxu0 0.0
        %906 = vmatpush1.msra.mxu0 0.0
        %907 = vmatprep.subr.mxu0 0.0
        %908 = vmatpush1.msra.mxu0 0.0
        %909 = vmatprep.subr.mxu0 0.0
        %910 = vmatpush1.msra.mxu0 0.0
        %911 = vmatprep.subr.mxu0 0.0
        %912 = vmatpush1.msra.mxu0 0.0
        %913 = vmatprep.subr.mxu0 0.0
        %914 = vmatpush1.msra.mxu0 0.0
        %915 = vmatprep.subr.mxu0 0.0
        %916 = vmatpush1.msra.mxu0 0.0
        %917 = vmatprep.subr.mxu0 0.0
        %918 = vmatpush1.msra.mxu0 0.0
        %919 = vmatprep.subr.mxu0 0.0
        %920 = vmatpush1.msra.mxu0 0.0
        %921 = vmatprep.subr.mxu0 0.0
        %922 = vmatpush1.msra.mxu0 0.0
        %923 = vmatprep.subr.mxu0 0.0
        %924 = vmatpush1.msra.mxu0 0.0
        %925 = vmatprep.subr.mxu0 0.0
        %926 = vmatpush1.msra.mxu0 0.0
        %927 = vmatprep.subr.mxu0 0.0
        %928 = vmatpush1.msra.mxu0 0.0
        %929 = vmatprep.subr.mxu0 0.0
        %930 = vmatpush1.msra.mxu0 0.0
        %931 = vmatprep.subr.mxu0 0.0
        %932 = vmatpush1.msra.mxu0 0.0
        %933 = vmatprep.subr.mxu0 0.0
        %934 = vmatpush1.msra.mxu0 0.0
        %935 = vmatprep.subr.mxu0 0.0
        %936 = vmatpush1.msra.mxu0 0.0
        %937 = vmatprep.subr.mxu0 0.0
        %938 = vmatpush1.msra.mxu0 0.0
        %939 = vmatprep.mubr.f32.mxu0 0.0
        %940 = vmatmul.mubr.f32.gmra.mrb[0].mxu0 %v873
        %v941 = vpop.f32.mrb[0].mxu0
        %v942 = vadd.f32 0.0, %v941
        %v943 = vpop.f32.mrb[0].mxu0
        %v944 = vadd.f32 0.0, %v943
        %945 = vdwg.mxu0
        %v946 = vmul.f32 %v867, %v867
        %v947 = vmul.f32 %v868, %v868
        %v948 = vmul.f32 %v869, %v869
        %v949 = vmul.f32 %v870, %v870
        %950 = vmatprep.subr.mxu0 %v947
        %951 = vmatpush1.msra.mxu0 %v946
        %952 = vmatprep.subr.mxu0 %v949
        %953 = vmatpush1.msra.mxu0 %v948
        %954 = vmatprep.subr.mxu0 0.0
        %955 = vmatpush1.msra.mxu0 0.0
        %956 = vmatprep.subr.mxu0 0.0
        %957 = vmatpush1.msra.mxu0 0.0
        %958 = vmatprep.subr.mxu0 0.0
        %959 = vmatpush1.msra.mxu0 0.0
        %960 = vmatprep.subr.mxu0 0.0
        %961 = vmatpush1.msra.mxu0 0.0
        %962 = vmatprep.subr.mxu0 0.0
        %963 = vmatpush1.msra.mxu0 0.0
        %964 = vmatprep.subr.mxu0 0.0
        %965 = vmatpush1.msra.mxu0 0.0
        %966 = vmatprep.subr.mxu0 0.0
        %967 = vmatpush1.msra.mxu0 0.0
        %968 = vmatprep.subr.mxu0 0.0
        %969 = vmatpush1.msra.mxu0 0.0
        %970 = vmatprep.subr.mxu0 0.0
        %971 = vmatpush1.msra.mxu0 0.0
        %972 = vmatprep.subr.mxu0 0.0
        %973 = vmatpush1.msra.mxu0 0.0
        %974 = vmatprep.subr.mxu0 0.0
        %975 = vmatpush1.msra.mxu0 0.0
        %976 = vmatprep.subr.mxu0 0.0
        %977 = vmatpush1.msra.mxu0 0.0
        %978 = vmatprep.subr.mxu0 0.0
        %979 = vmatpush1.msra.mxu0 0.0
        %980 = vmatprep.subr.mxu0 0.0
        %981 = vmatpush1.msra.mxu0 0.0
        %982 = vmatprep.subr.mxu0 0.0
        %983 = vmatpush1.msra.mxu0 0.0
        %984 = vmatprep.subr.mxu0 0.0
        %985 = vmatpush1.msra.mxu0 0.0
        %986 = vmatprep.subr.mxu0 0.0
        %987 = vmatpush1.msra.mxu0 0.0
        %988 = vmatprep.subr.mxu0 0.0
        %989 = vmatpush1.msra.mxu0 0.0
        %990 = vmatprep.subr.mxu0 0.0
        %991 = vmatpush1.msra.mxu0 0.0
        %992 = vmatprep.subr.mxu0 0.0
        %993 = vmatpush1.msra.mxu0 0.0
        %994 = vmatprep.subr.mxu0 0.0
        %995 = vmatpush1.msra.mxu0 0.0
        %996 = vmatprep.subr.mxu0 0.0
        %997 = vmatpush1.msra.mxu0 0.0
        %998 = vmatprep.subr.mxu0 0.0
        %999 = vmatpush1.msra.mxu0 0.0
        %1000 = vmatprep.subr.mxu0 0.0
        %1001 = vmatpush1.msra.mxu0 0.0
        %1002 = vmatprep.subr.mxu0 0.0
        %1003 = vmatpush1.msra.mxu0 0.0
        %1004 = vmatprep.subr.mxu0 0.0
        %1005 = vmatpush1.msra.mxu0 0.0
        %1006 = vmatprep.subr.mxu0 0.0
        %1007 = vmatpush1.msra.mxu0 0.0
        %1008 = vmatprep.subr.mxu0 0.0
        %1009 = vmatpush1.msra.mxu0 0.0
        %1010 = vmatprep.subr.mxu0 0.0
        %1011 = vmatpush1.msra.mxu0 0.0
        %1012 = vmatprep.subr.mxu0 0.0
        %1013 = vmatpush1.msra.mxu0 0.0
        %1014 = vmatprep.mubr.f32.mxu0 0.0
        %1015 = vmatmul.mubr.f32.gmra.mrb[0].mxu0 %v873
        %v1016 = vpop.f32.mrb[0].mxu0
        %v1017 = vadd.f32 0.0, %v1016
        %v1018 = vpop.f32.mrb[0].mxu0
        %v1019 = vadd.f32 0.0, %v1018
        %1020 = vdwg.mxu0
        %v1021 = vld [vmem:[#allocation18] sm:$0xff]
        %v1022 = vld [vmem:[#allocation18 + $0x8] sm:$0xff]
        %v1023 = vld [vmem:[#allocation18 + $0x10] sm:$0xff]
        %v1024 = vld [vmem:[#allocation18 + $0x18] sm:$0xff]
        %v1025 = vld [vmem:[#allocation18 + $0x20] sm:$0xff]
        %v1026 = vld [vmem:[#allocation18 + $0x28] sm:$0xff]
        %v1027 = vld [vmem:[#allocation18 + $0x30] sm:$0xff]
        %v1028 = vld [vmem:[#allocation18 + $0x38] sm:$0xff]
        %v1029 = vld [vmem:[#allocation18 + $0x40] sm:$0xff]
        %v1030 = vld [vmem:[#allocation18 + $0x48] sm:$0xff]
        %v1031 = vld [vmem:[#allocation18 + $0x50] sm:$0xff]
        %v1032 = vld [vmem:[#allocation18 + $0x58] sm:$0xff]
        %v1033 = vld [vmem:[#allocation18 + $0x60] sm:$0xff]
        %v1034 = vld [vmem:[#allocation18 + $0x68] sm:$0xff]
        %v1035 = vld [vmem:[#allocation18 + $0x70] sm:$0xff]
        %v1036 = vld [vmem:[#allocation18 + $0x78] sm:$0xff]
        %v1037 = vld [vmem:[#allocation18 + $0x80] sm:$0xff]
        %v1038 = vld [vmem:[#allocation18 + $0x88] sm:$0xff]
        %v1039 = vld [vmem:[#allocation18 + $0x90] sm:$0xff]
        %v1040 = vld [vmem:[#allocation18 + $0x98] sm:$0xff]
        %v1041 = vld [vmem:[#allocation18 + $0xa0] sm:$0xff]
        %v1042 = vld [vmem:[#allocation18 + $0xa8] sm:$0xff]
        %v1043 = vld [vmem:[#allocation18 + $0xb0] sm:$0xff]
        %v1044 = vld [vmem:[#allocation18 + $0xb8] sm:$0xff]
        %v1045 = vld [vmem:[#allocation18 + $0xc0] sm:$0xff]
        %v1046 = vld [vmem:[#allocation18 + $0xc8] sm:$0xff]
        %v1047 = vld [vmem:[#allocation18 + $0xd0] sm:$0xff]
        %v1048 = vld [vmem:[#allocation18 + $0xd8] sm:$0xff]
        %v1049 = vld [vmem:[#allocation18 + $0xe0] sm:$0xff]
        %v1050 = vld [vmem:[#allocation18 + $0xe8] sm:$0xff]
        %v1051 = vld [vmem:[#allocation18 + $0xf0] sm:$0xff]
        %v1052 = vld [vmem:[#allocation18 + $0xf8] sm:$0xff]
        %1053 = vmatprep.subr.mxu0 0.0
        %1054 = vmatpush1.msra.mxu0 %v1021
        %1055 = vmatprep.subr.mxu0 0.0
        %1056 = vmatpush1.msra.mxu0 %v1022
        %1057 = vmatprep.subr.mxu0 0.0
        %1058 = vmatpush1.msra.mxu0 %v1023
        %1059 = vmatprep.subr.mxu0 0.0
        %1060 = vmatpush1.msra.mxu0 %v1024
        %1061 = vmatprep.subr.mxu0 0.0
        %1062 = vmatpush1.msra.mxu0 %v1025
        %1063 = vmatprep.subr.mxu0 0.0
        %1064 = vmatpush1.msra.mxu0 %v1026
        %1065 = vmatprep.subr.mxu0 0.0
        %1066 = vmatpush1.msra.mxu0 %v1027
        %1067 = vmatprep.subr.mxu0 0.0
        %1068 = vmatpush1.msra.mxu0 %v1028
        %1069 = vmatprep.subr.mxu0 0.0
        %1070 = vmatpush1.msra.mxu0 %v1029
        %1071 = vmatprep.subr.mxu0 0.0
        %1072 = vmatpush1.msra.mxu0 %v1030
        %1073 = vmatprep.subr.mxu0 0.0
        %1074 = vmatpush1.msra.mxu0 %v1031
        %1075 = vmatprep.subr.mxu0 0.0
        %1076 = vmatpush1.msra.mxu0 %v1032
        %1077 = vmatprep.subr.mxu0 0.0
        %1078 = vmatpush1.msra.mxu0 %v1033
        %1079 = vmatprep.subr.mxu0 0.0
        %1080 = vmatpush1.msra.mxu0 %v1034
        %1081 = vmatprep.subr.mxu0 0.0
        %1082 = vmatpush1.msra.mxu0 %v1035
        %1083 = vmatprep.subr.mxu0 0.0
        %1084 = vmatpush1.msra.mxu0 %v1036
        %1085 = vmatprep.subr.mxu0 0.0
        %1086 = vmatpush1.msra.mxu0 %v1037
        %1087 = vmatprep.subr.mxu0 0.0
        %1088 = vmatpush1.msra.mxu0 %v1038
        %1089 = vmatprep.subr.mxu0 0.0
        %1090 = vmatpush1.msra.mxu0 %v1039
        %1091 = vmatprep.subr.mxu0 0.0
        %1092 = vmatpush1.msra.mxu0 %v1040
        %1093 = vmatprep.subr.mxu0 0.0
        %1094 = vmatpush1.msra.mxu0 %v1041
        %1095 = vmatprep.subr.mxu0 0.0
        %1096 = vmatpush1.msra.mxu0 %v1042
        %1097 = vmatprep.subr.mxu0 0.0
        %1098 = vmatpush1.msra.mxu0 %v1043
        %1099 = vmatprep.subr.mxu0 0.0
        %1100 = vmatpush1.msra.mxu0 %v1044
        %1101 = vmatprep.subr.mxu0 0.0
        %1102 = vmatpush1.msra.mxu0 %v1045
        %1103 = vmatprep.subr.mxu0 0.0
        %1104 = vmatpush1.msra.mxu0 %v1046
        %1105 = vmatprep.subr.mxu0 0.0
        %1106 = vmatpush1.msra.mxu0 %v1047
        %1107 = vmatprep.subr.mxu0 0.0
        %1108 = vmatpush1.msra.mxu0 %v1048
        %1109 = vmatprep.subr.mxu0 0.0
        %1110 = vmatpush1.msra.mxu0 %v1049
        %1111 = vmatprep.subr.mxu0 0.0
        %1112 = vmatpush1.msra.mxu0 %v1050
        %1113 = vmatprep.subr.mxu0 0.0
        %1114 = vmatpush1.msra.mxu0 %v1051
        %1115 = vmatprep.subr.mxu0 0.0
        %1116 = vmatpush1.msra.mxu0 %v1052
        %1117 = vmatprep.mubr.f32.mxu0 %v944
        %1118 = vmatmul.mubr.f32.gmra.mrb[0].mxu0 %v942
        %v1119 = vpop.f32.mrb[0].mxu0
        %v1120 = vadd.f32 0.0, %v1119
        %v1121 = vpop.f32.mrb[0].mxu0
        %1122 = vdwg.mxu0
        %1123 = vmatprep.subr.mxu0 0.0
        %1124 = vmatpush1.msra.mxu0 %v1021
        %1125 = vmatprep.subr.mxu0 0.0
        %1126 = vmatpush1.msra.mxu0 %v1022
        %1127 = vmatprep.subr.mxu0 0.0
        %1128 = vmatpush1.msra.mxu0 %v1023
        %1129 = vmatprep.subr.mxu0 0.0
        %1130 = vmatpush1.msra.mxu0 %v1024
        %1131 = vmatprep.subr.mxu0 0.0
        %1132 = vmatpush1.msra.mxu0 %v1025
        %1133 = vmatprep.subr.mxu0 0.0
        %1134 = vmatpush1.msra.mxu0 %v1026
        %1135 = vmatprep.subr.mxu0 0.0
        %1136 = vmatpush1.msra.mxu0 %v1027
        %1137 = vmatprep.subr.mxu0 0.0
        %1138 = vmatpush1.msra.mxu0 %v1028
        %1139 = vmatprep.subr.mxu0 0.0
        %1140 = vmatpush1.msra.mxu0 %v1029
        %1141 = vmatprep.subr.mxu0 0.0
        %1142 = vmatpush1.msra.mxu0 %v1030
        %1143 = vmatprep.subr.mxu0 0.0
        %1144 = vmatpush1.msra.mxu0 %v1031
        %1145 = vmatprep.subr.mxu0 0.0
        %1146 = vmatpush1.msra.mxu0 %v1032
        %1147 = vmatprep.subr.mxu0 0.0
        %1148 = vmatpush1.msra.mxu0 %v1033
        %1149 = vmatprep.subr.mxu0 0.0
        %1150 = vmatpush1.msra.mxu0 %v1034
        %1151 = vmatprep.subr.mxu0 0.0
        %1152 = vmatpush1.msra.mxu0 %v1035
        %1153 = vmatprep.subr.mxu0 0.0
        %1154 = vmatpush1.msra.mxu0 %v1036
        %1155 = vmatprep.subr.mxu0 0.0
        %1156 = vmatpush1.msra.mxu0 %v1037
        %1157 = vmatprep.subr.mxu0 0.0
        %1158 = vmatpush1.msra.mxu0 %v1038
        %1159 = vmatprep.subr.mxu0 0.0
        %1160 = vmatpush1.msra.mxu0 %v1039
        %1161 = vmatprep.subr.mxu0 0.0
        %1162 = vmatpush1.msra.mxu0 %v1040
        %1163 = vmatprep.subr.mxu0 0.0
        %1164 = vmatpush1.msra.mxu0 %v1041
        %1165 = vmatprep.subr.mxu0 0.0
        %1166 = vmatpush1.msra.mxu0 %v1042
        %1167 = vmatprep.subr.mxu0 0.0
        %1168 = vmatpush1.msra.mxu0 %v1043
        %1169 = vmatprep.subr.mxu0 0.0
        %1170 = vmatpush1.msra.mxu0 %v1044
        %1171 = vmatprep.subr.mxu0 0.0
        %1172 = vmatpush1.msra.mxu0 %v1045
        %1173 = vmatprep.subr.mxu0 0.0
        %1174 = vmatpush1.msra.mxu0 %v1046
        %1175 = vmatprep.subr.mxu0 0.0
        %1176 = vmatpush1.msra.mxu0 %v1047
        %1177 = vmatprep.subr.mxu0 0.0
        %1178 = vmatpush1.msra.mxu0 %v1048
        %1179 = vmatprep.subr.mxu0 0.0
        %1180 = vmatpush1.msra.mxu0 %v1049
        %1181 = vmatprep.subr.mxu0 0.0
        %1182 = vmatpush1.msra.mxu0 %v1050
        %1183 = vmatprep.subr.mxu0 0.0
        %1184 = vmatpush1.msra.mxu0 %v1051
        %1185 = vmatprep.subr.mxu0 0.0
        %1186 = vmatpush1.msra.mxu0 %v1052
        %1187 = vmatprep.mubr.f32.mxu0 %v1019
        %1188 = vmatmul.mubr.f32.gmra.mrb[0].mxu0 %v1017
        %v1189 = vpop.f32.mrb[0].mxu0
        %v1190 = vadd.f32 0.0, %v1189
        %v1191 = vpop.f32.mrb[0].mxu0
        %1192 = vdwg.mxu0
        %v1193 = vrcp.pop 512.0
        %v1194 = vmul.f32 %v1120, %v1193
        %v1195 = vmul.f32 %v1190, %v1193
        %v1196 = vmul.f32 %v1194, %v1194
        %v1197 = vsub.f32 %v1195, %v1196
        %v1198 = vmax.f32 %v1197, 0.0
        %v1199 = vadd.f32 %v1198, 1e-05
        %v1200 = vrsqrt.pop %v1199
        %v1201 = vld [vmem:[#allocation16] sm:$0xff]
        %vm1202 = vcmask 64512
        %v1204 = vsel %vm1202, %v1194, 0
        %1206 = vmatprep.subr.mxu0 0.0
        %1207 = vmatpush1.msra.mxu0 %v1201
        %1208 = vmatprep.subr.mxu0 0.0
        %1209 = vmatpush1.msra.mxu0 0.0
        %1210 = vmatprep.subr.mxu0 0.0
        %1211 = vmatpush1.msra.mxu0 0.0
        %1212 = vmatprep.subr.mxu0 0.0
        %1213 = vmatpush1.msra.mxu0 0.0
        %1214 = vmatprep.subr.mxu0 0.0
        %1215 = vmatpush1.msra.mxu0 0.0
        %1216 = vmatprep.subr.mxu0 0.0
        %1217 = vmatpush1.msra.mxu0 0.0
        %1218 = vmatprep.subr.mxu0 0.0
        %1219 = vmatpush1.msra.mxu0 0.0
        %1220 = vmatprep.subr.mxu0 0.0
        %1221 = vmatpush1.msra.mxu0 0.0
        %1222 = vmatprep.subr.mxu0 0.0
        %1223 = vmatpush1.msra.mxu0 0.0
        %1224 = vmatprep.subr.mxu0 0.0
        %1225 = vmatpush1.msra.mxu0 0.0
        %1226 = vmatprep.subr.mxu0 0.0
        %1227 = vmatpush1.msra.mxu0 0.0
        %1228 = vmatprep.subr.mxu0 0.0
        %1229 = vmatpush1.msra.mxu0 0.0
        %1230 = vmatprep.subr.mxu0 0.0
        %1231 = vmatpush1.msra.mxu0 0.0
        %1232 = vmatprep.subr.mxu0 0.0
        %1233 = vmatpush1.msra.mxu0 0.0
        %1234 = vmatprep.subr.mxu0 0.0
        %1235 = vmatpush1.msra.mxu0 0.0
        %1236 = vmatprep.subr.mxu0 0.0
        %1237 = vmatpush1.msra.mxu0 0.0
        %1238 = vmatprep.subr.mxu0 0.0
        %1239 = vmatpush1.msra.mxu0 0.0
        %1240 = vmatprep.subr.mxu0 0.0
        %1241 = vmatpush1.msra.mxu0 0.0
        %1242 = vmatprep.subr.mxu0 0.0
        %1243 = vmatpush1.msra.mxu0 0.0
        %1244 = vmatprep.subr.mxu0 0.0
        %1245 = vmatpush1.msra.mxu0 0.0
        %1246 = vmatprep.subr.mxu0 0.0
        %1247 = vmatpush1.msra.mxu0 0.0
        %1248 = vmatprep.subr.mxu0 0.0
        %1249 = vmatpush1.msra.mxu0 0.0
        %1250 = vmatprep.subr.mxu0 0.0
        %1251 = vmatpush1.msra.mxu0 0.0
        %1252 = vmatprep.subr.mxu0 0.0
        %1253 = vmatpush1.msra.mxu0 0.0
        %1254 = vmatprep.subr.mxu0 0.0
        %1255 = vmatpush1.msra.mxu0 0.0
        %1256 = vmatprep.subr.mxu0 0.0
        %1257 = vmatpush1.msra.mxu0 0.0
        %1258 = vmatprep.subr.mxu0 0.0
        %1259 = vmatpush1.msra.mxu0 0.0
        %1260 = vmatprep.subr.mxu0 0.0
        %1261 = vmatpush1.msra.mxu0 0.0
        %1262 = vmatprep.subr.mxu0 0.0
        %1263 = vmatpush1.msra.mxu0 0.0
        %1264 = vmatprep.subr.mxu0 0.0
        %1265 = vmatpush1.msra.mxu0 0.0
        %1266 = vmatprep.subr.mxu0 0.0
        %1267 = vmatpush1.msra.mxu0 0.0
        %1268 = vmatprep.subr.mxu0 0.0
        %1269 = vmatpush1.msra.mxu0 0.0
        %1270 = vmatprep.mubr.f32.mxu0 0.0
        %1271 = vmatmul.mubr.f32.gmra.mrb[0].mxu0 %v1204
        %v1272 = vpop.f32.mrb[0].mxu0
        %v1273 = vadd.f32 0.0, %v1272
        %v1274 = vpop.f32.mrb[0].mxu0
        %1275 = vdwg.mxu0
        %v1277 = vsel %vm1202, %v1200, 0
        %1279 = vmatprep.subr.mxu0 0.0
        %1280 = vmatpush1.msra.mxu0 %v1201
        %1281 = vmatprep.subr.mxu0 0.0
        %1282 = vmatpush1.msra.mxu0 0.0
        %1283 = vmatprep.subr.mxu0 0.0
        %1284 = vmatpush1.msra.mxu0 0.0
        %1285 = vmatprep.subr.mxu0 0.0
        %1286 = vmatpush1.msra.mxu0 0.0
        %1287 = vmatprep.subr.mxu0 0.0
        %1288 = vmatpush1.msra.mxu0 0.0
        %1289 = vmatprep.subr.mxu0 0.0
        %1290 = vmatpush1.msra.mxu0 0.0
        %1291 = vmatprep.subr.mxu0 0.0
        %1292 = vmatpush1.msra.mxu0 0.0
        %1293 = vmatprep.subr.mxu0 0.0
        %1294 = vmatpush1.msra.mxu0 0.0
        %1295 = vmatprep.subr.mxu0 0.0
        %1296 = vmatpush1.msra.mxu0 0.0
        %1297 = vmatprep.subr.mxu0 0.0
        %1298 = vmatpush1.msra.mxu0 0.0
        %1299 = vmatprep.subr.mxu0 0.0
        %1300 = vmatpush1.msra.mxu0 0.0
        %1301 = vmatprep.subr.mxu0 0.0
        %1302 = vmatpush1.msra.mxu0 0.0
        %1303 = vmatprep.subr.mxu0 0.0
        %1304 = vmatpush1.msra.mxu0 0.0
        %1305 = vmatprep.subr.mxu0 0.0
        %1306 = vmatpush1.msra.mxu0 0.0
        %1307 = vmatprep.subr.mxu0 0.0
        %1308 = vmatpush1.msra.mxu0 0.0
        %1309 = vmatprep.subr.mxu0 0.0
        %1310 = vmatpush1.msra.mxu0 0.0
        %1311 = vmatprep.subr.mxu0 0.0
        %1312 = vmatpush1.msra.mxu0 0.0
        %1313 = vmatprep.subr.mxu0 0.0
        %1314 = vmatpush1.msra.mxu0 0.0
        %1315 = vmatprep.subr.mxu0 0.0
        %1316 = vmatpush1.msra.mxu0 0.0
        %1317 = vmatprep.subr.mxu0 0.0
        %1318 = vmatpush1.msra.mxu0 0.0
        %1319 = vmatprep.subr.mxu0 0.0
        %1320 = vmatpush1.msra.mxu0 0.0
        %1321 = vmatprep.subr.mxu0 0.0
        %1322 = vmatpush1.msra.mxu0 0.0
        %1323 = vmatprep.subr.mxu0 0.0
        %1324 = vmatpush1.msra.mxu0 0.0
        %1325 = vmatprep.subr.mxu0 0.0
        %1326 = vmatpush1.msra.mxu0 0.0
        %1327 = vmatprep.subr.mxu0 0.0
        %1328 = vmatpush1.msra.mxu0 0.0
        %1329 = vmatprep.subr.mxu0 0.0
        %1330 = vmatpush1.msra.mxu0 0.0
        %1331 = vmatprep.subr.mxu0 0.0
        %1332 = vmatpush1.msra.mxu0 0.0
        %1333 = vmatprep.subr.mxu0 0.0
        %1334 = vmatpush1.msra.mxu0 0.0
        %1335 = vmatprep.subr.mxu0 0.0
        %1336 = vmatpush1.msra.mxu0 0.0
        %1337 = vmatprep.subr.mxu0 0.0
        %1338 = vmatpush1.msra.mxu0 0.0
        %1339 = vmatprep.subr.mxu0 0.0
        %1340 = vmatpush1.msra.mxu0 0.0
        %1341 = vmatprep.subr.mxu0 0.0
        %1342 = vmatpush1.msra.mxu0 0.0
        %1343 = vmatprep.mubr.f32.mxu0 0.0
        %1344 = vmatmul.mubr.f32.gmra.mrb[0].mxu0 %v1277
        %v1345 = vpop.f32.mrb[0].mxu0
        %v1346 = vadd.f32 0.0, %v1345
        %v1347 = vpop.f32.mrb[0].mxu0
        %1348 = vdwg.mxu0
        %v1349 = vld [vmem:[#allocation9] sm:$0x1]
        %v1350 = vmul.f32 %v1346, %v1349
        %v1351 = vld [vmem:[#allocation10] sm:$0x1]
        %v1352 = vmul.f32 %v1273, %v1350
        %v1353 = vsub.f32 %v1351, %v1352
        %v1354 = vld [vmem:[#allocation19] sm:$0xff]
        %v1355 = vld [vmem:[#allocation19 + $0x8] sm:$0xff]
        %v1356 = vld [vmem:[#allocation19 + $0x10] sm:$0xff]
        %v1357 = vld [vmem:[#allocation19 + $0x18] sm:$0xff]
        %v1359 = vsel %vm871, %v1350, 0
        %1361 = vmatprep.subr.mxu0 %v1355
        %1362 = vmatpush1.msra.mxu0 %v1354
        %1363 = vmatprep.subr.mxu0 %v1357
        %1364 = vmatpush1.msra.mxu0 %v1356
        %1365 = vmatprep.subr.mxu0 0.0
        %1366 = vmatpush1.msra.mxu0 0.0
        %1367 = vmatprep.subr.mxu0 0.0
        %1368 = vmatpush1.msra.mxu0 0.0
        %1369 = vmatprep.subr.mxu0 0.0
        %1370 = vmatpush1.msra.mxu0 0.0
        %1371 = vmatprep.subr.mxu0 0.0
        %1372 = vmatpush1.msra.mxu0 0.0
        %1373 = vmatprep.subr.mxu0 0.0
        %1374 = vmatpush1.msra.mxu0 0.0
        %1375 = vmatprep.subr.mxu0 0.0
        %1376 = vmatpush1.msra.mxu0 0.0
        %1377 = vmatprep.subr.mxu0 0.0
        %1378 = vmatpush1.msra.mxu0 0.0
        %1379 = vmatprep.subr.mxu0 0.0
        %1380 = vmatpush1.msra.mxu0 0.0
        %1381 = vmatprep.subr.mxu0 0.0
        %1382 = vmatpush1.msra.mxu0 0.0
        %1383 = vmatprep.subr.mxu0 0.0
        %1384 = vmatpush1.msra.mxu0 0.0
        %1385 = vmatprep.subr.mxu0 0.0
        %1386 = vmatpush1.msra.mxu0 0.0
        %1387 = vmatprep.subr.mxu0 0.0
        %1388 = vmatpush1.msra.mxu0 0.0
        %1389 = vmatprep.subr.mxu0 0.0
        %1390 = vmatpush1.msra.mxu0 0.0
        %1391 = vmatprep.subr.mxu0 0.0
        %1392 = vmatpush1.msra.mxu0 0.0
        %1393 = vmatprep.subr.mxu0 0.0
        %1394 = vmatpush1.msra.mxu0 0.0
        %1395 = vmatprep.subr.mxu0 0.0
        %1396 = vmatpush1.msra.mxu0 0.0
        %1397 = vmatprep.subr.mxu0 0.0
        %1398 = vmatpush1.msra.mxu0 0.0
        %1399 = vmatprep.subr.mxu0 0.0
        %1400 = vmatpush1.msra.mxu0 0.0
        %1401 = vmatprep.subr.mxu0 0.0
        %1402 = vmatpush1.msra.mxu0 0.0
        %1403 = vmatprep.subr.mxu0 0.0
        %1404 = vmatpush1.msra.mxu0 0.0
        %1405 = vmatprep.subr.mxu0 0.0
        %1406 = vmatpush1.msra.mxu0 0.0
        %1407 = vmatprep.subr.mxu0 0.0
        %1408 = vmatpush1.msra.mxu0 0.0
        %1409 = vmatprep.subr.mxu0 0.0
        %1410 = vmatpush1.msra.mxu0 0.0
        %1411 = vmatprep.subr.mxu0 0.0
        %1412 = vmatpush1.msra.mxu0 0.0
        %1413 = vmatprep.subr.mxu0 0.0
        %1414 = vmatpush1.msra.mxu0 0.0
        %1415 = vmatprep.subr.mxu0 0.0
        %1416 = vmatpush1.msra.mxu0 0.0
        %1417 = vmatprep.subr.mxu0 0.0
        %1418 = vmatpush1.msra.mxu0 0.0
        %1419 = vmatprep.subr.mxu0 0.0
        %1420 = vmatpush1.msra.mxu0 0.0
        %1421 = vmatprep.subr.mxu0 0.0
        %1422 = vmatpush1.msra.mxu0 0.0
        %1423 = vmatprep.subr.mxu0 0.0
        %1424 = vmatpush1.msra.mxu0 0.0
        %1425 = vmatprep.mubr.f32.mxu0 0.0
        %1426 = vmatmul.mubr.f32.gmra.mrb[0].mxu0 %v1359
        %v1427 = vpop.f32.mrb[0].mxu0
        %v1428 = vadd.f32 0.0, %v1427
        %v1429 = vpop.f32.mrb[0].mxu0
        %v1430 = vadd.f32 0.0, %v1429
        %1431 = vdwg.mxu0
        %v1433 = vsel %vm871, %v1353, 0
        %1435 = vmatprep.subr.mxu0 %v1355
        %1436 = vmatpush1.msra.mxu0 %v1354
        %1437 = vmatprep.subr.mxu0 %v1357
        %1438 = vmatpush1.msra.mxu0 %v1356
        %1439 = vmatprep.subr.mxu0 0.0
        %1440 = vmatpush1.msra.mxu0 0.0
        %1441 = vmatprep.subr.mxu0 0.0
        %1442 = vmatpush1.msra.mxu0 0.0
        %1443 = vmatprep.subr.mxu0 0.0
        %1444 = vmatpush1.msra.mxu0 0.0
        %1445 = vmatprep.subr.mxu0 0.0
        %1446 = vmatpush1.msra.mxu0 0.0
        %1447 = vmatprep.subr.mxu0 0.0
        %1448 = vmatpush1.msra.mxu0 0.0
        %1449 = vmatprep.subr.mxu0 0.0
        %1450 = vmatpush1.msra.mxu0 0.0
        %1451 = vmatprep.subr.mxu0 0.0
        %1452 = vmatpush1.msra.mxu0 0.0
        %1453 = vmatprep.subr.mxu0 0.0
        %1454 = vmatpush1.msra.mxu0 0.0
        %1455 = vmatprep.subr.mxu0 0.0
        %1456 = vmatpush1.msra.mxu0 0.0
        %1457 = vmatprep.subr.mxu0 0.0
        %1458 = vmatpush1.msra.mxu0 0.0
        %1459 = vmatprep.subr.mxu0 0.0
        %1460 = vmatpush1.msra.mxu0 0.0
        %1461 = vmatprep.subr.mxu0 0.0
        %1462 = vmatpush1.msra.mxu0 0.0
        %1463 = vmatprep.subr.mxu0 0.0
        %1464 = vmatpush1.msra.mxu0 0.0
        %1465 = vmatprep.subr.mxu0 0.0
        %1466 = vmatpush1.msra.mxu0 0.0
        %1467 = vmatprep.subr.mxu0 0.0
        %1468 = vmatpush1.msra.mxu0 0.0
        %1469 = vmatprep.subr.mxu0 0.0
        %1470 = vmatpush1.msra.mxu0 0.0
        %1471 = vmatprep.subr.mxu0 0.0
        %1472 = vmatpush1.msra.mxu0 0.0
        %1473 = vmatprep.subr.mxu0 0.0
        %1474 = vmatpush1.msra.mxu0 0.0
        %1475 = vmatprep.subr.mxu0 0.0
        %1476 = vmatpush1.msra.mxu0 0.0
        %1477 = vmatprep.subr.mxu0 0.0
        %1478 = vmatpush1.msra.mxu0 0.0
        %1479 = vmatprep.subr.mxu0 0.0
        %1480 = vmatpush1.msra.mxu0 0.0
        %1481 = vmatprep.subr.mxu0 0.0
        %1482 = vmatpush1.msra.mxu0 0.0
        %1483 = vmatprep.subr.mxu0 0.0
        %1484 = vmatpush1.msra.mxu0 0.0
        %1485 = vmatprep.subr.mxu0 0.0
        %1486 = vmatpush1.msra.mxu0 0.0
        %1487 = vmatprep.subr.mxu0 0.0
        %1488 = vmatpush1.msra.mxu0 0.0
        %1489 = vmatprep.subr.mxu0 0.0
        %1490 = vmatpush1.msra.mxu0 0.0
        %1491 = vmatprep.subr.mxu0 0.0
        %1492 = vmatpush1.msra.mxu0 0.0
        %1493 = vmatprep.subr.mxu0 0.0
        %1494 = vmatpush1.msra.mxu0 0.0
        %1495 = vmatprep.subr.mxu0 0.0
        %1496 = vmatpush1.msra.mxu0 0.0
        %1497 = vmatprep.subr.mxu0 0.0
        %1498 = vmatpush1.msra.mxu0 0.0
        %1499 = vmatprep.mubr.f32.mxu0 0.0
        %1500 = vmatmul.mubr.f32.gmra.mrb[0].mxu0 %v1433
        %v1501 = vpop.f32.mrb[0].mxu0
        %v1502 = vadd.f32 0.0, %v1501
        %v1503 = vpop.f32.mrb[0].mxu0
        %v1504 = vadd.f32 0.0, %v1503
        %1505 = vdwg.mxu0
        %v1506 = vlaneseq
        %v1507 = vshrl.u32 %v1506, 7
        %v1508 = vsub.s32 0, %v1507
        %v1509 = vrot.slane %v1428, %v1508
        %v1510 = vlaneseq
        %v1511 = vshrl.u32 %v1510, 7
        %v1512 = vsub.s32 0, %v1511
        %v1513 = vrot.slane %v1430, %v1512
        %v1514 = vmul.f32 %v867, %v1509
        %v1515 = vmul.f32 %v868, %v1513
        %v1516 = vmul.f32 %v869, %v1509
        %v1517 = vmul.f32 %v870, %v1513
        %v1518 = vlaneseq
        %v1519 = vshrl.u32 %v1518, 7
        %v1520 = vsub.s32 0, %v1519
        %v1521 = vrot.slane %v1502, %v1520
        %v1522 = vlaneseq
        %v1523 = vshrl.u32 %v1522, 7
        %v1524 = vsub.s32 0, %v1523
        %v1525 = vrot.slane %v1504, %v1524
        %v1526 = vadd.f32 %v1514, %v1521
        %v1527 = vadd.f32 %v1515, %v1525
        %v1528 = vadd.f32 %v1516, %v1521
        %v1529 = vadd.f32 %v1517, %v1525
        %vm1530 = vcmp.gt.f32.partialorder %v1526, 0.0
        %vm1531 = vcmp.gt.f32.partialorder %v1527, 0.0
        %vm1532 = vcmp.gt.f32.partialorder %v1528, 0.0
        %vm1533 = vcmp.gt.f32.partialorder %v1529, 0.0
        %v1534 = vmin.f32 %v1526, 0.0
        %v1535 = vmin.f32 %v1527, 0.0
        %v1536 = vmin.f32 %v1528, 0.0
        %v1537 = vmin.f32 %v1529, 0.0
        %v1538 = vmul.f32 %v1534, 1.442695
        %v1539 = vpow.pop %v1538
        %v1540 = vmul.f32 %v1535, 1.442695
        %v1541 = vpow.pop %v1540
        %v1542 = vmul.f32 %v1536, 1.442695
        %v1543 = vpow.pop %v1542
        %v1544 = vmul.f32 %v1537, 1.442695
        %v1545 = vpow.pop %v1544
        %v1546 = vsub.f32 %v1539, 1.0
        %v1547 = vsub.f32 %v1541, 1.0
        %v1548 = vsub.f32 %v1543, 1.0
        %v1549 = vsub.f32 %v1545, 1.0
        %v1550 = vsel %vm1530, %v1526, %v1546
        %v1551 = vsel %vm1531, %v1527, %v1547
        %v1552 = vsel %vm1532, %v1528, %v1548
        %v1553 = vsel %vm1533, %v1529, %v1549
        %vm1554 = vcmask 1040384
        %vm1555 = vmand %vm1554, %vm501
        %vm1556 = vcmask 1044484
        %vm1557 = vsmask.f32 4352
        %vm1558 = vmand %vm1556, %vm1557
        %vm1559 = vmor %vm1558, %vm1555
        %v1560 = vld [vmem:[#allocation3] sm:$0x11]
        %v1561 = vsel %vm1559, 0, %v1560
        %1562 = vst [vmem:[#allocation3] sm:$0x11] %v1561
        %vm1563 = vmand %vm1554, %vm506
        %vm1564 = vsmask.f32 7954
        %vm1565 = vmand %vm1556, %vm1564
        %vm1566 = vmor %vm1565, %vm1563
        %v1567 = vld [vmem:[#allocation3 + $0x10] sm:$0x11]
        %v1568 = vsel %vm1566, 0, %v1567
        %1569 = vst [vmem:[#allocation3 + $0x10] sm:$0x11] %v1568
        %v1570 = vpack.c.bf16 %v1552, %v1550
        %v1571 = vpack.c.bf16 %v1553, %v1551
        %v1574 = vunpack.c.l.b16 %v1570
        %v1575 = vunpack.c.l.b16 %v1571
        %v1576 = vunpack.c.h.b16 %v1570
        %v1577 = vunpack.c.h.b16 %v1571
        %v1578 = vpack.c.b16 %v1575, %v1574
        %v1579 = vpack.c.b16 %v1577, %v1576
        %v1581 = vshrl.u32 %v1578, 16
        %v1583 = vrot.slane %v1581, 7
        %v1584 = vshll.u32 %v1578, 16
        %v1586 = vor.u32 %v1583, %v1584
        %v1587 = vrot.slane %v1583, 4
        %v1589 = vshrl.u32 %v1579, 16
        %v1591 = vrot.slane %v1589, 7
        %v1592 = vshll.u32 %v1579, 16
        %v1594 = vor.u32 %v1591, %v1592
        %v1595 = vsel %vm520, %v1587, %v1594
        %v1596 = vrot.slane %v1591, 4
        %vm1600 = vcmask 1043456
        %vm1601 = vmand %vm1600, %vm506
        %vm1602 = vcmask 1047556
        %vm1603 = vmand %vm1602, %vm1564
        %vm1604 = vmor %vm1603, %vm1601
        %v1605 = vld [vmem:[#allocation3] sm:$0xff]
        %v1606 = vsel %vm1604, %v1586, %v1605
        %1607 = vst [vmem:[#allocation3] sm:$0xff] %v1606
        %1608 = vst [vmem:[#allocation3 + $0x8] sm:$0xff] %v1595
        %v1609 = vld [vmem:[#allocation3 + $0x10] sm:$0x11]
        %v1610 = vsel %vm1559, %v1596, %v1609
        %1611 = vst [vmem:[#allocation3 + $0x10] sm:$0x11] %v1610
        %v1612 = vld [vmem:[#allocation3] sm:$0xff]
        %v1613 = vld [vmem:[#allocation3 + $0x8] sm:$0xff]
        %v1614 = vld [vmem:[#allocation12] sm:$0xff]
        %v1615 = vld [vmem:[#allocation12 + $0x8] sm:$0xff]
        %v1616 = vld [vmem:[#allocation12 + $0x10] sm:$0xff]
        %v1617 = vld [vmem:[#allocation12 + $0x18] sm:$0xff]
        %v1618 = vld [vmem:[#allocation12 + $0x20] sm:$0xff]
        %v1619 = vld [vmem:[#allocation12 + $0x28] sm:$0xff]
        %v1620 = vld [vmem:[#allocation12 + $0x30] sm:$0xff]
        %v1621 = vld [vmem:[#allocation12 + $0x38] sm:$0xff]
        %v1622 = vld [vmem:[#allocation12 + $0x40] sm:$0xff]
        %v1623 = vld [vmem:[#allocation12 + $0x48] sm:$0xff]
        %v1624 = vld [vmem:[#allocation12 + $0x50] sm:$0xff]
        %v1625 = vld [vmem:[#allocation12 + $0x58] sm:$0xff]
        %v1626 = vld [vmem:[#allocation12 + $0x60] sm:$0xff]
        %v1627 = vld [vmem:[#allocation12 + $0x68] sm:$0xff]
        %v1628 = vld [vmem:[#allocation12 + $0x70] sm:$0xff]
        %v1629 = vld [vmem:[#allocation12 + $0x78] sm:$0xff]
        %v1630 = vld [vmem:[#allocation12 + $0x80] sm:$0xff]
        %v1631 = vld [vmem:[#allocation12 + $0x88] sm:$0xff]
        %v1632 = vld [vmem:[#allocation12 + $0x90] sm:$0xff]
        %v1633 = vld [vmem:[#allocation12 + $0x98] sm:$0xff]
        %v1634 = vld [vmem:[#allocation12 + $0xa0] sm:$0xff]
        %v1635 = vld [vmem:[#allocation12 + $0xa8] sm:$0xff]
        %v1636 = vld [vmem:[#allocation12 + $0xb0] sm:$0xff]
        %v1637 = vld [vmem:[#allocation12 + $0xb8] sm:$0xff]
        %v1638 = vld [vmem:[#allocation12 + $0xc0] sm:$0xff]
        %v1639 = vld [vmem:[#allocation12 + $0xc8] sm:$0xff]
        %v1640 = vld [vmem:[#allocation12 + $0xd0] sm:$0xff]
        %v1641 = vld [vmem:[#allocation12 + $0xd8] sm:$0xff]
        %v1642 = vld [vmem:[#allocation12 + $0xe0] sm:$0xff]
        %v1643 = vld [vmem:[#allocation12 + $0xe8] sm:$0xff]
        %v1644 = vld [vmem:[#allocation12 + $0xf0] sm:$0xff]
        %v1645 = vld [vmem:[#allocation12 + $0xf8] sm:$0xff]
        %v1646 = vld [vmem:[#allocation3 + $0x10] sm:$0x11]
        %s1647 = scalar_lea.vmem [#allocation12], 256
        %v1648 = vld [vmem:[%s1647] sm:$0xff]
        %v1649 = vld [vmem:[%s1647 + $0x8] sm:$0xff]
        %v1650 = vld [vmem:[%s1647 + $0x10] sm:$0xff]
        %v1651 = vld [vmem:[%s1647 + $0x18] sm:$0xff]
        %v1652 = vld [vmem:[%s1647 + $0x20] sm:$0xff]
        %v1653 = vld [vmem:[%s1647 + $0x28] sm:$0xff]
        %v1654 = vld [vmem:[%s1647 + $0x30] sm:$0xff]
        %v1655 = vld [vmem:[%s1647 + $0x38] sm:$0xff]
        %v1656 = vld [vmem:[%s1647 + $0x40] sm:$0xff]
        %v1657 = vld [vmem:[%s1647 + $0x48] sm:$0xff]
        %v1658 = vld [vmem:[%s1647 + $0x50] sm:$0xff]
        %v1659 = vld [vmem:[%s1647 + $0x58] sm:$0xff]
        %v1660 = vld [vmem:[%s1647 + $0x60] sm:$0xff]
        %v1661 = vld [vmem:[%s1647 + $0x68] sm:$0xff]
        %v1662 = vld [vmem:[%s1647 + $0x70] sm:$0xff]
        %v1663 = vld [vmem:[%s1647 + $0x78] sm:$0xff]
        %v1664 = vld [vmem:[%s1647 + $0x80] sm:$0xff]
        %v1665 = vld [vmem:[%s1647 + $0x88] sm:$0xff]
        %v1666 = vld [vmem:[%s1647 + $0x90] sm:$0xff]
        %v1667 = vld [vmem:[%s1647 + $0x98] sm:$0xff]
        %v1668 = vld [vmem:[%s1647 + $0xa0] sm:$0xff]
        %v1669 = vld [vmem:[%s1647 + $0xa8] sm:$0xff]
        %v1670 = vld [vmem:[%s1647 + $0xb0] sm:$0xff]
        %v1671 = vld [vmem:[%s1647 + $0xb8] sm:$0xff]
        %v1672 = vld [vmem:[%s1647 + $0xc0] sm:$0xff]
        %v1673 = vld [vmem:[%s1647 + $0xc8] sm:$0xff]
        %v1674 = vld [vmem:[%s1647 + $0xd0] sm:$0xff]
        %v1675 = vld [vmem:[%s1647 + $0xd8] sm:$0xff]
        %v1676 = vld [vmem:[%s1647 + $0xe0] sm:$0xff]
        %v1677 = vld [vmem:[%s1647 + $0xe8] sm:$0xff]
        %v1678 = vld [vmem:[%s1647 + $0xf0] sm:$0xff]
        %v1679 = vld [vmem:[%s1647 + $0xf8] sm:$0xff]
        %v1683 = vunpack.c.l.b16 %v1612
        %v1684 = vunpack.c.h.b16 %v1612
        %v1685 = vunpack.c.l.b16 %v1613
        %v1686 = vunpack.c.h.b16 %v1613
        %v1687 = vunpack.c.l.b16 %v1646
        %v1688 = vunpack.c.h.b16 %v1646
        %v1689 = vpack.c.b16 %v1685, %v1683
        %v1690 = vpack.c.b16 %v1686, %v1684
        %v1691 = vpack.c.b16 %v1687, %v1687
        %v1692 = vpack.c.b16 %v1688, %v1688
        %v1694 = vshrl.u32 %v1689, 16
        %v1696 = vshll.u32 %v1689, 16
        %v1698 = vrot.slane %v1696, 1
        %v1699 = vor.u32 %v1694, %v1698
        %v1701 = vshll.u32 %v1691, 16
        %v1703 = vrot.slane %v1701, 1
        %v1704 = vsel %vm579, %v1699, %v1703
        %v1706 = vshrl.u32 %v1690, 16
        %v1708 = vshll.u32 %v1690, 16
        %v1710 = vrot.slane %v1708, 1
        %v1711 = vor.u32 %v1706, %v1710
        %v1713 = vshll.u32 %v1692, 16
        %v1715 = vrot.slane %v1713, 1
        %v1716 = vsel %vm579, %v1711, %v1715
        %v1751 = vunpack.c.l.b16 %v1648
        %v1752 = vunpack.c.h.b16 %v1648
        %v1753 = vunpack.c.l.b16 %v1649
        %v1754 = vunpack.c.h.b16 %v1649
        %v1755 = vunpack.c.l.b16 %v1650
        %v1756 = vunpack.c.h.b16 %v1650
        %v1757 = vunpack.c.l.b16 %v1651
        %v1758 = vunpack.c.h.b16 %v1651
        %v1759 = vunpack.c.l.b16 %v1652
        %v1760 = vunpack.c.h.b16 %v1652
        %v1761 = vunpack.c.l.b16 %v1653
        %v1762 = vunpack.c.h.b16 %v1653
        %v1763 = vunpack.c.l.b16 %v1654
        %v1764 = vunpack.c.h.b16 %v1654
        %v1765 = vunpack.c.l.b16 %v1655
        %v1766 = vunpack.c.h.b16 %v1655
        %v1767 = vunpack.c.l.b16 %v1656
        %v1768 = vunpack.c.h.b16 %v1656
        %v1769 = vunpack.c.l.b16 %v1657
        %v1770 = vunpack.c.h.b16 %v1657
        %v1771 = vunpack.c.l.b16 %v1658
        %v1772 = vunpack.c.h.b16 %v1658
        %v1773 = vunpack.c.l.b16 %v1659
        %v1774 = vunpack.c.h.b16 %v1659
        %v1775 = vunpack.c.l.b16 %v1660
        %v1776 = vunpack.c.h.b16 %v1660
        %v1777 = vunpack.c.l.b16 %v1661
        %v1778 = vunpack.c.h.b16 %v1661
        %v1779 = vunpack.c.l.b16 %v1662
        %v1780 = vunpack.c.h.b16 %v1662
        %v1781 = vunpack.c.l.b16 %v1663
        %v1782 = vunpack.c.h.b16 %v1663
        %v1783 = vunpack.c.l.b16 %v1664
        %v1784 = vunpack.c.h.b16 %v1664
        %v1785 = vunpack.c.l.b16 %v1665
        %v1786 = vunpack.c.h.b16 %v1665
        %v1787 = vunpack.c.l.b16 %v1666
        %v1788 = vunpack.c.h.b16 %v1666
        %v1789 = vunpack.c.l.b16 %v1667
        %v1790 = vunpack.c.h.b16 %v1667
        %v1791 = vunpack.c.l.b16 %v1668
        %v1792 = vunpack.c.h.b16 %v1668
        %v1793 = vunpack.c.l.b16 %v1669
        %v1794 = vunpack.c.h.b16 %v1669
        %v1795 = vunpack.c.l.b16 %v1670
        %v1796 = vunpack.c.h.b16 %v1670
        %v1797 = vunpack.c.l.b16 %v1671
        %v1798 = vunpack.c.h.b16 %v1671
        %v1799 = vunpack.c.l.b16 %v1672
        %v1800 = vunpack.c.h.b16 %v1672
        %v1801 = vunpack.c.l.b16 %v1673
        %v1802 = vunpack.c.h.b16 %v1673
        %v1803 = vunpack.c.l.b16 %v1674
        %v1804 = vunpack.c.h.b16 %v1674
        %v1805 = vunpack.c.l.b16 %v1675
        %v1806 = vunpack.c.h.b16 %v1675
        %v1807 = vunpack.c.l.b16 %v1676
        %v1808 = vunpack.c.h.b16 %v1676
        %v1809 = vunpack.c.l.b16 %v1677
        %v1810 = vunpack.c.h.b16 %v1677
        %v1811 = vunpack.c.l.b16 %v1678
        %v1812 = vunpack.c.h.b16 %v1678
        %v1813 = vunpack.c.l.b16 %v1679
        %v1814 = vunpack.c.h.b16 %v1679
        %v1815 = vpack.c.b16 %v1753, %v1751
        %v1816 = vpack.c.b16 %v1754, %v1752
        %v1817 = vpack.c.b16 %v1757, %v1755
        %v1818 = vpack.c.b16 %v1758, %v1756
        %v1819 = vpack.c.b16 %v1761, %v1759
        %v1820 = vpack.c.b16 %v1762, %v1760
        %v1821 = vpack.c.b16 %v1765, %v1763
        %v1822 = vpack.c.b16 %v1766, %v1764
        %v1823 = vpack.c.b16 %v1769, %v1767
        %v1824 = vpack.c.b16 %v1770, %v1768
        %v1825 = vpack.c.b16 %v1773, %v1771
        %v1826 = vpack.c.b16 %v1774, %v1772
        %v1827 = vpack.c.b16 %v1777, %v1775
        %v1828 = vpack.c.b16 %v1778, %v1776
        %v1829 = vpack.c.b16 %v1781, %v1779
        %v1830 = vpack.c.b16 %v1782, %v1780
        %v1831 = vpack.c.b16 %v1785, %v1783
        %v1832 = vpack.c.b16 %v1786, %v1784
        %v1833 = vpack.c.b16 %v1789, %v1787
        %v1834 = vpack.c.b16 %v1790, %v1788
        %v1835 = vpack.c.b16 %v1793, %v1791
        %v1836 = vpack.c.b16 %v1794, %v1792
        %v1837 = vpack.c.b16 %v1797, %v1795
        %v1838 = vpack.c.b16 %v1798, %v1796
        %v1839 = vpack.c.b16 %v1801, %v1799
        %v1840 = vpack.c.b16 %v1802, %v1800
        %v1841 = vpack.c.b16 %v1805, %v1803
        %v1842 = vpack.c.b16 %v1806, %v1804
        %v1843 = vpack.c.b16 %v1809, %v1807
        %v1844 = vpack.c.b16 %v1810, %v1808
        %v1845 = vpack.c.b16 %v1813, %v1811
        %v1846 = vpack.c.b16 %v1814, %v1812
        %1879 = vmatprep.subr.bf16.mxu0 %v1816
        %1880 = vmatpush1.bf16.msra.mxu0 %v1815
        %1881 = vmatprep.subr.bf16.mxu0 %v1818
        %1882 = vmatpush1.bf16.msra.mxu0 %v1817
        %1883 = vmatprep.subr.bf16.mxu0 %v1820
        %1884 = vmatpush1.bf16.msra.mxu0 %v1819
        %1885 = vmatprep.subr.bf16.mxu0 %v1822
        %1886 = vmatpush1.bf16.msra.mxu0 %v1821
        %1887 = vmatprep.subr.bf16.mxu0 %v1824
        %1888 = vmatpush1.bf16.msra.mxu0 %v1823
        %1889 = vmatprep.subr.bf16.mxu0 %v1826
        %1890 = vmatpush1.bf16.msra.mxu0 %v1825
        %1891 = vmatprep.subr.bf16.mxu0 %v1828
        %1892 = vmatpush1.bf16.msra.mxu0 %v1827
        %1893 = vmatprep.subr.bf16.mxu0 %v1830
        %1894 = vmatpush1.bf16.msra.mxu0 %v1829
        %1895 = vmatprep.subr.bf16.mxu0 %v1832
        %1896 = vmatpush1.bf16.msra.mxu0 %v1831
        %1897 = vmatprep.subr.bf16.mxu0 %v1834
        %1898 = vmatpush1.bf16.msra.mxu0 %v1833
        %1899 = vmatprep.subr.bf16.mxu0 %v1836
        %1900 = vmatpush1.bf16.msra.mxu0 %v1835
        %1901 = vmatprep.subr.bf16.mxu0 %v1838
        %1902 = vmatpush1.bf16.msra.mxu0 %v1837
        %1903 = vmatprep.subr.bf16.mxu0 %v1840
        %1904 = vmatpush1.bf16.msra.mxu0 %v1839
        %1905 = vmatprep.subr.bf16.mxu0 %v1842
        %1906 = vmatpush1.bf16.msra.mxu0 %v1841
        %1907 = vmatprep.subr.bf16.mxu0 %v1844
        %1908 = vmatpush1.bf16.msra.mxu0 %v1843
        %1909 = vmatprep.subr.bf16.mxu0 %v1846
        %1910 = vmatpush1.bf16.msra.mxu0 %v1845
        %1911 = vmatprep.mubr.bf16.mxu0 %v1716
        %1912 = vmatmul.mubr.bf16.gmra.mrb[0].mxu0 %v1704
        %v1913 = vpop.f32.mrb[0].mxu0
        %v1914 = vadd.f32 0.0, %v1913
        %v1915 = vpop.f32.mrb[0].mxu0
        %v1916 = vadd.f32 0.0, %v1915
        %v1917 = vpop.f32.mrb[0].mxu0
        %v1918 = vadd.f32 0.0, %v1917
        %v1919 = vpop.f32.mrb[0].mxu0
        %v1920 = vadd.f32 0.0, %v1919
        %1921 = vdwg.mxu0
        %v1956 = vunpack.c.l.b16 %v1614
        %v1957 = vunpack.c.h.b16 %v1614
        %v1958 = vunpack.c.l.b16 %v1615
        %v1959 = vunpack.c.h.b16 %v1615
        %v1960 = vunpack.c.l.b16 %v1616
        %v1961 = vunpack.c.h.b16 %v1616
        %v1962 = vunpack.c.l.b16 %v1617
        %v1963 = vunpack.c.h.b16 %v1617
        %v1964 = vunpack.c.l.b16 %v1618
        %v1965 = vunpack.c.h.b16 %v1618
        %v1966 = vunpack.c.l.b16 %v1619
        %v1967 = vunpack.c.h.b16 %v1619
        %v1968 = vunpack.c.l.b16 %v1620
        %v1969 = vunpack.c.h.b16 %v1620
        %v1970 = vunpack.c.l.b16 %v1621
        %v1971 = vunpack.c.h.b16 %v1621
        %v1972 = vunpack.c.l.b16 %v1622
        %v1973 = vunpack.c.h.b16 %v1622
        %v1974 = vunpack.c.l.b16 %v1623
        %v1975 = vunpack.c.h.b16 %v1623
        %v1976 = vunpack.c.l.b16 %v1624
        %v1977 = vunpack.c.h.b16 %v1624
        %v1978 = vunpack.c.l.b16 %v1625
        %v1979 = vunpack.c.h.b16 %v1625
        %v1980 = vunpack.c.l.b16 %v1626
        %v1981 = vunpack.c.h.b16 %v1626
        %v1982 = vunpack.c.l.b16 %v1627
        %v1983 = vunpack.c.h.b16 %v1627
        %v1984 = vunpack.c.l.b16 %v1628
        %v1985 = vunpack.c.h.b16 %v1628
        %v1986 = vunpack.c.l.b16 %v1629
        %v1987 = vunpack.c.h.b16 %v1629
        %v1988 = vunpack.c.l.b16 %v1630
        %v1989 = vunpack.c.h.b16 %v1630
        %v1990 = vunpack.c.l.b16 %v1631
        %v1991 = vunpack.c.h.b16 %v1631
        %v1992 = vunpack.c.l.b16 %v1632
        %v1993 = vunpack.c.h.b16 %v1632
        %v1994 = vunpack.c.l.b16 %v1633
        %v1995 = vunpack.c.h.b16 %v1633
        %v1996 = vunpack.c.l.b16 %v1634
        %v1997 = vunpack.c.h.b16 %v1634
        %v1998 = vunpack.c.l.b16 %v1635
        %v1999 = vunpack.c.h.b16 %v1635
        %v2000 = vunpack.c.l.b16 %v1636
        %v2001 = vunpack.c.h.b16 %v1636
        %v2002 = vunpack.c.l.b16 %v1637
        %v2003 = vunpack.c.h.b16 %v1637
        %v2004 = vunpack.c.l.b16 %v1638
        %v2005 = vunpack.c.h.b16 %v1638
        %v2006 = vunpack.c.l.b16 %v1639
        %v2007 = vunpack.c.h.b16 %v1639
        %v2008 = vunpack.c.l.b16 %v1640
        %v2009 = vunpack.c.h.b16 %v1640
        %v2010 = vunpack.c.l.b16 %v1641
        %v2011 = vunpack.c.h.b16 %v1641
        %v2012 = vunpack.c.l.b16 %v1642
        %v2013 = vunpack.c.h.b16 %v1642
        %v2014 = vunpack.c.l.b16 %v1643
        %v2015 = vunpack.c.h.b16 %v1643
        %v2016 = vunpack.c.l.b16 %v1644
        %v2017 = vunpack.c.h.b16 %v1644
        %v2018 = vunpack.c.l.b16 %v1645
        %v2019 = vunpack.c.h.b16 %v1645
        %v2020 = vpack.c.b16 %v1958, %v1956
        %v2021 = vpack.c.b16 %v1959, %v1957
        %v2022 = vpack.c.b16 %v1962, %v1960
        %v2023 = vpack.c.b16 %v1963, %v1961
        %v2024 = vpack.c.b16 %v1966, %v1964
        %v2025 = vpack.c.b16 %v1967, %v1965
        %v2026 = vpack.c.b16 %v1970, %v1968
        %v2027 = vpack.c.b16 %v1971, %v1969
        %v2028 = vpack.c.b16 %v1974, %v1972
        %v2029 = vpack.c.b16 %v1975, %v1973
        %v2030 = vpack.c.b16 %v1978, %v1976
        %v2031 = vpack.c.b16 %v1979, %v1977
        %v2032 = vpack.c.b16 %v1982, %v1980
        %v2033 = vpack.c.b16 %v1983, %v1981
        %v2034 = vpack.c.b16 %v1986, %v1984
        %v2035 = vpack.c.b16 %v1987, %v1985
        %v2036 = vpack.c.b16 %v1990, %v1988
        %v2037 = vpack.c.b16 %v1991, %v1989
        %v2038 = vpack.c.b16 %v1994, %v1992
        %v2039 = vpack.c.b16 %v1995, %v1993
        %v2040 = vpack.c.b16 %v1998, %v1996
        %v2041 = vpack.c.b16 %v1999, %v1997
        %v2042 = vpack.c.b16 %v2002, %v2000
        %v2043 = vpack.c.b16 %v2003, %v2001
        %v2044 = vpack.c.b16 %v2006, %v2004
        %v2045 = vpack.c.b16 %v2007, %v2005
        %v2046 = vpack.c.b16 %v2010, %v2008
        %v2047 = vpack.c.b16 %v2011, %v2009
        %v2048 = vpack.c.b16 %v2014, %v2012
        %v2049 = vpack.c.b16 %v2015, %v2013
        %v2050 = vpack.c.b16 %v2018, %v2016
        %v2051 = vpack.c.b16 %v2019, %v2017
        %2084 = vmatprep.subr.bf16.mxu0 %v2021
        %2085 = vmatpush1.bf16.msra.mxu0 %v2020
        %2086 = vmatprep.subr.bf16.mxu0 %v2023
        %2087 = vmatpush1.bf16.msra.mxu0 %v2022
        %2088 = vmatprep.subr.bf16.mxu0 %v2025
        %2089 = vmatpush1.bf16.msra.mxu0 %v2024
        %2090 = vmatprep.subr.bf16.mxu0 %v2027
        %2091 = vmatpush1.bf16.msra.mxu0 %v2026
        %2092 = vmatprep.subr.bf16.mxu0 %v2029
        %2093 = vmatpush1.bf16.msra.mxu0 %v2028
        %2094 = vmatprep.subr.bf16.mxu0 %v2031
        %2095 = vmatpush1.bf16.msra.mxu0 %v2030
        %2096 = vmatprep.subr.bf16.mxu0 %v2033
        %2097 = vmatpush1.bf16.msra.mxu0 %v2032
        %2098 = vmatprep.subr.bf16.mxu0 %v2035
        %2099 = vmatpush1.bf16.msra.mxu0 %v2034
        %2100 = vmatprep.subr.bf16.mxu0 %v2037
        %2101 = vmatpush1.bf16.msra.mxu0 %v2036
        %2102 = vmatprep.subr.bf16.mxu0 %v2039
        %2103 = vmatpush1.bf16.msra.mxu0 %v2038
        %2104 = vmatprep.subr.bf16.mxu0 %v2041
        %2105 = vmatpush1.bf16.msra.mxu0 %v2040
        %2106 = vmatprep.subr.bf16.mxu0 %v2043
        %2107 = vmatpush1.bf16.msra.mxu0 %v2042
        %2108 = vmatprep.subr.bf16.mxu0 %v2045
        %2109 = vmatpush1.bf16.msra.mxu0 %v2044
        %2110 = vmatprep.subr.bf16.mxu0 %v2047
        %2111 = vmatpush1.bf16.msra.mxu0 %v2046
        %2112 = vmatprep.subr.bf16.mxu0 %v2049
        %2113 = vmatpush1.bf16.msra.mxu0 %v2048
        %2114 = vmatprep.subr.bf16.mxu0 %v2051
        %2115 = vmatpush1.bf16.msra.mxu0 %v2050
        %2116 = vmatprep.mubr.bf16.mxu0 %v1690
        %2117 = vmatmul.mubr.bf16.gmra.mrb[0].mxu0 %v1689
        %v2118 = vpop.f32.mrb[0].mxu0
        %v2119 = vadd.f32 %v1914, %v2118
        %v2120 = vpop.f32.mrb[0].mxu0
        %v2121 = vadd.f32 %v1916, %v2120
        %v2122 = vpop.f32.mrb[0].mxu0
        %v2123 = vadd.f32 %v1918, %v2122
        %v2124 = vpop.f32.mrb[0].mxu0
        %v2125 = vadd.f32 %v1920, %v2124
        %2126 = vdwg.mxu0
        %v2127 = vld [vmem:[#allocation3] sm:$0xee]
        %s2128 = scalar_lea.vmem [#allocation12], 512
        %v2129 = vld [vmem:[%s2128] sm:$0xff]
        %v2130 = vld [vmem:[%s2128 + $0x8] sm:$0xff]
        %v2131 = vld [vmem:[%s2128 + $0x10] sm:$0xff]
        %v2132 = vld [vmem:[%s2128 + $0x18] sm:$0xff]
        %v2133 = vld [vmem:[%s2128 + $0x20] sm:$0xff]
        %v2134 = vld [vmem:[%s2128 + $0x28] sm:$0xff]
        %v2135 = vld [vmem:[%s2128 + $0x30] sm:$0xff]
        %v2136 = vld [vmem:[%s2128 + $0x38] sm:$0xff]
        %v2137 = vld [vmem:[%s2128 + $0x40] sm:$0xff]
        %v2138 = vld [vmem:[%s2128 + $0x48] sm:$0xff]
        %v2139 = vld [vmem:[%s2128 + $0x50] sm:$0xff]
        %v2140 = vld [vmem:[%s2128 + $0x58] sm:$0xff]
        %v2141 = vld [vmem:[%s2128 + $0x60] sm:$0xff]
        %v2142 = vld [vmem:[%s2128 + $0x68] sm:$0xff]
        %v2143 = vld [vmem:[%s2128 + $0x70] sm:$0xff]
        %v2144 = vld [vmem:[%s2128 + $0x78] sm:$0xff]
        %v2145 = vld [vmem:[%s2128 + $0x80] sm:$0xff]
        %v2146 = vld [vmem:[%s2128 + $0x88] sm:$0xff]
        %v2147 = vld [vmem:[%s2128 + $0x90] sm:$0xff]
        %v2148 = vld [vmem:[%s2128 + $0x98] sm:$0xff]
        %v2149 = vld [vmem:[%s2128 + $0xa0] sm:$0xff]
        %v2150 = vld [vmem:[%s2128 + $0xa8] sm:$0xff]
        %v2151 = vld [vmem:[%s2128 + $0xb0] sm:$0xff]
        %v2152 = vld [vmem:[%s2128 + $0xb8] sm:$0xff]
        %v2153 = vld [vmem:[%s2128 + $0xc0] sm:$0xff]
        %v2154 = vld [vmem:[%s2128 + $0xc8] sm:$0xff]
        %v2155 = vld [vmem:[%s2128 + $0xd0] sm:$0xff]
        %v2156 = vld [vmem:[%s2128 + $0xd8] sm:$0xff]
        %v2157 = vld [vmem:[%s2128 + $0xe0] sm:$0xff]
        %v2158 = vld [vmem:[%s2128 + $0xe8] sm:$0xff]
        %v2159 = vld [vmem:[%s2128 + $0xf0] sm:$0xff]
        %v2160 = vld [vmem:[%s2128 + $0xf8] sm:$0xff]
        %v2162 = vunpack.c.l.b16 %v2127
        %v2163 = vunpack.c.h.b16 %v2127
        %v2164 = vpack.c.b16 %v1685, %v2162
        %v2165 = vpack.c.b16 %v1686, %v2163
        %v2166 = vrot.slane %v2164, 1
        %v2167 = vrot.slane %v1691, 1
        %v2168 = vsel %vm777, %v2166, %v2167
        %v2169 = vrot.slane %v2165, 1
        %v2170 = vrot.slane %v1692, 1
        %v2171 = vsel %vm777, %v2169, %v2170
        %v2206 = vunpack.c.l.b16 %v2129
        %v2207 = vunpack.c.h.b16 %v2129
        %v2208 = vunpack.c.l.b16 %v2130
        %v2209 = vunpack.c.h.b16 %v2130
        %v2210 = vunpack.c.l.b16 %v2131
        %v2211 = vunpack.c.h.b16 %v2131
        %v2212 = vunpack.c.l.b16 %v2132
        %v2213 = vunpack.c.h.b16 %v2132
        %v2214 = vunpack.c.l.b16 %v2133
        %v2215 = vunpack.c.h.b16 %v2133
        %v2216 = vunpack.c.l.b16 %v2134
        %v2217 = vunpack.c.h.b16 %v2134
        %v2218 = vunpack.c.l.b16 %v2135
        %v2219 = vunpack.c.h.b16 %v2135
        %v2220 = vunpack.c.l.b16 %v2136
        %v2221 = vunpack.c.h.b16 %v2136
        %v2222 = vunpack.c.l.b16 %v2137
        %v2223 = vunpack.c.h.b16 %v2137
        %v2224 = vunpack.c.l.b16 %v2138
        %v2225 = vunpack.c.h.b16 %v2138
        %v2226 = vunpack.c.l.b16 %v2139
        %v2227 = vunpack.c.h.b16 %v2139
        %v2228 = vunpack.c.l.b16 %v2140
        %v2229 = vunpack.c.h.b16 %v2140
        %v2230 = vunpack.c.l.b16 %v2141
        %v2231 = vunpack.c.h.b16 %v2141
        %v2232 = vunpack.c.l.b16 %v2142
        %v2233 = vunpack.c.h.b16 %v2142
        %v2234 = vunpack.c.l.b16 %v2143
        %v2235 = vunpack.c.h.b16 %v2143
        %v2236 = vunpack.c.l.b16 %v2144
        %v2237 = vunpack.c.h.b16 %v2144
        %v2238 = vunpack.c.l.b16 %v2145
        %v2239 = vunpack.c.h.b16 %v2145
        %v2240 = vunpack.c.l.b16 %v2146
        %v2241 = vunpack.c.h.b16 %v2146
        %v2242 = vunpack.c.l.b16 %v2147
        %v2243 = vunpack.c.h.b16 %v2147
        %v2244 = vunpack.c.l.b16 %v2148
        %v2245 = vunpack.c.h.b16 %v2148
        %v2246 = vunpack.c.l.b16 %v2149
        %v2247 = vunpack.c.h.b16 %v2149
        %v2248 = vunpack.c.l.b16 %v2150
        %v2249 = vunpack.c.h.b16 %v2150
        %v2250 = vunpack.c.l.b16 %v2151
        %v2251 = vunpack.c.h.b16 %v2151
        %v2252 = vunpack.c.l.b16 %v2152
        %v2253 = vunpack.c.h.b16 %v2152
        %v2254 = vunpack.c.l.b16 %v2153
        %v2255 = vunpack.c.h.b16 %v2153
        %v2256 = vunpack.c.l.b16 %v2154
        %v2257 = vunpack.c.h.b16 %v2154
        %v2258 = vunpack.c.l.b16 %v2155
        %v2259 = vunpack.c.h.b16 %v2155
        %v2260 = vunpack.c.l.b16 %v2156
        %v2261 = vunpack.c.h.b16 %v2156
        %v2262 = vunpack.c.l.b16 %v2157
        %v2263 = vunpack.c.h.b16 %v2157
        %v2264 = vunpack.c.l.b16 %v2158
        %v2265 = vunpack.c.h.b16 %v2158
        %v2266 = vunpack.c.l.b16 %v2159
        %v2267 = vunpack.c.h.b16 %v2159
        %v2268 = vunpack.c.l.b16 %v2160
        %v2269 = vunpack.c.h.b16 %v2160
        %v2270 = vpack.c.b16 %v2208, %v2206
        %v2271 = vpack.c.b16 %v2209, %v2207
        %v2272 = vpack.c.b16 %v2212, %v2210
        %v2273 = vpack.c.b16 %v2213, %v2211
        %v2274 = vpack.c.b16 %v2216, %v2214
        %v2275 = vpack.c.b16 %v2217, %v2215
        %v2276 = vpack.c.b16 %v2220, %v2218
        %v2277 = vpack.c.b16 %v2221, %v2219
        %v2278 = vpack.c.b16 %v2224, %v2222
        %v2279 = vpack.c.b16 %v2225, %v2223
        %v2280 = vpack.c.b16 %v2228, %v2226
        %v2281 = vpack.c.b16 %v2229, %v2227
        %v2282 = vpack.c.b16 %v2232, %v2230
        %v2283 = vpack.c.b16 %v2233, %v2231
        %v2284 = vpack.c.b16 %v2236, %v2234
        %v2285 = vpack.c.b16 %v2237, %v2235
        %v2286 = vpack.c.b16 %v2240, %v2238
        %v2287 = vpack.c.b16 %v2241, %v2239
        %v2288 = vpack.c.b16 %v2244, %v2242
        %v2289 = vpack.c.b16 %v2245, %v2243
        %v2290 = vpack.c.b16 %v2248, %v2246
        %v2291 = vpack.c.b16 %v2249, %v2247
        %v2292 = vpack.c.b16 %v2252, %v2250
        %v2293 = vpack.c.b16 %v2253, %v2251
        %v2294 = vpack.c.b16 %v2256, %v2254
        %v2295 = vpack.c.b16 %v2257, %v2255
        %v2296 = vpack.c.b16 %v2260, %v2258
        %v2297 = vpack.c.b16 %v2261, %v2259
        %v2298 = vpack.c.b16 %v2264, %v2262
        %v2299 = vpack.c.b16 %v2265, %v2263
        %v2300 = vpack.c.b16 %v2268, %v2266
        %v2301 = vpack.c.b16 %v2269, %v2267
        %2334 = vmatprep.subr.bf16.mxu0 %v2271
        %2335 = vmatpush1.bf16.msra.mxu0 %v2270
        %2336 = vmatprep.subr.bf16.mxu0 %v2273
        %2337 = vmatpush1.bf16.msra.mxu0 %v2272
        %2338 = vmatprep.subr.bf16.mxu0 %v2275
        %2339 = vmatpush1.bf16.msra.mxu0 %v2274
        %2340 = vmatprep.subr.bf16.mxu0 %v2277
        %2341 = vmatpush1.bf16.msra.mxu0 %v2276
        %2342 = vmatprep.subr.bf16.mxu0 %v2279
        %2343 = vmatpush1.bf16.msra.mxu0 %v2278
        %2344 = vmatprep.subr.bf16.mxu0 %v2281
        %2345 = vmatpush1.bf16.msra.mxu0 %v2280
        %2346 = vmatprep.subr.bf16.mxu0 %v2283
        %2347 = vmatpush1.bf16.msra.mxu0 %v2282
        %2348 = vmatprep.subr.bf16.mxu0 %v2285
        %2349 = vmatpush1.bf16.msra.mxu0 %v2284
        %2350 = vmatprep.subr.bf16.mxu0 %v2287
        %2351 = vmatpush1.bf16.msra.mxu0 %v2286
        %2352 = vmatprep.subr.bf16.mxu0 %v2289
        %2353 = vmatpush1.bf16.msra.mxu0 %v2288
        %2354 = vmatprep.subr.bf16.mxu0 %v2291
        %2355 = vmatpush1.bf16.msra.mxu0 %v2290
        %2356 = vmatprep.subr.bf16.mxu0 %v2293
        %2357 = vmatpush1.bf16.msra.mxu0 %v2292
        %2358 = vmatprep.subr.bf16.mxu0 %v2295
        %2359 = vmatpush1.bf16.msra.mxu0 %v2294
        %2360 = vmatprep.subr.bf16.mxu0 %v2297
        %2361 = vmatpush1.bf16.msra.mxu0 %v2296
        %2362 = vmatprep.subr.bf16.mxu0 %v2299
        %2363 = vmatpush1.bf16.msra.mxu0 %v2298
        %2364 = vmatprep.subr.bf16.mxu0 %v2301
        %2365 = vmatpush1.bf16.msra.mxu0 %v2300
        %2366 = vmatprep.mubr.bf16.mxu0 %v2171
        %2367 = vmatmul.mubr.bf16.gmra.mrb[0].mxu0 %v2168
        %v2368 = vpop.f32.mrb[0].mxu0
        %v2369 = vadd.f32 0.0, %v2368
        %v2370 = vpop.f32.mrb[0].mxu0
        %v2371 = vadd.f32 0.0, %v2370
        %v2372 = vpop.f32.mrb[0].mxu0
        %v2373 = vadd.f32 0.0, %v2372
        %v2374 = vpop.f32.mrb[0].mxu0
        %v2375 = vadd.f32 0.0, %v2374
        %2376 = vdwg.mxu0
        %v2377 = vadd.f32 %v2119, %v2369
        %v2378 = vadd.f32 %v2121, %v2371
        %v2379 = vadd.f32 %v2123, %v2373
        %v2380 = vadd.f32 %v2125, %v2375
        %2381 = vmatprep.subr.mxu0 %v2378
        %2382 = vmatpush1.msra.mxu0 %v2377
        %2383 = vmatprep.subr.mxu0 %v2380
        %2384 = vmatpush1.msra.mxu0 %v2379
        %2385 = vmatprep.subr.mxu0 0.0
        %2386 = vmatpush1.msra.mxu0 0.0
        %2387 = vmatprep.subr.mxu0 0.0
        %2388 = vmatpush1.msra.mxu0 0.0
        %2389 = vmatprep.subr.mxu0 0.0
        %2390 = vmatpush1.msra.mxu0 0.0
        %2391 = vmatprep.subr.mxu0 0.0
        %2392 = vmatpush1.msra.mxu0 0.0
        %2393 = vmatprep.subr.mxu0 0.0
        %2394 = vmatpush1.msra.mxu0 0.0
        %2395 = vmatprep.subr.mxu0 0.0
        %2396 = vmatpush1.msra.mxu0 0.0
        %2397 = vmatprep.subr.mxu0 0.0
        %2398 = vmatpush1.msra.mxu0 0.0
        %2399 = vmatprep.subr.mxu0 0.0
        %2400 = vmatpush1.msra.mxu0 0.0
        %2401 = vmatprep.subr.mxu0 0.0
        %2402 = vmatpush1.msra.mxu0 0.0
        %2403 = vmatprep.subr.mxu0 0.0
        %2404 = vmatpush1.msra.mxu0 0.0
        %2405 = vmatprep.subr.mxu0 0.0
        %2406 = vmatpush1.msra.mxu0 0.0
        %2407 = vmatprep.subr.mxu0 0.0
        %2408 = vmatpush1.msra.mxu0 0.0
        %2409 = vmatprep.subr.mxu0 0.0
        %2410 = vmatpush1.msra.mxu0 0.0
        %2411 = vmatprep.subr.mxu0 0.0
        %2412 = vmatpush1.msra.mxu0 0.0
        %2413 = vmatprep.subr.mxu0 0.0
        %2414 = vmatpush1.msra.mxu0 0.0
        %2415 = vmatprep.subr.mxu0 0.0
        %2416 = vmatpush1.msra.mxu0 0.0
        %2417 = vmatprep.subr.mxu0 0.0
        %2418 = vmatpush1.msra.mxu0 0.0
        %2419 = vmatprep.subr.mxu0 0.0
        %2420 = vmatpush1.msra.mxu0 0.0
        %2421 = vmatprep.subr.mxu0 0.0
        %2422 = vmatpush1.msra.mxu0 0.0
        %2423 = vmatprep.subr.mxu0 0.0
        %2424 = vmatpush1.msra.mxu0 0.0
        %2425 = vmatprep.subr.mxu0 0.0
        %2426 = vmatpush1.msra.mxu0 0.0
        %2427 = vmatprep.subr.mxu0 0.0
        %2428 = vmatpush1.msra.mxu0 0.0
        %2429 = vmatprep.subr.mxu0 0.0
        %2430 = vmatpush1.msra.mxu0 0.0
        %2431 = vmatprep.subr.mxu0 0.0
        %2432 = vmatpush1.msra.mxu0 0.0
        %2433 = vmatprep.subr.mxu0 0.0
        %2434 = vmatpush1.msra.mxu0 0.0
        %2435 = vmatprep.subr.mxu0 0.0
        %2436 = vmatpush1.msra.mxu0 0.0
        %2437 = vmatprep.subr.mxu0 0.0
        %2438 = vmatpush1.msra.mxu0 0.0
        %2439 = vmatprep.subr.mxu0 0.0
        %2440 = vmatpush1.msra.mxu0 0.0
        %2441 = vmatprep.subr.mxu0 0.0
        %2442 = vmatpush1.msra.mxu0 0.0
        %2443 = vmatprep.subr.mxu0 0.0
        %2444 = vmatpush1.msra.mxu0 0.0
        %2445 = vmatprep.mubr.f32.mxu0 0.0
        %2446 = vmatmul.mubr.f32.gmra.mrb[0].mxu0 %v873
        %v2447 = vpop.f32.mrb[0].mxu0
        %v2448 = vadd.f32 0.0, %v2447
        %v2449 = vpop.f32.mrb[0].mxu0
        %v2450 = vadd.f32 0.0, %v2449
        %2451 = vdwg.mxu0
        %v2452 = vmul.f32 %v2377, %v2377
        %v2453 = vmul.f32 %v2378, %v2378
        %v2454 = vmul.f32 %v2379, %v2379
        %v2455 = vmul.f32 %v2380, %v2380
        %2456 = vmatprep.subr.mxu0 %v2453
        %2457 = vmatpush1.msra.mxu0 %v2452
        %2458 = vmatprep.subr.mxu0 %v2455
        %2459 = vmatpush1.msra.mxu0 %v2454
        %2460 = vmatprep.subr.mxu0 0.0
        %2461 = vmatpush1.msra.mxu0 0.0
        %2462 = vmatprep.subr.mxu0 0.0
        %2463 = vmatpush1.msra.mxu0 0.0
        %2464 = vmatprep.subr.mxu0 0.0
        %2465 = vmatpush1.msra.mxu0 0.0
        %2466 = vmatprep.subr.mxu0 0.0
        %2467 = vmatpush1.msra.mxu0 0.0
        %2468 = vmatprep.subr.mxu0 0.0
        %2469 = vmatpush1.msra.mxu0 0.0
        %2470 = vmatprep.subr.mxu0 0.0
        %2471 = vmatpush1.msra.mxu0 0.0
        %2472 = vmatprep.subr.mxu0 0.0
        %2473 = vmatpush1.msra.mxu0 0.0
        %2474 = vmatprep.subr.mxu0 0.0
        %2475 = vmatpush1.msra.mxu0 0.0
        %2476 = vmatprep.subr.mxu0 0.0
        %2477 = vmatpush1.msra.mxu0 0.0
        %2478 = vmatprep.subr.mxu0 0.0
        %2479 = vmatpush1.msra.mxu0 0.0
        %2480 = vmatprep.subr.mxu0 0.0
        %2481 = vmatpush1.msra.mxu0 0.0
        %2482 = vmatprep.subr.mxu0 0.0
        %2483 = vmatpush1.msra.mxu0 0.0
        %2484 = vmatprep.subr.mxu0 0.0
        %2485 = vmatpush1.msra.mxu0 0.0
        %2486 = vmatprep.subr.mxu0 0.0
        %2487 = vmatpush1.msra.mxu0 0.0
        %2488 = vmatprep.subr.mxu0 0.0
        %2489 = vmatpush1.msra.mxu0 0.0
        %2490 = vmatprep.subr.mxu0 0.0
        %2491 = vmatpush1.msra.mxu0 0.0
        %2492 = vmatprep.subr.mxu0 0.0
        %2493 = vmatpush1.msra.mxu0 0.0
        %2494 = vmatprep.subr.mxu0 0.0
        %2495 = vmatpush1.msra.mxu0 0.0
        %2496 = vmatprep.subr.mxu0 0.0
        %2497 = vmatpush1.msra.mxu0 0.0
        %2498 = vmatprep.subr.mxu0 0.0
        %2499 = vmatpush1.msra.mxu0 0.0
        %2500 = vmatprep.subr.mxu0 0.0
        %2501 = vmatpush1.msra.mxu0 0.0
        %2502 = vmatprep.subr.mxu0 0.0
        %2503 = vmatpush1.msra.mxu0 0.0
        %2504 = vmatprep.subr.mxu0 0.0
        %2505 = vmatpush1.msra.mxu0 0.0
        %2506 = vmatprep.subr.mxu0 0.0
        %2507 = vmatpush1.msra.mxu0 0.0
        %2508 = vmatprep.subr.mxu0 0.0
        %2509 = vmatpush1.msra.mxu0 0.0
        %2510 = vmatprep.subr.mxu0 0.0
        %2511 = vmatpush1.msra.mxu0 0.0
        %2512 = vmatprep.subr.mxu0 0.0
        %2513 = vmatpush1.msra.mxu0 0.0
        %2514 = vmatprep.subr.mxu0 0.0
        %2515 = vmatpush1.msra.mxu0 0.0
        %2516 = vmatprep.subr.mxu0 0.0
        %2517 = vmatpush1.msra.mxu0 0.0
        %2518 = vmatprep.subr.mxu0 0.0
        %2519 = vmatpush1.msra.mxu0 0.0
        %2520 = vmatprep.mubr.f32.mxu0 0.0
        %2521 = vmatmul.mubr.f32.gmra.mrb[0].mxu0 %v873
        %v2522 = vpop.f32.mrb[0].mxu0
        %v2523 = vadd.f32 0.0, %v2522
        %v2524 = vpop.f32.mrb[0].mxu0
        %v2525 = vadd.f32 0.0, %v2524
        %2526 = vdwg.mxu0
        %v2527 = vld [vmem:[#allocation18] sm:$0xff]
        %v2528 = vld [vmem:[#allocation18 + $0x8] sm:$0xff]
        %v2529 = vld [vmem:[#allocation18 + $0x10] sm:$0xff]
        %v2530 = vld [vmem:[#allocation18 + $0x18] sm:$0xff]
        %v2531 = vld [vmem:[#allocation18 + $0x20] sm:$0xff]
        %v2532 = vld [vmem:[#allocation18 + $0x28] sm:$0xff]
        %v2533 = vld [vmem:[#allocation18 + $0x30] sm:$0xff]
        %v2534 = vld [vmem:[#allocation18 + $0x38] sm:$0xff]
        %v2535 = vld [vmem:[#allocation18 + $0x40] sm:$0xff]
        %v2536 = vld [vmem:[#allocation18 + $0x48] sm:$0xff]
        %v2537 = vld [vmem:[#allocation18 + $0x50] sm:$0xff]
        %v2538 = vld [vmem:[#allocation18 + $0x58] sm:$0xff]
        %v2539 = vld [vmem:[#allocation18 + $0x60] sm:$0xff]
        %v2540 = vld [vmem:[#allocation18 + $0x68] sm:$0xff]
        %v2541 = vld [vmem:[#allocation18 + $0x70] sm:$0xff]
        %v2542 = vld [vmem:[#allocation18 + $0x78] sm:$0xff]
        %v2543 = vld [vmem:[#allocation18 + $0x80] sm:$0xff]
        %v2544 = vld [vmem:[#allocation18 + $0x88] sm:$0xff]
        %v2545 = vld [vmem:[#allocation18 + $0x90] sm:$0xff]
        %v2546 = vld [vmem:[#allocation18 + $0x98] sm:$0xff]
        %v2547 = vld [vmem:[#allocation18 + $0xa0] sm:$0xff]
        %v2548 = vld [vmem:[#allocation18 + $0xa8] sm:$0xff]
        %v2549 = vld [vmem:[#allocation18 + $0xb0] sm:$0xff]
        %v2550 = vld [vmem:[#allocation18 + $0xb8] sm:$0xff]
        %v2551 = vld [vmem:[#allocation18 + $0xc0] sm:$0xff]
        %v2552 = vld [vmem:[#allocation18 + $0xc8] sm:$0xff]
        %v2553 = vld [vmem:[#allocation18 + $0xd0] sm:$0xff]
        %v2554 = vld [vmem:[#allocation18 + $0xd8] sm:$0xff]
        %v2555 = vld [vmem:[#allocation18 + $0xe0] sm:$0xff]
        %v2556 = vld [vmem:[#allocation18 + $0xe8] sm:$0xff]
        %v2557 = vld [vmem:[#allocation18 + $0xf0] sm:$0xff]
        %v2558 = vld [vmem:[#allocation18 + $0xf8] sm:$0xff]
        %2559 = vmatprep.subr.mxu0 0.0
        %2560 = vmatpush1.msra.mxu0 %v2527
        %2561 = vmatprep.subr.mxu0 0.0
        %2562 = vmatpush1.msra.mxu0 %v2528
        %2563 = vmatprep.subr.mxu0 0.0
        %2564 = vmatpush1.msra.mxu0 %v2529
        %2565 = vmatprep.subr.mxu0 0.0
        %2566 = vmatpush1.msra.mxu0 %v2530
        %2567 = vmatprep.subr.mxu0 0.0
        %2568 = vmatpush1.msra.mxu0 %v2531
        %2569 = vmatprep.subr.mxu0 0.0
        %2570 = vmatpush1.msra.mxu0 %v2532
        %2571 = vmatprep.subr.mxu0 0.0
        %2572 = vmatpush1.msra.mxu0 %v2533
        %2573 = vmatprep.subr.mxu0 0.0
        %2574 = vmatpush1.msra.mxu0 %v2534
        %2575 = vmatprep.subr.mxu0 0.0
        %2576 = vmatpush1.msra.mxu0 %v2535
        %2577 = vmatprep.subr.mxu0 0.0
        %2578 = vmatpush1.msra.mxu0 %v2536
        %2579 = vmatprep.subr.mxu0 0.0
        %2580 = vmatpush1.msra.mxu0 %v2537
        %2581 = vmatprep.subr.mxu0 0.0
        %2582 = vmatpush1.msra.mxu0 %v2538
        %2583 = vmatprep.subr.mxu0 0.0
        %2584 = vmatpush1.msra.mxu0 %v2539
        %2585 = vmatprep.subr.mxu0 0.0
        %2586 = vmatpush1.msra.mxu0 %v2540
        %2587 = vmatprep.subr.mxu0 0.0
        %2588 = vmatpush1.msra.mxu0 %v2541
        %2589 = vmatprep.subr.mxu0 0.0
        %2590 = vmatpush1.msra.mxu0 %v2542
        %2591 = vmatprep.subr.mxu0 0.0
        %2592 = vmatpush1.msra.mxu0 %v2543
        %2593 = vmatprep.subr.mxu0 0.0
        %2594 = vmatpush1.msra.mxu0 %v2544
        %2595 = vmatprep.subr.mxu0 0.0
        %2596 = vmatpush1.msra.mxu0 %v2545
        %2597 = vmatprep.subr.mxu0 0.0
        %2598 = vmatpush1.msra.mxu0 %v2546
        %2599 = vmatprep.subr.mxu0 0.0
        %2600 = vmatpush1.msra.mxu0 %v2547
        %2601 = vmatprep.subr.mxu0 0.0
        %2602 = vmatpush1.msra.mxu0 %v2548
        %2603 = vmatprep.subr.mxu0 0.0
        %2604 = vmatpush1.msra.mxu0 %v2549
        %2605 = vmatprep.subr.mxu0 0.0
        %2606 = vmatpush1.msra.mxu0 %v2550
        %2607 = vmatprep.subr.mxu0 0.0
        %2608 = vmatpush1.msra.mxu0 %v2551
        %2609 = vmatprep.subr.mxu0 0.0
        %2610 = vmatpush1.msra.mxu0 %v2552
        %2611 = vmatprep.subr.mxu0 0.0
        %2612 = vmatpush1.msra.mxu0 %v2553
        %2613 = vmatprep.subr.mxu0 0.0
        %2614 = vmatpush1.msra.mxu0 %v2554
        %2615 = vmatprep.subr.mxu0 0.0
        %2616 = vmatpush1.msra.mxu0 %v2555
        %2617 = vmatprep.subr.mxu0 0.0
        %2618 = vmatpush1.msra.mxu0 %v2556
        %2619 = vmatprep.subr.mxu0 0.0
        %2620 = vmatpush1.msra.mxu0 %v2557
        %2621 = vmatprep.subr.mxu0 0.0
        %2622 = vmatpush1.msra.mxu0 %v2558
        %2623 = vmatprep.mubr.f32.mxu0 %v2450
        %2624 = vmatmul.mubr.f32.gmra.mrb[0].mxu0 %v2448
        %v2625 = vpop.f32.mrb[0].mxu0
        %v2626 = vadd.f32 0.0, %v2625
        %v2627 = vpop.f32.mrb[0].mxu0
        %2628 = vdwg.mxu0
        %2629 = vmatprep.subr.mxu0 0.0
        %2630 = vmatpush1.msra.mxu0 %v2527
        %2631 = vmatprep.subr.mxu0 0.0
        %2632 = vmatpush1.msra.mxu0 %v2528
        %2633 = vmatprep.subr.mxu0 0.0
        %2634 = vmatpush1.msra.mxu0 %v2529
        %2635 = vmatprep.subr.mxu0 0.0
        %2636 = vmatpush1.msra.mxu0 %v2530
        %2637 = vmatprep.subr.mxu0 0.0
        %2638 = vmatpush1.msra.mxu0 %v2531
        %2639 = vmatprep.subr.mxu0 0.0
        %2640 = vmatpush1.msra.mxu0 %v2532
        %2641 = vmatprep.subr.mxu0 0.0
        %2642 = vmatpush1.msra.mxu0 %v2533
        %2643 = vmatprep.subr.mxu0 0.0
        %2644 = vmatpush1.msra.mxu0 %v2534
        %2645 = vmatprep.subr.mxu0 0.0
        %2646 = vmatpush1.msra.mxu0 %v2535
        %2647 = vmatprep.subr.mxu0 0.0
        %2648 = vmatpush1.msra.mxu0 %v2536
        %2649 = vmatprep.subr.mxu0 0.0
        %2650 = vmatpush1.msra.mxu0 %v2537
        %2651 = vmatprep.subr.mxu0 0.0
        %2652 = vmatpush1.msra.mxu0 %v2538
        %2653 = vmatprep.subr.mxu0 0.0
        %2654 = vmatpush1.msra.mxu0 %v2539
        %2655 = vmatprep.subr.mxu0 0.0
        %2656 = vmatpush1.msra.mxu0 %v2540
        %2657 = vmatprep.subr.mxu0 0.0
        %2658 = vmatpush1.msra.mxu0 %v2541
        %2659 = vmatprep.subr.mxu0 0.0
        %2660 = vmatpush1.msra.mxu0 %v2542
        %2661 = vmatprep.subr.mxu0 0.0
        %2662 = vmatpush1.msra.mxu0 %v2543
        %2663 = vmatprep.subr.mxu0 0.0
        %2664 = vmatpush1.msra.mxu0 %v2544
        %2665 = vmatprep.subr.mxu0 0.0
        %2666 = vmatpush1.msra.mxu0 %v2545
        %2667 = vmatprep.subr.mxu0 0.0
        %2668 = vmatpush1.msra.mxu0 %v2546
        %2669 = vmatprep.subr.mxu0 0.0
        %2670 = vmatpush1.msra.mxu0 %v2547
        %2671 = vmatprep.subr.mxu0 0.0
        %2672 = vmatpush1.msra.mxu0 %v2548
        %2673 = vmatprep.subr.mxu0 0.0
        %2674 = vmatpush1.msra.mxu0 %v2549
        %2675 = vmatprep.subr.mxu0 0.0
        %2676 = vmatpush1.msra.mxu0 %v2550
        %2677 = vmatprep.subr.mxu0 0.0
        %2678 = vmatpush1.msra.mxu0 %v2551
        %2679 = vmatprep.subr.mxu0 0.0
        %2680 = vmatpush1.msra.mxu0 %v2552
        %2681 = vmatprep.subr.mxu0 0.0
        %2682 = vmatpush1.msra.mxu0 %v2553
        %2683 = vmatprep.subr.mxu0 0.0
        %2684 = vmatpush1.msra.mxu0 %v2554
        %2685 = vmatprep.subr.mxu0 0.0
        %2686 = vmatpush1.msra.mxu0 %v2555
        %2687 = vmatprep.subr.mxu0 0.0
        %2688 = vmatpush1.msra.mxu0 %v2556
        %2689 = vmatprep.subr.mxu0 0.0
        %2690 = vmatpush1.msra.mxu0 %v2557
        %2691 = vmatprep.subr.mxu0 0.0
        %2692 = vmatpush1.msra.mxu0 %v2558
        %2693 = vmatprep.mubr.f32.mxu0 %v2525
        %2694 = vmatmul.mubr.f32.gmra.mrb[0].mxu0 %v2523
        %v2695 = vpop.f32.mrb[0].mxu0
        %v2696 = vadd.f32 0.0, %v2695
        %v2697 = vpop.f32.mrb[0].mxu0
        %2698 = vdwg.mxu0
        %v2699 = vmul.f32 %v2626, %v1193
        %v2700 = vmul.f32 %v2696, %v1193
        %v2701 = vmul.f32 %v2699, %v2699
        %v2702 = vsub.f32 %v2700, %v2701
        %v2703 = vmax.f32 %v2702, 0.0
        %v2704 = vadd.f32 %v2703, 1e-05
        %v2705 = vrsqrt.pop %v2704
        %v2706 = vld [vmem:[#allocation16] sm:$0xff]
        %v2708 = vsel %vm1202, %v2699, 0
        %2710 = vmatprep.subr.mxu0 0.0
        %2711 = vmatpush1.msra.mxu0 %v2706
        %2712 = vmatprep.subr.mxu0 0.0
        %2713 = vmatpush1.msra.mxu0 0.0
        %2714 = vmatprep.subr.mxu0 0.0
        %2715 = vmatpush1.msra.mxu0 0.0
        %2716 = vmatprep.subr.mxu0 0.0
        %2717 = vmatpush1.msra.mxu0 0.0
        %2718 = vmatprep.subr.mxu0 0.0
        %2719 = vmatpush1.msra.mxu0 0.0
        %2720 = vmatprep.subr.mxu0 0.0
        %2721 = vmatpush1.msra.mxu0 0.0
        %2722 = vmatprep.subr.mxu0 0.0
        %2723 = vmatpush1.msra.mxu0 0.0
        %2724 = vmatprep.subr.mxu0 0.0
        %2725 = vmatpush1.msra.mxu0 0.0
        %2726 = vmatprep.subr.mxu0 0.0
        %2727 = vmatpush1.msra.mxu0 0.0
        %2728 = vmatprep.subr.mxu0 0.0
        %2729 = vmatpush1.msra.mxu0 0.0
        %2730 = vmatprep.subr.mxu0 0.0
        %2731 = vmatpush1.msra.mxu0 0.0
        %2732 = vmatprep.subr.mxu0 0.0
        %2733 = vmatpush1.msra.mxu0 0.0
        %2734 = vmatprep.subr.mxu0 0.0
        %2735 = vmatpush1.msra.mxu0 0.0
        %2736 = vmatprep.subr.mxu0 0.0
        %2737 = vmatpush1.msra.mxu0 0.0
        %2738 = vmatprep.subr.mxu0 0.0
        %2739 = vmatpush1.msra.mxu0 0.0
        %2740 = vmatprep.subr.mxu0 0.0
        %2741 = vmatpush1.msra.mxu0 0.0
        %2742 = vmatprep.subr.mxu0 0.0
        %2743 = vmatpush1.msra.mxu0 0.0
        %2744 = vmatprep.subr.mxu0 0.0
        %2745 = vmatpush1.msra.mxu0 0.0
        %2746 = vmatprep.subr.mxu0 0.0
        %2747 = vmatpush1.msra.mxu0 0.0
        %2748 = vmatprep.subr.mxu0 0.0
        %2749 = vmatpush1.msra.mxu0 0.0
        %2750 = vmatprep.subr.mxu0 0.0
        %2751 = vmatpush1.msra.mxu0 0.0
        %2752 = vmatprep.subr.mxu0 0.0
        %2753 = vmatpush1.msra.mxu0 0.0
        %2754 = vmatprep.subr.mxu0 0.0
        %2755 = vmatpush1.msra.mxu0 0.0
        %2756 = vmatprep.subr.mxu0 0.0
        %2757 = vmatpush1.msra.mxu0 0.0
        %2758 = vmatprep.subr.mxu0 0.0
        %2759 = vmatpush1.msra.mxu0 0.0
        %2760 = vmatprep.subr.mxu0 0.0
        %2761 = vmatpush1.msra.mxu0 0.0
        %2762 = vmatprep.subr.mxu0 0.0
        %2763 = vmatpush1.msra.mxu0 0.0
        %2764 = vmatprep.subr.mxu0 0.0
        %2765 = vmatpush1.msra.mxu0 0.0
        %2766 = vmatprep.subr.mxu0 0.0
        %2767 = vmatpush1.msra.mxu0 0.0
        %2768 = vmatprep.subr.mxu0 0.0
        %2769 = vmatpush1.msra.mxu0 0.0
        %2770 = vmatprep.subr.mxu0 0.0
        %2771 = vmatpush1.msra.mxu0 0.0
        %2772 = vmatprep.subr.mxu0 0.0
        %2773 = vmatpush1.msra.mxu0 0.0
        %2774 = vmatprep.mubr.f32.mxu0 0.0
        %2775 = vmatmul.mubr.f32.gmra.mrb[0].mxu0 %v2708
        %v2776 = vpop.f32.mrb[0].mxu0
        %v2777 = vadd.f32 0.0, %v2776
        %v2778 = vpop.f32.mrb[0].mxu0
        %2779 = vdwg.mxu0
        %v2781 = vsel %vm1202, %v2705, 0
        %2783 = vmatprep.subr.mxu0 0.0
        %2784 = vmatpush1.msra.mxu0 %v2706
        %2785 = vmatprep.subr.mxu0 0.0
        %2786 = vmatpush1.msra.mxu0 0.0
        %2787 = vmatprep.subr.mxu0 0.0
        %2788 = vmatpush1.msra.mxu0 0.0
        %2789 = vmatprep.subr.mxu0 0.0
        %2790 = vmatpush1.msra.mxu0 0.0
        %2791 = vmatprep.subr.mxu0 0.0
        %2792 = vmatpush1.msra.mxu0 0.0
        %2793 = vmatprep.subr.mxu0 0.0
        %2794 = vmatpush1.msra.mxu0 0.0
        %2795 = vmatprep.subr.mxu0 0.0
        %2796 = vmatpush1.msra.mxu0 0.0
        %2797 = vmatprep.subr.mxu0 0.0
        %2798 = vmatpush1.msra.mxu0 0.0
        %2799 = vmatprep.subr.mxu0 0.0
        %2800 = vmatpush1.msra.mxu0 0.0
        %2801 = vmatprep.subr.mxu0 0.0
        %2802 = vmatpush1.msra.mxu0 0.0
        %2803 = vmatprep.subr.mxu0 0.0
        %2804 = vmatpush1.msra.mxu0 0.0
        %2805 = vmatprep.subr.mxu0 0.0
        %2806 = vmatpush1.msra.mxu0 0.0
        %2807 = vmatprep.subr.mxu0 0.0
        %2808 = vmatpush1.msra.mxu0 0.0
        %2809 = vmatprep.subr.mxu0 0.0
        %2810 = vmatpush1.msra.mxu0 0.0
        %2811 = vmatprep.subr.mxu0 0.0
        %2812 = vmatpush1.msra.mxu0 0.0
        %2813 = vmatprep.subr.mxu0 0.0
        %2814 = vmatpush1.msra.mxu0 0.0
        %2815 = vmatprep.subr.mxu0 0.0
        %2816 = vmatpush1.msra.mxu0 0.0
        %2817 = vmatprep.subr.mxu0 0.0
        %2818 = vmatpush1.msra.mxu0 0.0
        %2819 = vmatprep.subr.mxu0 0.0
        %2820 = vmatpush1.msra.mxu0 0.0
        %2821 = vmatprep.subr.mxu0 0.0
        %2822 = vmatpush1.msra.mxu0 0.0
        %2823 = vmatprep.subr.mxu0 0.0
        %2824 = vmatpush1.msra.mxu0 0.0
        %2825 = vmatprep.subr.mxu0 0.0
        %2826 = vmatpush1.msra.mxu0 0.0
        %2827 = vmatprep.subr.mxu0 0.0
        %2828 = vmatpush1.msra.mxu0 0.0
        %2829 = vmatprep.subr.mxu0 0.0
        %2830 = vmatpush1.msra.mxu0 0.0
        %2831 = vmatprep.subr.mxu0 0.0
        %2832 = vmatpush1.msra.mxu0 0.0
        %2833 = vmatprep.subr.mxu0 0.0
        %2834 = vmatpush1.msra.mxu0 0.0
        %2835 = vmatprep.subr.mxu0 0.0
        %2836 = vmatpush1.msra.mxu0 0.0
        %2837 = vmatprep.subr.mxu0 0.0
        %2838 = vmatpush1.msra.mxu0 0.0
        %2839 = vmatprep.subr.mxu0 0.0
        %2840 = vmatpush1.msra.mxu0 0.0
        %2841 = vmatprep.subr.mxu0 0.0
        %2842 = vmatpush1.msra.mxu0 0.0
        %2843 = vmatprep.subr.mxu0 0.0
        %2844 = vmatpush1.msra.mxu0 0.0
        %2845 = vmatprep.subr.mxu0 0.0
        %2846 = vmatpush1.msra.mxu0 0.0
        %2847 = vmatprep.mubr.f32.mxu0 0.0
        %2848 = vmatmul.mubr.f32.gmra.mrb[0].mxu0 %v2781
        %v2849 = vpop.f32.mrb[0].mxu0
        %v2850 = vadd.f32 0.0, %v2849
        %v2851 = vpop.f32.mrb[0].mxu0
        %2852 = vdwg.mxu0
        %v2853 = vld [vmem:[#allocation13] sm:$0x1]
        %v2854 = vmul.f32 %v2850, %v2853
        %v2855 = vld [vmem:[#allocation15] sm:$0x1]
        %v2856 = vmul.f32 %v2777, %v2854
        %v2857 = vsub.f32 %v2855, %v2856
        %v2858 = vld [vmem:[#allocation19] sm:$0xff]
        %v2859 = vld [vmem:[#allocation19 + $0x8] sm:$0xff]
        %v2860 = vld [vmem:[#allocation19 + $0x10] sm:$0xff]
        %v2861 = vld [vmem:[#allocation19 + $0x18] sm:$0xff]
        %v2863 = vsel %vm871, %v2854, 0
        %2865 = vmatprep.subr.mxu0 %v2859
        %2866 = vmatpush1.msra.mxu0 %v2858
        %2867 = vmatprep.subr.mxu0 %v2861
        %2868 = vmatpush1.msra.mxu0 %v2860
        %2869 = vmatprep.subr.mxu0 0.0
        %2870 = vmatpush1.msra.mxu0 0.0
        %2871 = vmatprep.subr.mxu0 0.0
        %2872 = vmatpush1.msra.mxu0 0.0
        %2873 = vmatprep.subr.mxu0 0.0
        %2874 = vmatpush1.msra.mxu0 0.0
        %2875 = vmatprep.subr.mxu0 0.0
        %2876 = vmatpush1.msra.mxu0 0.0
        %2877 = vmatprep.subr.mxu0 0.0
        %2878 = vmatpush1.msra.mxu0 0.0
        %2879 = vmatprep.subr.mxu0 0.0
        %2880 = vmatpush1.msra.mxu0 0.0
        %2881 = vmatprep.subr.mxu0 0.0
        %2882 = vmatpush1.msra.mxu0 0.0
        %2883 = vmatprep.subr.mxu0 0.0
        %2884 = vmatpush1.msra.mxu0 0.0
        %2885 = vmatprep.subr.mxu0 0.0
        %2886 = vmatpush1.msra.mxu0 0.0
        %2887 = vmatprep.subr.mxu0 0.0
        %2888 = vmatpush1.msra.mxu0 0.0
        %2889 = vmatprep.subr.mxu0 0.0
        %2890 = vmatpush1.msra.mxu0 0.0
        %2891 = vmatprep.subr.mxu0 0.0
        %2892 = vmatpush1.msra.mxu0 0.0
        %2893 = vmatprep.subr.mxu0 0.0
        %2894 = vmatpush1.msra.mxu0 0.0
        %2895 = vmatprep.subr.mxu0 0.0
        %2896 = vmatpush1.msra.mxu0 0.0
        %2897 = vmatprep.subr.mxu0 0.0
        %2898 = vmatpush1.msra.mxu0 0.0
        %2899 = vmatprep.subr.mxu0 0.0
        %2900 = vmatpush1.msra.mxu0 0.0
        %2901 = vmatprep.subr.mxu0 0.0
        %2902 = vmatpush1.msra.mxu0 0.0
        %2903 = vmatprep.subr.mxu0 0.0
        %2904 = vmatpush1.msra.mxu0 0.0
        %2905 = vmatprep.subr.mxu0 0.0
        %2906 = vmatpush1.msra.mxu0 0.0
        %2907 = vmatprep.subr.mxu0 0.0
        %2908 = vmatpush1.msra.mxu0 0.0
        %2909 = vmatprep.subr.mxu0 0.0
        %2910 = vmatpush1.msra.mxu0 0.0
        %2911 = vmatprep.subr.mxu0 0.0
        %2912 = vmatpush1.msra.mxu0 0.0
        %2913 = vmatprep.subr.mxu0 0.0
        %2914 = vmatpush1.msra.mxu0 0.0
        %2915 = vmatprep.subr.mxu0 0.0
        %2916 = vmatpush1.msra.mxu0 0.0
        %2917 = vmatprep.subr.mxu0 0.0
        %2918 = vmatpush1.msra.mxu0 0.0
        %2919 = vmatprep.subr.mxu0 0.0
        %2920 = vmatpush1.msra.mxu0 0.0
        %2921 = vmatprep.subr.mxu0 0.0
        %2922 = vmatpush1.msra.mxu0 0.0
        %2923 = vmatprep.subr.mxu0 0.0
        %2924 = vmatpush1.msra.mxu0 0.0
        %2925 = vmatprep.subr.mxu0 0.0
        %2926 = vmatpush1.msra.mxu0 0.0
        %2927 = vmatprep.subr.mxu0 0.0
        %2928 = vmatpush1.msra.mxu0 0.0
        %2929 = vmatprep.mubr.f32.mxu0 0.0
        %2930 = vmatmul.mubr.f32.gmra.mrb[0].mxu0 %v2863
        %v2931 = vpop.f32.mrb[0].mxu0
        %v2932 = vadd.f32 0.0, %v2931
        %v2933 = vpop.f32.mrb[0].mxu0
        %v2934 = vadd.f32 0.0, %v2933
        %2935 = vdwg.mxu0
        %v2937 = vsel %vm871, %v2857, 0
        %2939 = vmatprep.subr.mxu0 %v2859
        %2940 = vmatpush1.msra.mxu0 %v2858
        %2941 = vmatprep.subr.mxu0 %v2861
        %2942 = vmatpush1.msra.mxu0 %v2860
        %2943 = vmatprep.subr.mxu0 0.0
        %2944 = vmatpush1.msra.mxu0 0.0
        %2945 = vmatprep.subr.mxu0 0.0
        %2946 = vmatpush1.msra.mxu0 0.0
        %2947 = vmatprep.subr.mxu0 0.0
        %2948 = vmatpush1.msra.mxu0 0.0
        %2949 = vmatprep.subr.mxu0 0.0
        %2950 = vmatpush1.msra.mxu0 0.0
        %2951 = vmatprep.subr.mxu0 0.0
        %2952 = vmatpush1.msra.mxu0 0.0
        %2953 = vmatprep.subr.mxu0 0.0
        %2954 = vmatpush1.msra.mxu0 0.0
        %2955 = vmatprep.subr.mxu0 0.0
        %2956 = vmatpush1.msra.mxu0 0.0
        %2957 = vmatprep.subr.mxu0 0.0
        %2958 = vmatpush1.msra.mxu0 0.0
        %2959 = vmatprep.subr.mxu0 0.0
        %2960 = vmatpush1.msra.mxu0 0.0
        %2961 = vmatprep.subr.mxu0 0.0
        %2962 = vmatpush1.msra.mxu0 0.0
        %2963 = vmatprep.subr.mxu0 0.0
        %2964 = vmatpush1.msra.mxu0 0.0
        %2965 = vmatprep.subr.mxu0 0.0
        %2966 = vmatpush1.msra.mxu0 0.0
        %2967 = vmatprep.subr.mxu0 0.0
        %2968 = vmatpush1.msra.mxu0 0.0
        %2969 = vmatprep.subr.mxu0 0.0
        %2970 = vmatpush1.msra.mxu0 0.0
        %2971 = vmatprep.subr.mxu0 0.0
        %2972 = vmatpush1.msra.mxu0 0.0
        %2973 = vmatprep.subr.mxu0 0.0
        %2974 = vmatpush1.msra.mxu0 0.0
        %2975 = vmatprep.subr.mxu0 0.0
        %2976 = vmatpush1.msra.mxu0 0.0
        %2977 = vmatprep.subr.mxu0 0.0
        %2978 = vmatpush1.msra.mxu0 0.0
        %2979 = vmatprep.subr.mxu0 0.0
        %2980 = vmatpush1.msra.mxu0 0.0
        %2981 = vmatprep.subr.mxu0 0.0
        %2982 = vmatpush1.msra.mxu0 0.0
        %2983 = vmatprep.subr.mxu0 0.0
        %2984 = vmatpush1.msra.mxu0 0.0
        %2985 = vmatprep.subr.mxu0 0.0
        %2986 = vmatpush1.msra.mxu0 0.0
        %2987 = vmatprep.subr.mxu0 0.0
        %2988 = vmatpush1.msra.mxu0 0.0
        %2989 = vmatprep.subr.mxu0 0.0
        %2990 = vmatpush1.msra.mxu0 0.0
        %2991 = vmatprep.subr.mxu0 0.0
        %2992 = vmatpush1.msra.mxu0 0.0
        %2993 = vmatprep.subr.mxu0 0.0
        %2994 = vmatpush1.msra.mxu0 0.0
        %2995 = vmatprep.subr.mxu0 0.0
        %2996 = vmatpush1.msra.mxu0 0.0
        %2997 = vmatprep.subr.mxu0 0.0
        %2998 = vmatpush1.msra.mxu0 0.0
        %2999 = vmatprep.subr.mxu0 0.0
        %3000 = vmatpush1.msra.mxu0 0.0
        %3001 = vmatprep.subr.mxu0 0.0
        %3002 = vmatpush1.msra.mxu0 0.0
        %3003 = vmatprep.mubr.f32.mxu0 0.0
        %3004 = vmatmul.mubr.f32.gmra.mrb[0].mxu0 %v2937
        %v3005 = vpop.f32.mrb[0].mxu0
        %v3006 = vadd.f32 0.0, %v3005
        %v3007 = vpop.f32.mrb[0].mxu0
        %v3008 = vadd.f32 0.0, %v3007
        %3009 = vdwg.mxu0
        %v3010 = vlaneseq
        %v3011 = vshrl.u32 %v3010, 7
        %v3012 = vsub.s32 0, %v3011
        %v3013 = vrot.slane %v2932, %v3012
        %v3014 = vlaneseq
        %v3015 = vshrl.u32 %v3014, 7
        %v3016 = vsub.s32 0, %v3015
        %v3017 = vrot.slane %v2934, %v3016
        %v3018 = vmul.f32 %v2377, %v3013
        %v3019 = vmul.f32 %v2378, %v3017
        %v3020 = vmul.f32 %v2379, %v3013
        %v3021 = vmul.f32 %v2380, %v3017
        %v3022 = vlaneseq
        %v3023 = vshrl.u32 %v3022, 7
        %v3024 = vsub.s32 0, %v3023
        %v3025 = vrot.slane %v3006, %v3024
        %v3026 = vlaneseq
        %v3027 = vshrl.u32 %v3026, 7
        %v3028 = vsub.s32 0, %v3027
        %v3029 = vrot.slane %v3008, %v3028
        %v3030 = vadd.f32 %v3018, %v3025
        %v3031 = vadd.f32 %v3019, %v3029
        %v3032 = vadd.f32 %v3020, %v3025
        %v3033 = vadd.f32 %v3021, %v3029
        %v3034 = vadd.f32 %v3030, %v1550
        %v3035 = vadd.f32 %v3031, %v1551
        %v3036 = vadd.f32 %v3032, %v1552
        %v3037 = vadd.f32 %v3033, %v1553
        %vm3038 = vcmp.gt.f32.partialorder %v3034, 0.0
        %vm3039 = vcmp.gt.f32.partialorder %v3035, 0.0
        %vm3040 = vcmp.gt.f32.partialorder %v3036, 0.0
        %vm3041 = vcmp.gt.f32.partialorder %v3037, 0.0
        %v3042 = vmin.f32 %v3034, 0.0
        %v3043 = vmin.f32 %v3035, 0.0
        %v3044 = vmin.f32 %v3036, 0.0
        %v3045 = vmin.f32 %v3037, 0.0
        %v3046 = vmul.f32 %v3042, 1.442695
        %v3047 = vpow.pop %v3046
        %v3048 = vmul.f32 %v3043, 1.442695
        %v3049 = vpow.pop %v3048
        %v3050 = vmul.f32 %v3044, 1.442695
        %v3051 = vpow.pop %v3050
        %v3052 = vmul.f32 %v3045, 1.442695
        %v3053 = vpow.pop %v3052
        %v3054 = vsub.f32 %v3047, 1.0
        %v3055 = vsub.f32 %v3049, 1.0
        %v3056 = vsub.f32 %v3051, 1.0
        %v3057 = vsub.f32 %v3053, 1.0
        %v3058 = vsel %vm3038, %v3034, %v3054
        %v3059 = vsel %vm3039, %v3035, %v3055
        %v3060 = vsel %vm3040, %v3036, %v3056
        %v3061 = vsel %vm3041, %v3037, %v3057
        %3062 = vst [vmem:[%s498] sm:$0xff] %v3058
        %3063 = vst [vmem:[%s498 + $0x8] sm:$0xff] %v3059
        %3064 = vst [vmem:[%s498 + $0x10] sm:$0xff] %v3060
        %3065 = vst [vmem:[%s498 + $0x18] sm:$0xff] %v3061
        %s3066 = sand.u32 %s255, 1
        %s3067 = scalar_lea.sflag [#allocation6], %s3066
        %s3068 = sand.u32 %s255, 1
        %s3069 = smul.addr %s3068, 32
        %s3070 = scalar_lea.vmem [#allocation21], %s3069
        // Predicated region
        $region101: #{resnet_block.1} parent=59 // pred_check
          %p3071 = pneg %p265
        $region102: #{resnet_block.1} parent=59 // pred_check_branch
          %3073 = sbr.rel (%p3071) target = $region104
        $region103: #{resnet_block.1} parent=59 // pred_region
          %s3075 = ssub.s32 512, 512
          %3076 = vsyncadd %s3067, %s3075
          %s3077 = smul.addr %s32, 4
          %s3078 = smul.addr %s3077, 128
          %s3079 = scalar_lea.hbm %s10, %s3078
          %s3080 = sshll.u32 %s3070, 4
          %s3081 = int_to_ptr.vmem [resolvable:$true] %s3080
          %3086 = dma.vmem_to_hbm [thread:$0]  %s3081, 512, %s3079, %s3067, 256, 256, 16
        $region104: #{resnet_block.1} parent=59 // pred_fallthru
          _
      $region60: #{resnet_block.1} parent=5 // pred_fallthru
        _
      %p3087 = scmp.le.s32.totalorder 2, %s27
      // Predicated region
      $region105: #{resnet_block.1} parent=5 // pred_check
        %p3088 = pneg %p3087
      $region106: #{resnet_block.1} parent=5 // pred_check_branch
        %3090 = sbr.rel (%p3088) target = $region108
      $region107: #{resnet_block.1} parent=5 // pred_region
        %s3091 = ssub.s32 %s27, 2
        // Predicated region
        $region109: #{resnet_block.1} parent=107 // pred_check
          %p3092 = pneg %p271
        $region110: #{resnet_block.1} parent=107 // pred_check_branch
          %3094 = sbr.rel (%p3092) target = $region112
        $region111: #{resnet_block.1} parent=107 // pred_region
          %s3095 = sand.u32 %s256, 1
          %s3096 = scalar_lea.sflag [#allocation6], %s3095
          %s3097 = sand.u32 %s256, 1
          %s3098 = smul.addr %s3097, 32
          %s3099 = scalar_lea.vmem [#allocation21], %s3098
          %3100 = dma.done %s3096, 512
        $region112: #{resnet_block.1} parent=107 // pred_fallthru
          _
      $region108: #{resnet_block.1} parent=5 // pred_fallthru
        _
    $region6: #{resnet_block.1} parent=1 // loop_footer
      %s31 = sadd.s32 1, %s27
    $region7: #{resnet_block.1} parent=1 // loop_footer_branch
      %26 = sbr.rel target = $region3
    $region8: #{resnet_block.1} parent=1 // loop_exit
      _
    %3101 = vsyncpa [#allocation5], 1
    %s3102 = scalar_lea.sflag [#allocation5], 1
    %3103 = vsyncpa %s3102, 1
    %3104 = vsyncpa [#allocation8], 1
    %3105 = vsyncpa [#allocation11], 1
    %3106 = vsyncpa [#allocation14], 1
    %3107 = vsyncpa [#allocation17], 1
    %3108 = vsyncpa [#allocation20], 1
    %3109 = vsyncpa [#allocation6], 1
    %s3110 = scalar_lea.sflag [#allocation6], 1
    %3111 = vsyncpa %s3110, 1

</llo_original>
